<compile_context>
chip_gen: v7x
topology: tpu7x:2x2x1
jax: 0.10.0
libtpu: 0.0.40
codegen_flags: <defaults>
</compile_context>

<pallas_src>
import functools

import numpy as np
import jax
import jax.numpy as jnp
from jax.experimental import pallas as pl
from jax.experimental.pallas import tpu as pltpu


def _fused_equiv_net_kernel(x_ref, p_ref, bb_ref, w_ref, v_ref, out_ref, *,
                            dims, nb, H, W, eps, cdtype):
    """Whole network for `nb` lane-stacked samples; activations stay VMEM/vreg resident.

    x_ref  : (C0, nb*S)          channels on sublanes, (sample, spatial) on lanes
    p_ref  : (nb*S, nb*M)        fused pooling matrix, columns = [row | col | total] pools
    bb_ref : (nb*M, nb*S)        fused broadcast-back matrix (rows match p's columns)
    w_ref  : (L*4, Cmax, Cmax)   zero-padded channel-mixing weights, basis-major per layer
    v_ref  : (Cmax, 3*L)         per-layer [bias | gamma | beta] columns (f32)
    out_ref: (Cout_last, nb*S)   lane-dense output
    """
    cdtype = np.dtype(cdtype)
    L = len(dims) - 1
    S = H * W

    a = x_ref[...]                                      # (C0, nb*S), already cdtype

    for i in range(L):                                  # static unroll: whole net fused
        cin, cout = dims[i], dims[i + 1]
        am = a if a.dtype == cdtype else a.astype(cdtype)

        # All pooled statistics (row / col / total mean) in ONE matmul; the fused
        # pooling constant is read from its ref at the dot site (not hoisted).
        stats = jnp.dot(am, p_ref[...],
                        preferred_element_type=jnp.float32)          # (cin, nb*M) f32
        stats_c = stats if stats.dtype == cdtype else stats.astype(cdtype)

        w0 = w_ref[4 * i + 0, 0:cout, 0:cin]
        w1 = w_ref[4 * i + 1, 0:cout, 0:cin]
        w2 = w_ref[4 * i + 2, 0:cout, 0:cin]
        w3 = w_ref[4 * i + 3, 0:cout, 0:cin]
        bias = v_ref[0:cout, 3 * i + 0:3 * i + 1]                    # (cout, 1) f32

        # Per-basis channel mixing at pooled (tiny) size.  The bias rides on the
        # total-pool columns (their broadcast-back rows are all-ones), so no
        # separate (cout, nb*S) bias add is needed.
        mixed = jnp.concatenate([
            jnp.dot(w1, stats_c[:, 0:nb * H],
                    preferred_element_type=jnp.float32),
            jnp.dot(w2, stats_c[:, nb * H:nb * (H + W)],
                    preferred_element_type=jnp.float32),
            jnp.dot(w3, stats_c[:, nb * (H + W):],
                    preferred_element_type=jnp.float32) + bias,
        ], axis=1)                                                   # (cout, nb*M) f32
        mixed_c = mixed if mixed.dtype == cdtype else mixed.astype(cdtype)

        # Identity basis + ONE broadcast-back matmul (constant read at the dot site).
        y = (jnp.dot(w0, am, preferred_element_type=jnp.float32)
             + jnp.dot(mixed_c, bb_ref[...],
                       preferred_element_type=jnp.float32))          # (cout, nb*S) f32

        if i < L - 1:
            gamma = v_ref[0:cout, 3 * i + 1:3 * i + 2]
            beta = v_ref[0:cout, 3 * i + 2:3 * i + 3]
            parts = []
            for s in range(nb):            # per-sample norm, static tile-aligned slices
                ys = y[:, s * S:(s + 1) * S]
                mu = jnp.mean(ys, axis=1, keepdims=True)
                msq = jnp.mean(ys * ys, axis=1, keepdims=True)
                var = msq - mu * mu                    # single-pass biased variance
                scale = gamma * jax.lax.rsqrt(var + eps)
                shift = beta - mu * scale
                parts.append(jnp.maximum(ys * scale + shift, 0.0))   # folded norm + ReLU
            y = parts[0] if nb == 1 else jnp.concatenate(parts, axis=1)

        a = y

    out_ref[...] = a.astype(out_ref.dtype)              # (Cout_last, nb*S) lane-dense


def _fused_pool_bcast(H, W, nb):
    """Fused P = [row-pool | col-pool | total-pool] and matching broadcast-back B,
    block-diagonal over `nb` lane-stacked samples, column-grouped by basis."""
    S = H * W
    p = np.arange(S)
    row_oh = (p[:, None] // W == np.arange(H)[None, :]).astype(np.float32)  # (S, H)
    col_oh = (p[:, None] % W == np.arange(W)[None, :]).astype(np.float32)   # (S, W)
    ones = np.ones((S, 1), np.float32)
    eye = np.eye(nb, dtype=np.float32)
    P = np.concatenate([np.kron(eye, row_oh / W),
                        np.kron(eye, col_oh / H),
                        np.kron(eye, ones / S)], axis=1)    # (nb*S, nb*(H+W+1))
    B = np.concatenate([np.kron(eye, row_oh.T),
                        np.kron(eye, col_oh.T),
                        np.kron(eye, ones.T)], axis=0)      # (nb*(H+W+1), nb*S)
    return P, B


def pack_params(params):
    """Pack per-layer (w(4,co,ci), b, gamma, beta) into two dense blobs + static dims."""
    L = len(params)
    cmax_out = max(int(w.shape[1]) for (w, _, _, _) in params)
    cmax_in = max(int(w.shape[2]) for (w, _, _, _) in params)
    w_blob = np.zeros((L * 4, cmax_out, cmax_in), np.float32)
    v_blob = np.zeros((cmax_out, 3 * L), np.float32)
    dims = [int(params[0][0].shape[2])]
    for i, (w, b, g, be) in enumerate(params):
        co, ci = int(w.shape[1]), int(w.shape[2])
        dims.append(co)
        w_blob[4 * i:4 * (i + 1), :co, :ci] = np.asarray(w)
        v_blob[:co, 3 * i + 0] = np.asarray(b)[:, 0]
        v_blob[:co, 3 * i + 1] = np.asarray(g)[:, 0]
        v_blob[:co, 3 * i + 2] = np.asarray(be)[:, 0]
    return jnp.asarray(w_blob), jnp.asarray(v_blob), tuple(dims)


def _nbytes(shape, dtype):
    return int(np.prod(shape)) * int(np.dtype(dtype).itemsize)


@functools.partial(jax.jit,
                   static_argnames=("dims", "samples_per_step", "matmul_dtype"))
def sparse_matrix_entity_predictor_forward(x_nchw, w_blob, v_blob, *, dims,
                                           samples_per_step=None,
                                           matmul_dtype=jnp.float32):
    """Full fused forward pass. Input/output in PyTorch NCHW convention."""
    N, C0, H, W = x_nchw.shape
    S = H * W
    M = H + W + 1
    L = len(dims) - 1
    assert C0 == dims[0]
    c_out = dims[-1]

    if samples_per_step is None:
        # Keep >= 2 grid steps whenever N >= 2 so both v7x TensorCores get work
        # ("parallel" grid axis); remaining samples are lane-stacked inside each
        # step, which amortises per-step overhead on v5e/v6e.
        samples_per_step = max(1, (N + 1) // 2)
    nb = max(1, min(int(samples_per_step), N))
    G = -(-N // nb)
    n_pad = G * nb

    # NCHW with (H, W) flattened IS the kernel's (C, S) layout; only lane-stacking
    # of nb samples per step needs a (cheap, wrapper-side) transpose.
    x = x_nchw.reshape(N, C0, S)
    if n_pad != N:
        x = jnp.pad(x, ((0, n_pad - N), (0, 0), (0, 0)))
    x = (x.reshape(G, nb, C0, S).transpose(0, 2, 1, 3)
          .reshape(G, C0, nb * S).astype(matmul_dtype))

    P_np, B_np = _fused_pool_bcast(H, W, nb)
    P = jnp.asarray(P_np, dtype=matmul_dtype)           # (nb*S, nb*M)
    B = jnp.asarray(B_np, dtype=matmul_dtype)           # (nb*M, nb*S)
    w_c = w_blob.astype(matmul_dtype)                   # single casting point
    v_f32 = v_blob.astype(jnp.float32)                  # bias / norm params stay f32

    in_specs = [
        pl.BlockSpec((None, C0, nb * S), lambda g: (g, 0, 0)),
        pl.BlockSpec(P.shape, lambda g: (0, 0)),
        pl.BlockSpec(B.shape, lambda g: (0, 0)),
        pl.BlockSpec(w_c.shape, lambda g: (0, 0, 0)),
        pl.BlockSpec(v_f32.shape, lambda g: (0, 0)),
    ]
    out_specs = pl.BlockSpec((None, c_out, nb * S), lambda g: (g, 0, 0))
    out_shape = jax.ShapeDtypeStruct((G, c_out, nb * S), jnp.float32)

    # Advisory cost estimate for the XLA scheduler.
    flops, trans = 0, 0
    for i in range(L):
        cin, cout = dims[i], dims[i + 1]
        flops += 2 * (cin * (nb * S) * (nb * M)          # fused pooled statistics
                      + cout * cin * (nb * M)            # per-basis channel mix
                      + cout * cin * (nb * S)            # identity basis
                      + cout * (nb * M) * (nb * S))      # broadcast-back
        if i < L - 1:
            flops += 6 * cout * nb * S                   # folded norm + ReLU
            trans += cout * nb                           # rsqrt per (channel, sample)
    flops *= G
    trans *= G
    bytes_accessed = (_nbytes(x.shape, x.dtype) + _nbytes(P.shape, P.dtype)
                      + _nbytes(B.shape, B.dtype) + _nbytes(w_c.shape, w_c.dtype)
                      + _nbytes(v_f32.shape, v_f32.dtype)
                      + _nbytes((G, c_out, nb * S), jnp.float32))

    kernel = functools.partial(_fused_equiv_net_kernel, dims=dims, nb=nb,
                               H=H, W=W, eps=1e-5, cdtype=matmul_dtype)

    out = pl.pallas_call(
        kernel,
        out_shape=out_shape,
        grid=(G,),
        in_specs=in_specs,
        out_specs=out_specs,
        compiler_params=pltpu.CompilerParams(dimension_semantics=("parallel",)),
        cost_estimate=pl.CostEstimate(flops=flops, transcendentals=trans,
                                      bytes_accessed=bytes_accessed),
    )(x, P, B, w_c, v_f32)

    out = (out.reshape(G, c_out, nb, S).transpose(0, 2, 1, 3)
              .reshape(n_pad, c_out, H, W))
    return out[:N]


def init_params(key, input_channels, source_layers, target_layers, output_dim):
    """Deterministic synthetic parameters (channel-mixing weights pre-transposed).

    Channel chain: input_channels -> source_layers... -> target_layers... -> output_dim.
    Norm affine params use the PyTorch defaults (gamma=1, beta=0, i.e. norm_affine=False).
    """
    dims = [input_channels] + list(source_layers) + list(target_layers) + [output_dim]
    params = []
    for i in range(len(dims) - 1):
        cin, cout = dims[i], dims[i + 1]
        key, kw, kb = jax.random.split(key, 3)
        # stored as (4, cout, cin): w_t[k] = W_k.T so the kernel can use it directly
        w_t = jax.random.normal(kw, (4, cout, cin), jnp.float32) / jnp.sqrt(4.0 * cin)
        b = 0.1 * jax.random.normal(kb, (cout, 1), jnp.float32)
        gamma = jnp.ones((cout, 1), jnp.float32)
        beta = jnp.zeros((cout, 1), jnp.float32)
        params.append((w_t, b, gamma, beta))
    return params


def _reference_forward(x_nchw, params, eps=1e-5):
    """Pure-JAX reference (straightforward broadcast formulation) for checking."""
    hi = jax.lax.Precision.HIGHEST
    x = jnp.transpose(x_nchw, (0, 2, 3, 1)).astype(jnp.float32)   # NCHW -> NHWC
    n_layers = len(params)
    for i, (w_t, b, g, be) in enumerate(params):
        row = jnp.mean(x, axis=2, keepdims=True)        # pool over W
        col = jnp.mean(x, axis=1, keepdims=True)        # pool over H
        tot = jnp.mean(x, axis=(1, 2), keepdims=True)   # pool over all
        y = (jnp.einsum('nhwc,oc->nhwo', x, w_t[0], precision=hi)
             + jnp.einsum('nhwc,oc->nhwo', jnp.broadcast_to(row, x.shape), w_t[1], precision=hi)
             + jnp.einsum('nhwc,oc->nhwo', jnp.broadcast_to(col, x.shape), w_t[2], precision=hi)
             + jnp.einsum('nhwc,oc->nhwo', jnp.broadcast_to(tot, x.shape), w_t[3], precision=hi)
             + b[:, 0])
        if i < n_layers - 1:
            mu = jnp.mean(y, axis=(1, 2), keepdims=True)
            var = jnp.mean((y - mu) ** 2, axis=(1, 2), keepdims=True)
            y = (y - mu) * jax.lax.rsqrt(var + eps)
            y = y * g[:, 0] + be[:, 0]
            y = jnp.maximum(y, 0.0)
        x = y
    return jnp.transpose(x, (0, 3, 1, 2))               # NHWC -> NCHW


if __name__ == "__main__":
    key = jax.random.PRNGKey(0)
    k_x, k_p = jax.random.split(key)

    # batch=2, input_channels=4, two entity sets of size 16 => x: (2, 4, 16, 16) NCHW.
    N, C_in, H, W = 2, 4, 16, 16
    x = jax.random.normal(k_x, (N, C_in, H, W), jnp.float32)

    params = init_params(
        k_p,
        input_channels=C_in,
        source_layers=[32, 64, 32],
        target_layers=[32],
        output_dim=1,
    )
    w_blob, v_blob, dims = pack_params(params)
    ref = _reference_forward(x, params)

    # Config A (default): 2 parallel grid steps (keeps both v7x TensorCores busy),
    # one sample per step, f32 matmuls.
    out = sparse_matrix_entity_predictor_forward(x, w_blob, v_blob, dims=dims)
    out = jax.block_until_ready(out)
    assert out.shape == (N, 1, H, W), out.shape
    assert bool(jnp.all(jnp.isfinite(out)))
    assert bool(jnp.allclose(out, ref, rtol=2e-2, atol=2e-2)), \
        float(jnp.max(jnp.abs(out - ref)))

    # Config B: both samples lane-stacked into a single grid step (the v5e/v6e
    # single-TensorCore layout) -- exercises the block-diagonal pool/broadcast
    # constants and the per-sample normalisation path.
    out_b = sparse_matrix_entity_predictor_forward(
        x, w_blob, v_blob, dims=dims, samples_per_step=2)
    out_b = jax.block_until_ready(out_b)
    assert bool(jnp.allclose(out_b, ref, rtol=2e-2, atol=2e-2)), \
        float(jnp.max(jnp.abs(out_b - ref)))

    # Config C: bf16 MXU inputs with f32 accumulation (v6e / v7x native rate);
    # bias / normalisation math stays f32.
    out_c = sparse_matrix_entity_predictor_forward(
        x, w_blob, v_blob, dims=dims, matmul_dtype=jnp.bfloat16)
    out_c = jax.block_until_ready(out_c)
    assert bool(jnp.all(jnp.isfinite(out_c)))
    assert bool(jnp.allclose(out_c, ref, rtol=1e-1, atol=1e-1)), \
        float(jnp.max(jnp.abs(out_c - ref)))

    print("KERNEL_OK")
</pallas_src>

<mosaic_0001>
module attributes {stable_mosaic.version = 11 : i64} {
  func.func @_fused_equiv_net_kernel(%arg0: i32, %arg1: memref<1x4x256xf32, #tpu.memory_space<vmem>>, %arg2: memref<256x33xf32, #tpu.memory_space<vmem>>, %arg3: memref<33x256xf32, #tpu.memory_space<vmem>>, %arg4: memref<20x64x64xf32, #tpu.memory_space<vmem>>, %arg5: memref<64x15xf32, #tpu.memory_space<vmem>>, %arg6: memref<1x1x256xf32, #tpu.memory_space<vmem>>) attributes {dimension_semantics = [#tpu.dimension_semantics<parallel>], iteration_bounds = array<i64: 2>, scalar_prefetch = 0 : i64, scratch_operands = 0 : i64, tpu.core_type = #tpu.core_type<tc>, window_params = [{transform_indices = @transform_0, window_bounds = array<i64: 1, 4, 256>}, {pipeline_mode = #tpu.pipeline_mode<synchronous>, transform_indices = @transform_1, window_bounds = array<i64: 256, 33>}, {pipeline_mode = #tpu.pipeline_mode<synchronous>, transform_indices = @transform_2, window_bounds = array<i64: 33, 256>}, {pipeline_mode = #tpu.pipeline_mode<synchronous>, transform_indices = @transform_3, window_bounds = array<i64: 20, 64, 64>}, {pipeline_mode = #tpu.pipeline_mode<synchronous>, transform_indices = @transform_4, window_bounds = array<i64: 64, 15>}, {transform_indices = @transform_5, window_bounds = array<i64: 1, 1, 256>}]} {
    %c0 = arith.constant 0 : index
    %c0_0 = arith.constant 0 : index
    %c0_1 = arith.constant 0 : index
    %0 = vector.load %arg1[%c0, %c0_0, %c0_1] : memref<1x4x256xf32, #tpu.memory_space<vmem>>, vector<1x4x256xf32>
    %1 = vector.shape_cast %0 : vector<1x4x256xf32> to vector<4x256xf32>
    %c0_2 = arith.constant 0 : index
    %c0_3 = arith.constant 0 : index
    %2 = vector.load %arg2[%c0_2, %c0_3] : memref<256x33xf32, #tpu.memory_space<vmem>>, vector<256x33xf32>
    %cst = arith.constant dense<0.000000e+00> : vector<4x33xf32>
    %3 = tpu.matmul %1, %2, %cst {dimension_numbers = #tpu.dot_dimension_numbers<[1], [0], [0], [1], [0, 0, 1, 1], [], []>} : vector<4x256xf32>, vector<256x33xf32>, vector<4x33xf32> -> vector<4x33xf32>
    %c0_4 = arith.constant 0 : index
    %c0_5 = arith.constant 0 : index
    %c0_6 = arith.constant 0 : index
    %4 = vector.load %arg4[%c0_4, %c0_5, %c0_6] : memref<20x64x64xf32, #tpu.memory_space<vmem>>, vector<1x32x4xf32>
    %5 = vector.shape_cast %4 : vector<1x32x4xf32> to vector<32x4xf32>
    %c1 = arith.constant 1 : index
    %c0_7 = arith.constant 0 : index
    %c0_8 = arith.constant 0 : index
    %6 = vector.load %arg4[%c1, %c0_7, %c0_8] : memref<20x64x64xf32, #tpu.memory_space<vmem>>, vector<1x32x4xf32>
    %7 = vector.shape_cast %6 : vector<1x32x4xf32> to vector<32x4xf32>
    %c2 = arith.constant 2 : index
    %c0_9 = arith.constant 0 : index
    %c0_10 = arith.constant 0 : index
    %8 = vector.load %arg4[%c2, %c0_9, %c0_10] : memref<20x64x64xf32, #tpu.memory_space<vmem>>, vector<1x32x4xf32>
    %9 = vector.shape_cast %8 : vector<1x32x4xf32> to vector<32x4xf32>
    %c3 = arith.constant 3 : index
    %c0_11 = arith.constant 0 : index
    %c0_12 = arith.constant 0 : index
    %10 = vector.load %arg4[%c3, %c0_11, %c0_12] : memref<20x64x64xf32, #tpu.memory_space<vmem>>, vector<1x32x4xf32>
    %11 = vector.shape_cast %10 : vector<1x32x4xf32> to vector<32x4xf32>
    %c0_13 = arith.constant 0 : index
    %c0_14 = arith.constant 0 : index
    %12 = vector.load %arg5[%c0_13, %c0_14] : memref<64x15xf32, #tpu.memory_space<vmem>>, vector<32x1xf32>
    %13 = vector.extract_strided_slice %3 {offsets = [0, 0], sizes = [4, 16], strides = [1, 1]} : vector<4x33xf32> to vector<4x16xf32>
    %cst_15 = arith.constant dense<0.000000e+00> : vector<32x16xf32>
    %14 = tpu.matmul %7, %13, %cst_15 {dimension_numbers = #tpu.dot_dimension_numbers<[1], [0], [0], [1], [0, 0, 1, 1], [], []>} : vector<32x4xf32>, vector<4x16xf32>, vector<32x16xf32> -> vector<32x16xf32>
    %15 = vector.extract_strided_slice %3 {offsets = [0, 16], sizes = [4, 16], strides = [1, 1]} : vector<4x33xf32> to vector<4x16xf32>
    %cst_16 = arith.constant dense<0.000000e+00> : vector<32x16xf32>
    %16 = tpu.matmul %9, %15, %cst_16 {dimension_numbers = #tpu.dot_dimension_numbers<[1], [0], [0], [1], [0, 0, 1, 1], [], []>} : vector<32x4xf32>, vector<4x16xf32>, vector<32x16xf32> -> vector<32x16xf32>
    %17 = vector.extract_strided_slice %3 {offsets = [0, 32], sizes = [4, 1], strides = [1, 1]} : vector<4x33xf32> to vector<4x1xf32>
    %cst_17 = arith.constant dense<0.000000e+00> : vector<32x1xf32>
    %18 = tpu.matmul %11, %17, %cst_17 {dimension_numbers = #tpu.dot_dimension_numbers<[1], [0], [0], [1], [0, 0, 1, 1], [], []>} : vector<32x4xf32>, vector<4x1xf32>, vector<32x1xf32> -> vector<32x1xf32>
    %19 = arith.addf %18, %12 : vector<32x1xf32>
    %20 = tpu.concatenate %14, %16, %19 in 1 : vector<32x16xf32>, vector<32x16xf32>, vector<32x1xf32> -> vector<32x33xf32>
    %cst_18 = arith.constant dense<0.000000e+00> : vector<32x256xf32>
    %21 = tpu.matmul %5, %1, %cst_18 {dimension_numbers = #tpu.dot_dimension_numbers<[1], [0], [0], [1], [0, 0, 1, 1], [], []>} : vector<32x4xf32>, vector<4x256xf32>, vector<32x256xf32> -> vector<32x256xf32>
    %c0_19 = arith.constant 0 : index
    %c0_20 = arith.constant 0 : index
    %22 = vector.load %arg3[%c0_19, %c0_20] : memref<33x256xf32, #tpu.memory_space<vmem>>, vector<33x256xf32>
    %cst_21 = arith.constant dense<0.000000e+00> : vector<32x256xf32>
    %23 = tpu.matmul %20, %22, %cst_21 {dimension_numbers = #tpu.dot_dimension_numbers<[1], [0], [0], [1], [0, 0, 1, 1], [], []>} : vector<32x33xf32>, vector<33x256xf32>, vector<32x256xf32> -> vector<32x256xf32>
    %24 = arith.addf %21, %23 : vector<32x256xf32>
    %c0_22 = arith.constant 0 : index
    %c1_23 = arith.constant 1 : index
    %25 = vector.load %arg5[%c0_22, %c1_23] : memref<64x15xf32, #tpu.memory_space<vmem>>, vector<32x1xf32>
    %c0_24 = arith.constant 0 : index
    %c2_25 = arith.constant 2 : index
    %26 = vector.load %arg5[%c0_24, %c2_25] : memref<64x15xf32, #tpu.memory_space<vmem>>, vector<32x1xf32>
    %cst_26 = arith.constant dense<0.000000e+00> : vector<32xf32>
    %27 = vector.multi_reduction <add>, %24, %cst_26 [1] : vector<32x256xf32> to vector<32xf32>
    %28 = vector.shape_cast %27 : vector<32xf32> to vector<32x1xf32>
    %cst_27 = arith.constant 2.560000e+02 : f32
    %29 = vector.broadcast %cst_27 : f32 to vector<32x1xf32>
    %30 = arith.divf %28, %29 : vector<32x1xf32>
    %31 = arith.mulf %24, %24 : vector<32x256xf32>
    %cst_28 = arith.constant dense<0.000000e+00> : vector<32xf32>
    %32 = vector.multi_reduction <add>, %31, %cst_28 [1] : vector<32x256xf32> to vector<32xf32>
    %33 = vector.shape_cast %32 : vector<32xf32> to vector<32x1xf32>
    %cst_29 = arith.constant 2.560000e+02 : f32
    %34 = vector.broadcast %cst_29 : f32 to vector<32x1xf32>
    %35 = arith.divf %33, %34 : vector<32x1xf32>
    %36 = arith.mulf %30, %30 : vector<32x1xf32>
    %37 = arith.subf %35, %36 : vector<32x1xf32>
    %cst_30 = arith.constant 9.99999974E-6 : f32
    %38 = vector.broadcast %cst_30 : f32 to vector<32x1xf32>
    %39 = arith.addf %37, %38 : vector<32x1xf32>
    %40 = math.rsqrt %39 : vector<32x1xf32>
    %41 = arith.mulf %25, %40 : vector<32x1xf32>
    %42 = arith.mulf %30, %41 : vector<32x1xf32>
    %43 = arith.subf %26, %42 : vector<32x1xf32>
    %44 = vector.broadcast %41 : vector<32x1xf32> to vector<32x256xf32>
    %45 = arith.mulf %24, %44 : vector<32x256xf32>
    %46 = vector.broadcast %43 : vector<32x1xf32> to vector<32x256xf32>
    %47 = arith.addf %45, %46 : vector<32x256xf32>
    %cst_31 = arith.constant 0.000000e+00 : f32
    %48 = vector.broadcast %cst_31 : f32 to vector<32x256xf32>
    %49 = arith.maximumf %47, %48 : vector<32x256xf32>
    %c0_32 = arith.constant 0 : index
    %c0_33 = arith.constant 0 : index
    %50 = vector.load %arg2[%c0_32, %c0_33] : memref<256x33xf32, #tpu.memory_space<vmem>>, vector<256x33xf32>
    %cst_34 = arith.constant dense<0.000000e+00> : vector<32x33xf32>
    %51 = tpu.matmul %49, %50, %cst_34 {dimension_numbers = #tpu.dot_dimension_numbers<[1], [0], [0], [1], [0, 0, 1, 1], [], []>} : vector<32x256xf32>, vector<256x33xf32>, vector<32x33xf32> -> vector<32x33xf32>
    %c4 = arith.constant 4 : index
    %c0_35 = arith.constant 0 : index
    %c0_36 = arith.constant 0 : index
    %52 = vector.load %arg4[%c4, %c0_35, %c0_36] : memref<20x64x64xf32, #tpu.memory_space<vmem>>, vector<1x64x32xf32>
    %53 = vector.shape_cast %52 : vector<1x64x32xf32> to vector<64x32xf32>
    %c5 = arith.constant 5 : index
    %c0_37 = arith.constant 0 : index
    %c0_38 = arith.constant 0 : index
    %54 = vector.load %arg4[%c5, %c0_37, %c0_38] : memref<20x64x64xf32, #tpu.memory_space<vmem>>, vector<1x64x32xf32>
    %55 = vector.shape_cast %54 : vector<1x64x32xf32> to vector<64x32xf32>
    %c6 = arith.constant 6 : index
    %c0_39 = arith.constant 0 : index
    %c0_40 = arith.constant 0 : index
    %56 = vector.load %arg4[%c6, %c0_39, %c0_40] : memref<20x64x64xf32, #tpu.memory_space<vmem>>, vector<1x64x32xf32>
    %57 = vector.shape_cast %56 : vector<1x64x32xf32> to vector<64x32xf32>
    %c7 = arith.constant 7 : index
    %c0_41 = arith.constant 0 : index
    %c0_42 = arith.constant 0 : index
    %58 = vector.load %arg4[%c7, %c0_41, %c0_42] : memref<20x64x64xf32, #tpu.memory_space<vmem>>, vector<1x64x32xf32>
    %59 = vector.shape_cast %58 : vector<1x64x32xf32> to vector<64x32xf32>
    %c0_43 = arith.constant 0 : index
    %c3_44 = arith.constant 3 : index
    %60 = vector.load %arg5[%c0_43, %c3_44] : memref<64x15xf32, #tpu.memory_space<vmem>>, vector<64x1xf32>
    %61 = vector.extract_strided_slice %51 {offsets = [0, 0], sizes = [32, 16], strides = [1, 1]} : vector<32x33xf32> to vector<32x16xf32>
    %cst_45 = arith.constant dense<0.000000e+00> : vector<64x16xf32>
    %62 = tpu.matmul %55, %61, %cst_45 {dimension_numbers = #tpu.dot_dimension_numbers<[1], [0], [0], [1], [0, 0, 1, 1], [], []>} : vector<64x32xf32>, vector<32x16xf32>, vector<64x16xf32> -> vector<64x16xf32>
    %63 = vector.extract_strided_slice %51 {offsets = [0, 16], sizes = [32, 16], strides = [1, 1]} : vector<32x33xf32> to vector<32x16xf32>
    %cst_46 = arith.constant dense<0.000000e+00> : vector<64x16xf32>
    %64 = tpu.matmul %57, %63, %cst_46 {dimension_numbers = #tpu.dot_dimension_numbers<[1], [0], [0], [1], [0, 0, 1, 1], [], []>} : vector<64x32xf32>, vector<32x16xf32>, vector<64x16xf32> -> vector<64x16xf32>
    %65 = vector.extract_strided_slice %51 {offsets = [0, 32], sizes = [32, 1], strides = [1, 1]} : vector<32x33xf32> to vector<32x1xf32>
    %cst_47 = arith.constant dense<0.000000e+00> : vector<64x1xf32>
    %66 = tpu.matmul %59, %65, %cst_47 {dimension_numbers = #tpu.dot_dimension_numbers<[1], [0], [0], [1], [0, 0, 1, 1], [], []>} : vector<64x32xf32>, vector<32x1xf32>, vector<64x1xf32> -> vector<64x1xf32>
    %67 = arith.addf %66, %60 : vector<64x1xf32>
    %68 = tpu.concatenate %62, %64, %67 in 1 : vector<64x16xf32>, vector<64x16xf32>, vector<64x1xf32> -> vector<64x33xf32>
    %cst_48 = arith.constant dense<0.000000e+00> : vector<64x256xf32>
    %69 = tpu.matmul %53, %49, %cst_48 {dimension_numbers = #tpu.dot_dimension_numbers<[1], [0], [0], [1], [0, 0, 1, 1], [], []>} : vector<64x32xf32>, vector<32x256xf32>, vector<64x256xf32> -> vector<64x256xf32>
    %c0_49 = arith.constant 0 : index
    %c0_50 = arith.constant 0 : index
    %70 = vector.load %arg3[%c0_49, %c0_50] : memref<33x256xf32, #tpu.memory_space<vmem>>, vector<33x256xf32>
    %cst_51 = arith.constant dense<0.000000e+00> : vector<64x256xf32>
    %71 = tpu.matmul %68, %70, %cst_51 {dimension_numbers = #tpu.dot_dimension_numbers<[1], [0], [0], [1], [0, 0, 1, 1], [], []>} : vector<64x33xf32>, vector<33x256xf32>, vector<64x256xf32> -> vector<64x256xf32>
    %72 = arith.addf %69, %71 : vector<64x256xf32>
    %c0_52 = arith.constant 0 : index
    %c4_53 = arith.constant 4 : index
    %73 = vector.load %arg5[%c0_52, %c4_53] : memref<64x15xf32, #tpu.memory_space<vmem>>, vector<64x1xf32>
    %c0_54 = arith.constant 0 : index
    %c5_55 = arith.constant 5 : index
    %74 = vector.load %arg5[%c0_54, %c5_55] : memref<64x15xf32, #tpu.memory_space<vmem>>, vector<64x1xf32>
    %cst_56 = arith.constant dense<0.000000e+00> : vector<64xf32>
    %75 = vector.multi_reduction <add>, %72, %cst_56 [1] : vector<64x256xf32> to vector<64xf32>
    %76 = vector.shape_cast %75 : vector<64xf32> to vector<64x1xf32>
    %cst_57 = arith.constant 2.560000e+02 : f32
    %77 = vector.broadcast %cst_57 : f32 to vector<64x1xf32>
    %78 = arith.divf %76, %77 : vector<64x1xf32>
    %79 = arith.mulf %72, %72 : vector<64x256xf32>
    %cst_58 = arith.constant dense<0.000000e+00> : vector<64xf32>
    %80 = vector.multi_reduction <add>, %79, %cst_58 [1] : vector<64x256xf32> to vector<64xf32>
    %81 = vector.shape_cast %80 : vector<64xf32> to vector<64x1xf32>
    %cst_59 = arith.constant 2.560000e+02 : f32
    %82 = vector.broadcast %cst_59 : f32 to vector<64x1xf32>
    %83 = arith.divf %81, %82 : vector<64x1xf32>
    %84 = arith.mulf %78, %78 : vector<64x1xf32>
    %85 = arith.subf %83, %84 : vector<64x1xf32>
    %cst_60 = arith.constant 9.99999974E-6 : f32
    %86 = vector.broadcast %cst_60 : f32 to vector<64x1xf32>
    %87 = arith.addf %85, %86 : vector<64x1xf32>
    %88 = math.rsqrt %87 : vector<64x1xf32>
    %89 = arith.mulf %73, %88 : vector<64x1xf32>
    %90 = arith.mulf %78, %89 : vector<64x1xf32>
    %91 = arith.subf %74, %90 : vector<64x1xf32>
    %92 = vector.broadcast %89 : vector<64x1xf32> to vector<64x256xf32>
    %93 = arith.mulf %72, %92 : vector<64x256xf32>
    %94 = vector.broadcast %91 : vector<64x1xf32> to vector<64x256xf32>
    %95 = arith.addf %93, %94 : vector<64x256xf32>
    %cst_61 = arith.constant 0.000000e+00 : f32
    %96 = vector.broadcast %cst_61 : f32 to vector<64x256xf32>
    %97 = arith.maximumf %95, %96 : vector<64x256xf32>
    %c0_62 = arith.constant 0 : index
    %c0_63 = arith.constant 0 : index
    %98 = vector.load %arg2[%c0_62, %c0_63] : memref<256x33xf32, #tpu.memory_space<vmem>>, vector<256x33xf32>
    %cst_64 = arith.constant dense<0.000000e+00> : vector<64x33xf32>
    %99 = tpu.matmul %97, %98, %cst_64 {dimension_numbers = #tpu.dot_dimension_numbers<[1], [0], [0], [1], [0, 0, 1, 1], [], []>} : vector<64x256xf32>, vector<256x33xf32>, vector<64x33xf32> -> vector<64x33xf32>
    %c8 = arith.constant 8 : index
    %c0_65 = arith.constant 0 : index
    %c0_66 = arith.constant 0 : index
    %100 = vector.load %arg4[%c8, %c0_65, %c0_66] : memref<20x64x64xf32, #tpu.memory_space<vmem>>, vector<1x32x64xf32>
    %101 = vector.shape_cast %100 : vector<1x32x64xf32> to vector<32x64xf32>
    %c9 = arith.constant 9 : index
    %c0_67 = arith.constant 0 : index
    %c0_68 = arith.constant 0 : index
    %102 = vector.load %arg4[%c9, %c0_67, %c0_68] : memref<20x64x64xf32, #tpu.memory_space<vmem>>, vector<1x32x64xf32>
    %103 = vector.shape_cast %102 : vector<1x32x64xf32> to vector<32x64xf32>
    %c10 = arith.constant 10 : index
    %c0_69 = arith.constant 0 : index
    %c0_70 = arith.constant 0 : index
    %104 = vector.load %arg4[%c10, %c0_69, %c0_70] : memref<20x64x64xf32, #tpu.memory_space<vmem>>, vector<1x32x64xf32>
    %105 = vector.shape_cast %104 : vector<1x32x64xf32> to vector<32x64xf32>
    %c11 = arith.constant 11 : index
    %c0_71 = arith.constant 0 : index
    %c0_72 = arith.constant 0 : index
    %106 = vector.load %arg4[%c11, %c0_71, %c0_72] : memref<20x64x64xf32, #tpu.memory_space<vmem>>, vector<1x32x64xf32>
    %107 = vector.shape_cast %106 : vector<1x32x64xf32> to vector<32x64xf32>
    %c0_73 = arith.constant 0 : index
    %c6_74 = arith.constant 6 : index
    %108 = vector.load %arg5[%c0_73, %c6_74] : memref<64x15xf32, #tpu.memory_space<vmem>>, vector<32x1xf32>
    %109 = vector.extract_strided_slice %99 {offsets = [0, 0], sizes = [64, 16], strides = [1, 1]} : vector<64x33xf32> to vector<64x16xf32>
    %cst_75 = arith.constant dense<0.000000e+00> : vector<32x16xf32>
    %110 = tpu.matmul %103, %109, %cst_75 {dimension_numbers = #tpu.dot_dimension_numbers<[1], [0], [0], [1], [0, 0, 1, 1], [], []>} : vector<32x64xf32>, vector<64x16xf32>, vector<32x16xf32> -> vector<32x16xf32>
    %111 = vector.extract_strided_slice %99 {offsets = [0, 16], sizes = [64, 16], strides = [1, 1]} : vector<64x33xf32> to vector<64x16xf32>
    %cst_76 = arith.constant dense<0.000000e+00> : vector<32x16xf32>
    %112 = tpu.matmul %105, %111, %cst_76 {dimension_numbers = #tpu.dot_dimension_numbers<[1], [0], [0], [1], [0, 0, 1, 1], [], []>} : vector<32x64xf32>, vector<64x16xf32>, vector<32x16xf32> -> vector<32x16xf32>
    %113 = vector.extract_strided_slice %99 {offsets = [0, 32], sizes = [64, 1], strides = [1, 1]} : vector<64x33xf32> to vector<64x1xf32>
    %cst_77 = arith.constant dense<0.000000e+00> : vector<32x1xf32>
    %114 = tpu.matmul %107, %113, %cst_77 {dimension_numbers = #tpu.dot_dimension_numbers<[1], [0], [0], [1], [0, 0, 1, 1], [], []>} : vector<32x64xf32>, vector<64x1xf32>, vector<32x1xf32> -> vector<32x1xf32>
    %115 = arith.addf %114, %108 : vector<32x1xf32>
    %116 = tpu.concatenate %110, %112, %115 in 1 : vector<32x16xf32>, vector<32x16xf32>, vector<32x1xf32> -> vector<32x33xf32>
    %cst_78 = arith.constant dense<0.000000e+00> : vector<32x256xf32>
    %117 = tpu.matmul %101, %97, %cst_78 {dimension_numbers = #tpu.dot_dimension_numbers<[1], [0], [0], [1], [0, 0, 1, 1], [], []>} : vector<32x64xf32>, vector<64x256xf32>, vector<32x256xf32> -> vector<32x256xf32>
    %c0_79 = arith.constant 0 : index
    %c0_80 = arith.constant 0 : index
    %118 = vector.load %arg3[%c0_79, %c0_80] : memref<33x256xf32, #tpu.memory_space<vmem>>, vector<33x256xf32>
    %cst_81 = arith.constant dense<0.000000e+00> : vector<32x256xf32>
    %119 = tpu.matmul %116, %118, %cst_81 {dimension_numbers = #tpu.dot_dimension_numbers<[1], [0], [0], [1], [0, 0, 1, 1], [], []>} : vector<32x33xf32>, vector<33x256xf32>, vector<32x256xf32> -> vector<32x256xf32>
    %120 = arith.addf %117, %119 : vector<32x256xf32>
    %c0_82 = arith.constant 0 : index
    %c7_83 = arith.constant 7 : index
    %121 = vector.load %arg5[%c0_82, %c7_83] : memref<64x15xf32, #tpu.memory_space<vmem>>, vector<32x1xf32>
    %c0_84 = arith.constant 0 : index
    %c8_85 = arith.constant 8 : index
    %122 = vector.load %arg5[%c0_84, %c8_85] : memref<64x15xf32, #tpu.memory_space<vmem>>, vector<32x1xf32>
    %cst_86 = arith.constant dense<0.000000e+00> : vector<32xf32>
    %123 = vector.multi_reduction <add>, %120, %cst_86 [1] : vector<32x256xf32> to vector<32xf32>
    %124 = vector.shape_cast %123 : vector<32xf32> to vector<32x1xf32>
    %cst_87 = arith.constant 2.560000e+02 : f32
    %125 = vector.broadcast %cst_87 : f32 to vector<32x1xf32>
    %126 = arith.divf %124, %125 : vector<32x1xf32>
    %127 = arith.mulf %120, %120 : vector<32x256xf32>
    %cst_88 = arith.constant dense<0.000000e+00> : vector<32xf32>
    %128 = vector.multi_reduction <add>, %127, %cst_88 [1] : vector<32x256xf32> to vector<32xf32>
    %129 = vector.shape_cast %128 : vector<32xf32> to vector<32x1xf32>
    %cst_89 = arith.constant 2.560000e+02 : f32
    %130 = vector.broadcast %cst_89 : f32 to vector<32x1xf32>
    %131 = arith.divf %129, %130 : vector<32x1xf32>
    %132 = arith.mulf %126, %126 : vector<32x1xf32>
    %133 = arith.subf %131, %132 : vector<32x1xf32>
    %cst_90 = arith.constant 9.99999974E-6 : f32
    %134 = vector.broadcast %cst_90 : f32 to vector<32x1xf32>
    %135 = arith.addf %133, %134 : vector<32x1xf32>
    %136 = math.rsqrt %135 : vector<32x1xf32>
    %137 = arith.mulf %121, %136 : vector<32x1xf32>
    %138 = arith.mulf %126, %137 : vector<32x1xf32>
    %139 = arith.subf %122, %138 : vector<32x1xf32>
    %140 = vector.broadcast %137 : vector<32x1xf32> to vector<32x256xf32>
    %141 = arith.mulf %120, %140 : vector<32x256xf32>
    %142 = vector.broadcast %139 : vector<32x1xf32> to vector<32x256xf32>
    %143 = arith.addf %141, %142 : vector<32x256xf32>
    %cst_91 = arith.constant 0.000000e+00 : f32
    %144 = vector.broadcast %cst_91 : f32 to vector<32x256xf32>
    %145 = arith.maximumf %143, %144 : vector<32x256xf32>
    %c0_92 = arith.constant 0 : index
    %c0_93 = arith.constant 0 : index
    %146 = vector.load %arg2[%c0_92, %c0_93] : memref<256x33xf32, #tpu.memory_space<vmem>>, vector<256x33xf32>
    %cst_94 = arith.constant dense<0.000000e+00> : vector<32x33xf32>
    %147 = tpu.matmul %145, %146, %cst_94 {dimension_numbers = #tpu.dot_dimension_numbers<[1], [0], [0], [1], [0, 0, 1, 1], [], []>} : vector<32x256xf32>, vector<256x33xf32>, vector<32x33xf32> -> vector<32x33xf32>
    %c12 = arith.constant 12 : index
    %c0_95 = arith.constant 0 : index
    %c0_96 = arith.constant 0 : index
    %148 = vector.load %arg4[%c12, %c0_95, %c0_96] : memref<20x64x64xf32, #tpu.memory_space<vmem>>, vector<1x32x32xf32>
    %149 = vector.shape_cast %148 : vector<1x32x32xf32> to vector<32x32xf32>
    %c13 = arith.constant 13 : index
    %c0_97 = arith.constant 0 : index
    %c0_98 = arith.constant 0 : index
    %150 = vector.load %arg4[%c13, %c0_97, %c0_98] : memref<20x64x64xf32, #tpu.memory_space<vmem>>, vector<1x32x32xf32>
    %151 = vector.shape_cast %150 : vector<1x32x32xf32> to vector<32x32xf32>
    %c14 = arith.constant 14 : index
    %c0_99 = arith.constant 0 : index
    %c0_100 = arith.constant 0 : index
    %152 = vector.load %arg4[%c14, %c0_99, %c0_100] : memref<20x64x64xf32, #tpu.memory_space<vmem>>, vector<1x32x32xf32>
    %153 = vector.shape_cast %152 : vector<1x32x32xf32> to vector<32x32xf32>
    %c15 = arith.constant 15 : index
    %c0_101 = arith.constant 0 : index
    %c0_102 = arith.constant 0 : index
    %154 = vector.load %arg4[%c15, %c0_101, %c0_102] : memref<20x64x64xf32, #tpu.memory_space<vmem>>, vector<1x32x32xf32>
    %155 = vector.shape_cast %154 : vector<1x32x32xf32> to vector<32x32xf32>
    %c0_103 = arith.constant 0 : index
    %c9_104 = arith.constant 9 : index
    %156 = vector.load %arg5[%c0_103, %c9_104] : memref<64x15xf32, #tpu.memory_space<vmem>>, vector<32x1xf32>
    %157 = vector.extract_strided_slice %147 {offsets = [0, 0], sizes = [32, 16], strides = [1, 1]} : vector<32x33xf32> to vector<32x16xf32>
    %cst_105 = arith.constant dense<0.000000e+00> : vector<32x16xf32>
    %158 = tpu.matmul %151, %157, %cst_105 {dimension_numbers = #tpu.dot_dimension_numbers<[1], [0], [0], [1], [0, 0, 1, 1], [], []>} : vector<32x32xf32>, vector<32x16xf32>, vector<32x16xf32> -> vector<32x16xf32>
    %159 = vector.extract_strided_slice %147 {offsets = [0, 16], sizes = [32, 16], strides = [1, 1]} : vector<32x33xf32> to vector<32x16xf32>
    %cst_106 = arith.constant dense<0.000000e+00> : vector<32x16xf32>
    %160 = tpu.matmul %153, %159, %cst_106 {dimension_numbers = #tpu.dot_dimension_numbers<[1], [0], [0], [1], [0, 0, 1, 1], [], []>} : vector<32x32xf32>, vector<32x16xf32>, vector<32x16xf32> -> vector<32x16xf32>
    %161 = vector.extract_strided_slice %147 {offsets = [0, 32], sizes = [32, 1], strides = [1, 1]} : vector<32x33xf32> to vector<32x1xf32>
    %cst_107 = arith.constant dense<0.000000e+00> : vector<32x1xf32>
    %162 = tpu.matmul %155, %161, %cst_107 {dimension_numbers = #tpu.dot_dimension_numbers<[1], [0], [0], [1], [0, 0, 1, 1], [], []>} : vector<32x32xf32>, vector<32x1xf32>, vector<32x1xf32> -> vector<32x1xf32>
    %163 = arith.addf %162, %156 : vector<32x1xf32>
    %164 = tpu.concatenate %158, %160, %163 in 1 : vector<32x16xf32>, vector<32x16xf32>, vector<32x1xf32> -> vector<32x33xf32>
    %cst_108 = arith.constant dense<0.000000e+00> : vector<32x256xf32>
    %165 = tpu.matmul %149, %145, %cst_108 {dimension_numbers = #tpu.dot_dimension_numbers<[1], [0], [0], [1], [0, 0, 1, 1], [], []>} : vector<32x32xf32>, vector<32x256xf32>, vector<32x256xf32> -> vector<32x256xf32>
    %c0_109 = arith.constant 0 : index
    %c0_110 = arith.constant 0 : index
    %166 = vector.load %arg3[%c0_109, %c0_110] : memref<33x256xf32, #tpu.memory_space<vmem>>, vector<33x256xf32>
    %cst_111 = arith.constant dense<0.000000e+00> : vector<32x256xf32>
    %167 = tpu.matmul %164, %166, %cst_111 {dimension_numbers = #tpu.dot_dimension_numbers<[1], [0], [0], [1], [0, 0, 1, 1], [], []>} : vector<32x33xf32>, vector<33x256xf32>, vector<32x256xf32> -> vector<32x256xf32>
    %168 = arith.addf %165, %167 : vector<32x256xf32>
    %c0_112 = arith.constant 0 : index
    %c10_113 = arith.constant 10 : index
    %169 = vector.load %arg5[%c0_112, %c10_113] : memref<64x15xf32, #tpu.memory_space<vmem>>, vector<32x1xf32>
    %c0_114 = arith.constant 0 : index
    %c11_115 = arith.constant 11 : index
    %170 = vector.load %arg5[%c0_114, %c11_115] : memref<64x15xf32, #tpu.memory_space<vmem>>, vector<32x1xf32>
    %cst_116 = arith.constant dense<0.000000e+00> : vector<32xf32>
    %171 = vector.multi_reduction <add>, %168, %cst_116 [1] : vector<32x256xf32> to vector<32xf32>
    %172 = vector.shape_cast %171 : vector<32xf32> to vector<32x1xf32>
    %cst_117 = arith.constant 2.560000e+02 : f32
    %173 = vector.broadcast %cst_117 : f32 to vector<32x1xf32>
    %174 = arith.divf %172, %173 : vector<32x1xf32>
    %175 = arith.mulf %168, %168 : vector<32x256xf32>
    %cst_118 = arith.constant dense<0.000000e+00> : vector<32xf32>
    %176 = vector.multi_reduction <add>, %175, %cst_118 [1] : vector<32x256xf32> to vector<32xf32>
    %177 = vector.shape_cast %176 : vector<32xf32> to vector<32x1xf32>
    %cst_119 = arith.constant 2.560000e+02 : f32
    %178 = vector.broadcast %cst_119 : f32 to vector<32x1xf32>
    %179 = arith.divf %177, %178 : vector<32x1xf32>
    %180 = arith.mulf %174, %174 : vector<32x1xf32>
    %181 = arith.subf %179, %180 : vector<32x1xf32>
    %cst_120 = arith.constant 9.99999974E-6 : f32
    %182 = vector.broadcast %cst_120 : f32 to vector<32x1xf32>
    %183 = arith.addf %181, %182 : vector<32x1xf32>
    %184 = math.rsqrt %183 : vector<32x1xf32>
    %185 = arith.mulf %169, %184 : vector<32x1xf32>
    %186 = arith.mulf %174, %185 : vector<32x1xf32>
    %187 = arith.subf %170, %186 : vector<32x1xf32>
    %188 = vector.broadcast %185 : vector<32x1xf32> to vector<32x256xf32>
    %189 = arith.mulf %168, %188 : vector<32x256xf32>
    %190 = vector.broadcast %187 : vector<32x1xf32> to vector<32x256xf32>
    %191 = arith.addf %189, %190 : vector<32x256xf32>
    %cst_121 = arith.constant 0.000000e+00 : f32
    %192 = vector.broadcast %cst_121 : f32 to vector<32x256xf32>
    %193 = arith.maximumf %191, %192 : vector<32x256xf32>
    %c0_122 = arith.constant 0 : index
    %c0_123 = arith.constant 0 : index
    %194 = vector.load %arg2[%c0_122, %c0_123] : memref<256x33xf32, #tpu.memory_space<vmem>>, vector<256x33xf32>
    %cst_124 = arith.constant dense<0.000000e+00> : vector<32x33xf32>
    %195 = tpu.matmul %193, %194, %cst_124 {dimension_numbers = #tpu.dot_dimension_numbers<[1], [0], [0], [1], [0, 0, 1, 1], [], []>} : vector<32x256xf32>, vector<256x33xf32>, vector<32x33xf32> -> vector<32x33xf32>
    %c16 = arith.constant 16 : index
    %c0_125 = arith.constant 0 : index
    %c0_126 = arith.constant 0 : index
    %196 = vector.load %arg4[%c16, %c0_125, %c0_126] : memref<20x64x64xf32, #tpu.memory_space<vmem>>, vector<1x1x32xf32>
    %197 = vector.shape_cast %196 : vector<1x1x32xf32> to vector<1x32xf32>
    %c17 = arith.constant 17 : index
    %c0_127 = arith.constant 0 : index
    %c0_128 = arith.constant 0 : index
    %198 = vector.load %arg4[%c17, %c0_127, %c0_128] : memref<20x64x64xf32, #tpu.memory_space<vmem>>, vector<1x1x32xf32>
    %199 = vector.shape_cast %198 : vector<1x1x32xf32> to vector<1x32xf32>
    %c18 = arith.constant 18 : index
    %c0_129 = arith.constant 0 : index
    %c0_130 = arith.constant 0 : index
    %200 = vector.load %arg4[%c18, %c0_129, %c0_130] : memref<20x64x64xf32, #tpu.memory_space<vmem>>, vector<1x1x32xf32>
    %201 = vector.shape_cast %200 : vector<1x1x32xf32> to vector<1x32xf32>
    %c19 = arith.constant 19 : index
    %c0_131 = arith.constant 0 : index
    %c0_132 = arith.constant 0 : index
    %202 = vector.load %arg4[%c19, %c0_131, %c0_132] : memref<20x64x64xf32, #tpu.memory_space<vmem>>, vector<1x1x32xf32>
    %203 = vector.shape_cast %202 : vector<1x1x32xf32> to vector<1x32xf32>
    %c0_133 = arith.constant 0 : index
    %c12_134 = arith.constant 12 : index
    %204 = vector.load %arg5[%c0_133, %c12_134] : memref<64x15xf32, #tpu.memory_space<vmem>>, vector<1x1xf32>
    %205 = vector.extract_strided_slice %195 {offsets = [0, 0], sizes = [32, 16], strides = [1, 1]} : vector<32x33xf32> to vector<32x16xf32>
    %cst_135 = arith.constant dense<0.000000e+00> : vector<1x16xf32>
    %206 = tpu.matmul %199, %205, %cst_135 {dimension_numbers = #tpu.dot_dimension_numbers<[1], [0], [0], [1], [0, 0, 1, 1], [], []>} : vector<1x32xf32>, vector<32x16xf32>, vector<1x16xf32> -> vector<1x16xf32>
    %207 = vector.extract_strided_slice %195 {offsets = [0, 16], sizes = [32, 16], strides = [1, 1]} : vector<32x33xf32> to vector<32x16xf32>
    %cst_136 = arith.constant dense<0.000000e+00> : vector<1x16xf32>
    %208 = tpu.matmul %201, %207, %cst_136 {dimension_numbers = #tpu.dot_dimension_numbers<[1], [0], [0], [1], [0, 0, 1, 1], [], []>} : vector<1x32xf32>, vector<32x16xf32>, vector<1x16xf32> -> vector<1x16xf32>
    %209 = vector.extract_strided_slice %195 {offsets = [0, 32], sizes = [32, 1], strides = [1, 1]} : vector<32x33xf32> to vector<32x1xf32>
    %cst_137 = arith.constant dense<0.000000e+00> : vector<1x1xf32>
    %210 = tpu.matmul %203, %209, %cst_137 {dimension_numbers = #tpu.dot_dimension_numbers<[1], [0], [0], [1], [0, 0, 1, 1], [], []>} : vector<1x32xf32>, vector<32x1xf32>, vector<1x1xf32> -> vector<1x1xf32>
    %211 = arith.addf %210, %204 : vector<1x1xf32>
    %212 = tpu.concatenate %206, %208, %211 in 1 : vector<1x16xf32>, vector<1x16xf32>, vector<1x1xf32> -> vector<1x33xf32>
    %cst_138 = arith.constant dense<0.000000e+00> : vector<1x256xf32>
    %213 = tpu.matmul %197, %193, %cst_138 {dimension_numbers = #tpu.dot_dimension_numbers<[1], [0], [0], [1], [0, 0, 1, 1], [], []>} : vector<1x32xf32>, vector<32x256xf32>, vector<1x256xf32> -> vector<1x256xf32>
    %c0_139 = arith.constant 0 : index
    %c0_140 = arith.constant 0 : index
    %214 = vector.load %arg3[%c0_139, %c0_140] : memref<33x256xf32, #tpu.memory_space<vmem>>, vector<33x256xf32>
    %cst_141 = arith.constant dense<0.000000e+00> : vector<1x256xf32>
    %215 = tpu.matmul %212, %214, %cst_141 {dimension_numbers = #tpu.dot_dimension_numbers<[1], [0], [0], [1], [0, 0, 1, 1], [], []>} : vector<1x33xf32>, vector<33x256xf32>, vector<1x256xf32> -> vector<1x256xf32>
    %216 = arith.addf %213, %215 : vector<1x256xf32>
    %c0_142 = arith.constant 0 : index
    %c0_143 = arith.constant 0 : index
    %c0_144 = arith.constant 0 : index
    %217 = vector.load %arg6[%c0_142, %c0_143, %c0_144] : memref<1x1x256xf32, #tpu.memory_space<vmem>>, vector<1x1x256xf32>
    %218 = vector.shape_cast %217 : vector<1x1x256xf32> to vector<1x256xf32>
    %219 = vector.shape_cast %216 : vector<1x256xf32> to vector<1x1x256xf32>
    tpu.vector_store %arg6[%c0_142, %c0_143, %c0_144], %219 {strides = array<i32>} : memref<1x1x256xf32, #tpu.memory_space<vmem>>, vector<1x1x256xf32>,
    return
  }
  func.func @transform_0(%arg0: i32) -> (i32, i32, i32) {
    %c0_i32 = arith.constant 0 : i32
    %c0_i32_0 = arith.constant 0 : i32
    %c0_i32_1 = arith.constant 0 : i32
    return %arg0, %c0_i32, %c0_i32_0 : i32, i32, i32
  }
  func.func @transform_1(%arg0: i32) -> (i32, i32) {
    %c0_i32 = arith.constant 0 : i32
    %c0_i32_0 = arith.constant 0 : i32
    %c0_i32_1 = arith.constant 0 : i32
    return %c0_i32, %c0_i32_0 : i32, i32
  }
  func.func @transform_2(%arg0: i32) -> (i32, i32) {
    %c0_i32 = arith.constant 0 : i32
    %c0_i32_0 = arith.constant 0 : i32
    %c0_i32_1 = arith.constant 0 : i32
    return %c0_i32, %c0_i32_0 : i32, i32
  }
  func.func @transform_3(%arg0: i32) -> (i32, i32, i32) {
    %c0_i32 = arith.constant 0 : i32
    %c0_i32_0 = arith.constant 0 : i32
    %c0_i32_1 = arith.constant 0 : i32
    %c0_i32_2 = arith.constant 0 : i32
    return %c0_i32, %c0_i32_0, %c0_i32_1 : i32, i32, i32
  }
  func.func @transform_4(%arg0: i32) -> (i32, i32) {
    %c0_i32 = arith.constant 0 : i32
    %c0_i32_0 = arith.constant 0 : i32
    %c0_i32_1 = arith.constant 0 : i32
    return %c0_i32, %c0_i32_0 : i32, i32
  }
  func.func @transform_5(%arg0: i32) -> (i32, i32, i32) {
    %c0_i32 = arith.constant 0 : i32
    %c0_i32_0 = arith.constant 0 : i32
    %c0_i32_1 = arith.constant 0 : i32
    return %arg0, %c0_i32, %c0_i32_0 : i32, i32, i32
  }
}

</mosaic_0001>

<llo_original>
// kernel: sparse_matrix_entity_predictor_forward.1
$region0: #{sparse_matrix_entity_predictor_forward.1}
  #allocation0 [shape = 'u32[]', space=smem, size = 0x4, offset = 0x4, fixed_abs, tag = 'smem constant byte address 0x4 - core index']
  #allocation1 [shape = 'u32[144,128]{1,0:T(1,128)}', space=vmem, size = 0x12000, scoped, tag = 'internal scratch']
  %s0 = inlined_call_operand.vmem [shape: f32[2,4,256], index: 0, kind: input, shape index: {}]
  %s1 = inlined_call_operand.hbm [shape: f32[256,33], index: 1, kind: input, shape index: {}]
  %s2 = inlined_call_operand.vmem [shape: f32[33,256], index: 2, kind: input, shape index: {}]
  %s3 = inlined_call_operand.hbm [shape: f32[20,64,64], index: 3, kind: input, shape index: {}]
  %s4 = inlined_call_operand.vmem [shape: f32[64,15], index: 4, kind: input, shape index: {}]
  %s5 = inlined_call_operand.vmem [shape: f32[2,1,256], index: 5, kind: output, shape index: {}]
  %s6 = sld [smem:[#allocation0]]
  $region61: #{sparse_matrix_entity_predictor_forward.1} parent=0
    _
  %s8 = ssub.s32 1, %s6
  %s9 = scalar_select 0, %s8, %s6
  $region1: #{sparse_matrix_entity_predictor_forward.1} parent=0
    #allocation2 [shape = 'u8[131072]{0}', space=vmem, size = 0x20000, scoped, tag = 'input window, operand 1, single buffered']
    #allocation3 [shape = 's32[2]{0}', space=sflag, size = 0x8, scoped, tag = 'scoped memory for sparse_matrix_entity_predictor_forward.1']
    #allocation4 [shape = 'u8[655360]{0}', space=vmem, size = 0xa0000, scoped, tag = 'input window, operand 3, single buffered']
    #allocation5 [shape = 's32[1]{0}', space=sflag, size = 0x4, scoped, tag = 'scoped memory for sparse_matrix_entity_predictor_forward.1']
    %10 = vsyncpa [#allocation3], 0
    %11 = vsyncpa [#allocation5], 0
    loop: start=0, step=1, limit=4
    $region2: #{sparse_matrix_entity_predictor_forward.1} parent=1 // loop_pre_header
      _
    $region3: #{sparse_matrix_entity_predictor_forward.1} parent=1 // loop_header
      %s13 = sphi 0, %s17
      %p14 = scmp.ge.s32.totalorder %s13, 4
      %s23 = sphi 0, %s25
      %s26 = sphi 0, %s23
      %s27 = sphi 0, %s26
      %s43 = sphi 0, %s27
      %s47 = sphi 0, %s47
      %s49 = sphi 0, %s47
      %s50 = sphi 0, %s49
      %s64 = sphi 0, %s50
      %s68 = sphi 0, %s68
      %s70 = sphi 0, %s68
      %s71 = sphi 0, %s70
      %s85 = sphi 0, %s71
      %s89 = sphi 0, %s89
      %s91 = sphi 0, %s89
      %s92 = sphi 0, %s91
      %s106 = sphi 0, %s92
      %s110 = sphi 0, %s110
      %s112 = sphi 0, %s110
      %s113 = sphi 0, %s112
      %s127 = sphi 0, %s113
      %s133 = sphi 0, %s135
      %s136 = sphi 0, %s133
      %s137 = sphi 0, %s136
      %s153 = sphi 0, %s137
    $region4: #{sparse_matrix_entity_predictor_forward.1} parent=1 // loop_header_branch
      %16 = sbr.rel (%p14) target = $region8
    $region5: #{sparse_matrix_entity_predictor_forward.1} parent=1 // loop_body
      %s18 = ssub.s32 %s13, 1
      %s19 = ssub.s32 %s13, 2
      %s20 = sadd.s32 %s13, 1
      %s21 = ssub.s32 %s13, %s20
      %p22 = scmp.eq.s32.totalorder %s21, 0
      %s24 = sadd.s32 %s23, 1
      %s25 = scalar_select %p22, %s23, %s24
      %p28 = pneg %p22
      %p29 = scmp.eq.s32.totalorder %s13, 1
      %p30 = por %p28, %p29
      %p31 = scmp.ne.s32.totalorder %s23, %s26
      %p32 = scmp.eq.s32.totalorder %s13, 0
      %p33 = por %p31, %p32
      %p34 = scmp.ne.s32.totalorder %s23, %s26
      %p35 = scmp.eq.s32.totalorder %s18, 1
      %p36 = por %p34, %p35
      %p37 = scmp.ne.s32.totalorder %s26, %s27
      %p38 = scmp.eq.s32.totalorder %s18, 0
      %p39 = por %p37, %p38
      %p40 = scmp.ne.s32.totalorder %s26, %s27
      %p41 = scmp.eq.s32.totalorder %s19, 1
      %p42 = por %p40, %p41
      %p44 = scmp.ne.s32.totalorder %s27, %s43
      %p45 = scmp.eq.s32.totalorder %s19, 0
      %p46 = por %p44, %p45
      %s48 = sadd.s32 %s47, 1
      %p51 = scmp.eq.s32.totalorder %s13, 1
      %p52 = scmp.ne.s32.totalorder %s47, %s49
      %p53 = scmp.eq.s32.totalorder %s13, 0
      %p54 = por %p52, %p53
      %p55 = scmp.ne.s32.totalorder %s47, %s49
      %p56 = scmp.eq.s32.totalorder %s18, 1
      %p57 = por %p55, %p56
      %p58 = scmp.ne.s32.totalorder %s49, %s50
      %p59 = scmp.eq.s32.totalorder %s18, 0
      %p60 = por %p58, %p59
      %p61 = scmp.ne.s32.totalorder %s49, %s50
      %p62 = scmp.eq.s32.totalorder %s19, 1
      %p63 = por %p61, %p62
      %p65 = scmp.ne.s32.totalorder %s50, %s64
      %p66 = scmp.eq.s32.totalorder %s19, 0
      %p67 = por %p65, %p66
      %s69 = sadd.s32 %s68, 1
      %p72 = scmp.eq.s32.totalorder %s13, 1
      %p73 = scmp.ne.s32.totalorder %s68, %s70
      %p74 = scmp.eq.s32.totalorder %s13, 0
      %p75 = por %p73, %p74
      %p76 = scmp.ne.s32.totalorder %s68, %s70
      %p77 = scmp.eq.s32.totalorder %s18, 1
      %p78 = por %p76, %p77
      %p79 = scmp.ne.s32.totalorder %s70, %s71
      %p80 = scmp.eq.s32.totalorder %s18, 0
      %p81 = por %p79, %p80
      %p82 = scmp.ne.s32.totalorder %s70, %s71
      %p83 = scmp.eq.s32.totalorder %s19, 1
      %p84 = por %p82, %p83
      %p86 = scmp.ne.s32.totalorder %s71, %s85
      %p87 = scmp.eq.s32.totalorder %s19, 0
      %p88 = por %p86, %p87
      %s90 = sadd.s32 %s89, 1
      %p93 = scmp.eq.s32.totalorder %s13, 1
      %p94 = scmp.ne.s32.totalorder %s89, %s91
      %p95 = scmp.eq.s32.totalorder %s13, 0
      %p96 = por %p94, %p95
      %p97 = scmp.ne.s32.totalorder %s89, %s91
      %p98 = scmp.eq.s32.totalorder %s18, 1
      %p99 = por %p97, %p98
      %p100 = scmp.ne.s32.totalorder %s91, %s92
      %p101 = scmp.eq.s32.totalorder %s18, 0
      %p102 = por %p100, %p101
      %p103 = scmp.ne.s32.totalorder %s91, %s92
      %p104 = scmp.eq.s32.totalorder %s19, 1
      %p105 = por %p103, %p104
      %p107 = scmp.ne.s32.totalorder %s92, %s106
      %p108 = scmp.eq.s32.totalorder %s19, 0
      %p109 = por %p107, %p108
      %s111 = sadd.s32 %s110, 1
      %p114 = scmp.eq.s32.totalorder %s13, 1
      %p115 = scmp.ne.s32.totalorder %s110, %s112
      %p116 = scmp.eq.s32.totalorder %s13, 0
      %p117 = por %p115, %p116
      %p118 = scmp.ne.s32.totalorder %s110, %s112
      %p119 = scmp.eq.s32.totalorder %s18, 1
      %p120 = por %p118, %p119
      %p121 = scmp.ne.s32.totalorder %s112, %s113
      %p122 = scmp.eq.s32.totalorder %s18, 0
      %p123 = por %p121, %p122
      %p124 = scmp.ne.s32.totalorder %s112, %s113
      %p125 = scmp.eq.s32.totalorder %s19, 1
      %p126 = por %p124, %p125
      %p128 = scmp.ne.s32.totalorder %s113, %s127
      %p129 = scmp.eq.s32.totalorder %s19, 0
      %p130 = por %p128, %p129
      %s131 = ssub.s32 %s13, %s20
      %p132 = scmp.eq.s32.totalorder %s131, 0
      %s134 = sadd.s32 %s133, 1
      %s135 = scalar_select %p132, %s133, %s134
      %p138 = pneg %p132
      %p139 = scmp.eq.s32.totalorder %s13, 1
      %p140 = por %p138, %p139
      %p141 = scmp.ne.s32.totalorder %s133, %s136
      %p142 = scmp.eq.s32.totalorder %s13, 0
      %p143 = por %p141, %p142
      %p144 = scmp.ne.s32.totalorder %s133, %s136
      %p145 = scmp.eq.s32.totalorder %s18, 1
      %p146 = por %p144, %p145
      %p147 = scmp.ne.s32.totalorder %s136, %s137
      %p148 = scmp.eq.s32.totalorder %s18, 0
      %p149 = por %p147, %p148
      %p150 = scmp.ne.s32.totalorder %s136, %s137
      %p151 = scmp.eq.s32.totalorder %s19, 1
      %p152 = por %p150, %p151
      %p154 = scmp.ne.s32.totalorder %s137, %s153
      %p155 = scmp.eq.s32.totalorder %s19, 0
      %p156 = por %p154, %p155
      %p157 = scmp.le.s32.totalorder 1, %s13
      %p158 = scmp.lt.s32.totalorder %s13, 3
      %p159 = pnand %p157, %p158
      %p160 = pneg %p159
      // Predicated region
      $region9: #{sparse_matrix_entity_predictor_forward.1} parent=5 // pred_check
        _
      $region10: #{sparse_matrix_entity_predictor_forward.1} parent=5 // pred_check_branch
        %162 = sbr.rel (%p159) target = $region12
      $region11: #{sparse_matrix_entity_predictor_forward.1} parent=5 // pred_region
        %s163 = ssub.s32 %s13, 1
        // Predicated region
        $region13: #{sparse_matrix_entity_predictor_forward.1} parent=11 // pred_check
          %p164 = pneg %p60
        $region14: #{sparse_matrix_entity_predictor_forward.1} parent=11 // pred_check_branch
          %166 = sbr.rel (%p164) target = $region16
        $region15: #{sparse_matrix_entity_predictor_forward.1} parent=11 // pred_region
          %s168 = ssub.s32 4096, 4096
          %169 = vsyncadd [#allocation3], %s168
          %s170 = sshll.u32 [#allocation2], 4
          %s171 = int_to_ptr.vmem [resolvable:$true] %s170
          %176 = dma.hbm_to_vmem [thread:$0]  %s1, 4096, %s171, [#allocation3], 128, 128, 8
        $region16: #{sparse_matrix_entity_predictor_forward.1} parent=11 // pred_fallthru
          _
        // Predicated region
        $region17: #{sparse_matrix_entity_predictor_forward.1} parent=11 // pred_check
          %p177 = pneg %p81
        $region18: #{sparse_matrix_entity_predictor_forward.1} parent=11 // pred_check_branch
          %179 = sbr.rel (%p177) target = $region20
        $region19: #{sparse_matrix_entity_predictor_forward.1} parent=11 // pred_region
          _
        $region20: #{sparse_matrix_entity_predictor_forward.1} parent=11 // pred_fallthru
          _
        // Predicated region
        $region21: #{sparse_matrix_entity_predictor_forward.1} parent=11 // pred_check
          %p180 = pneg %p102
        $region22: #{sparse_matrix_entity_predictor_forward.1} parent=11 // pred_check_branch
          %182 = sbr.rel (%p180) target = $region24
        $region23: #{sparse_matrix_entity_predictor_forward.1} parent=11 // pred_region
          %s184 = ssub.s32 20480, 20480
          %185 = vsyncadd [#allocation5], %s184
          %s186 = sshll.u32 [#allocation4], 4
          %s187 = int_to_ptr.vmem [resolvable:$true] %s186
          %192 = dma.hbm_to_vmem [thread:$0]  %s3, 20480, %s187, [#allocation5], 128, 128, 8
        $region24: #{sparse_matrix_entity_predictor_forward.1} parent=11 // pred_fallthru
          _
        // Predicated region
        $region25: #{sparse_matrix_entity_predictor_forward.1} parent=11 // pred_check
          %p193 = pneg %p123
        $region26: #{sparse_matrix_entity_predictor_forward.1} parent=11 // pred_check_branch
          %195 = sbr.rel (%p193) target = $region28
        $region27: #{sparse_matrix_entity_predictor_forward.1} parent=11 // pred_region
          _
        $region28: #{sparse_matrix_entity_predictor_forward.1} parent=11 // pred_fallthru
          _
      $region12: #{sparse_matrix_entity_predictor_forward.1} parent=5 // pred_fallthru
        _
      %p196 = scmp.lt.s32.totalorder %s13, 2
      // Predicated region
      $region29: #{sparse_matrix_entity_predictor_forward.1} parent=5 // pred_check
        %p197 = pneg %p196
      $region30: #{sparse_matrix_entity_predictor_forward.1} parent=5 // pred_check_branch
        %199 = sbr.rel (%p197) target = $region32
      $region31: #{sparse_matrix_entity_predictor_forward.1} parent=5 // pred_region
        // Predicated region
        $region33: #{sparse_matrix_entity_predictor_forward.1} parent=31 // pred_check
          %p200 = pneg %p33
        $region34: #{sparse_matrix_entity_predictor_forward.1} parent=31 // pred_check_branch
          %202 = sbr.rel (%p200) target = $region36
        $region35: #{sparse_matrix_entity_predictor_forward.1} parent=31 // pred_region
          %p203 = scmp.lt.s32.totalorder %s13, 1
          %s204 = scalar_select %p203, %s13, 1
          %s205 = smul.addr %s204, 2
          %s206 = smul.addr %s205, 4
          %s207 = scalar_lea.vmem %s0, %s206
        $region36: #{sparse_matrix_entity_predictor_forward.1} parent=31 // pred_fallthru
          _
      $region32: #{sparse_matrix_entity_predictor_forward.1} parent=5 // pred_fallthru
        _
      %p208 = scmp.le.s32.totalorder 1, %s13
      %p209 = scmp.lt.s32.totalorder %s13, 3
      %p210 = pnand %p208, %p209
      %p211 = pneg %p210
      // Predicated region
      $region37: #{sparse_matrix_entity_predictor_forward.1} parent=5 // pred_check
        _
      $region38: #{sparse_matrix_entity_predictor_forward.1} parent=5 // pred_check_branch
        %213 = sbr.rel (%p210) target = $region40
      $region39: #{sparse_matrix_entity_predictor_forward.1} parent=5 // pred_region
        %s214 = ssub.s32 %s13, 1
        // Predicated region
        $region41: #{sparse_matrix_entity_predictor_forward.1} parent=39 // pred_check
          %p215 = pneg %p60
        $region42: #{sparse_matrix_entity_predictor_forward.1} parent=39 // pred_check_branch
          %217 = sbr.rel (%p215) target = $region44
        $region43: #{sparse_matrix_entity_predictor_forward.1} parent=39 // pred_region
          %218 = dma.done [#allocation3], 4096
        $region44: #{sparse_matrix_entity_predictor_forward.1} parent=39 // pred_fallthru
          _
        // Predicated region
        $region45: #{sparse_matrix_entity_predictor_forward.1} parent=39 // pred_check
          %p219 = pneg %p102
        $region46: #{sparse_matrix_entity_predictor_forward.1} parent=39 // pred_check_branch
          %221 = sbr.rel (%p219) target = $region48
        $region47: #{sparse_matrix_entity_predictor_forward.1} parent=39 // pred_region
          %222 = dma.done [#allocation5], 20480
        $region48: #{sparse_matrix_entity_predictor_forward.1} parent=39 // pred_fallthru
          _
        %p223 = scmp.lt.s32.totalorder %s18, 1
        %s224 = scalar_select %p223, %s18, 1
        %s225 = smul.addr %s224, 2
        %s226 = smul.addr %s225, 4
        %s227 = scalar_lea.vmem %s0, %s226
        %p228 = pneg %p39
        %p229 = pneg %p36
        %p230 = pneg %p60
        %p231 = pneg %p57
        %p232 = pneg %p81
        %p233 = pneg %p78
        %p234 = pneg %p102
        %p235 = pneg %p99
        %p236 = pneg %p123
        %p237 = pneg %p120
        %p238 = pneg %p149
        %p239 = pneg %p146
        %p240 = scmp.lt.s32.totalorder %s18, 1
        %s241 = scalar_select %p240, %s18, 1
        %s242 = smul.addr %s241, 2
        %s243 = scalar_lea.vmem %s5, %s242
        %p244 = scmp.lt.s32.totalorder %s18, 1
        %s245 = scalar_select %p244, %s18, 1
        %s246 = smul.addr %s245, 2
        %s247 = smul.addr %s246, 4
        %s248 = scalar_lea.vmem %s0, %s247
        %p249 = scmp.lt.s32.totalorder %s18, 1
        %s250 = scalar_select %p249, %s18, 1
        %s251 = smul.addr %s250, 2
        %s252 = scalar_lea.vmem %s5, %s251
        %v253 = vld [vmem:[%s248] sm:$0xff]
        %v254 = vld [vmem:[#allocation2] sm:$0xff]
        %v255 = vld [vmem:[#allocation2 + $0x8] sm:$0xff]
        %v256 = vld [vmem:[#allocation2 + $0x10] sm:$0xff]
        %v257 = vld [vmem:[#allocation2 + $0x18] sm:$0xff]
        %v258 = vld [vmem:[#allocation2 + $0x20] sm:$0xff]
        %v259 = vld [vmem:[#allocation2 + $0x28] sm:$0xff]
        %v260 = vld [vmem:[#allocation2 + $0x30] sm:$0xff]
        %v261 = vld [vmem:[#allocation2 + $0x38] sm:$0xff]
        %v262 = vld [vmem:[#allocation2 + $0x40] sm:$0xff]
        %v263 = vld [vmem:[#allocation2 + $0x48] sm:$0xff]
        %v264 = vld [vmem:[#allocation2 + $0x50] sm:$0xff]
        %v265 = vld [vmem:[#allocation2 + $0x58] sm:$0xff]
        %v266 = vld [vmem:[#allocation2 + $0x60] sm:$0xff]
        %v267 = vld [vmem:[#allocation2 + $0x68] sm:$0xff]
        %v268 = vld [vmem:[#allocation2 + $0x70] sm:$0xff]
        %v269 = vld [vmem:[#allocation2 + $0x78] sm:$0xff]
        %v270 = vld [vmem:[#allocation2 + $0x80] sm:$0xff]
        %v271 = vld [vmem:[#allocation2 + $0x88] sm:$0xff]
        %v272 = vld [vmem:[#allocation2 + $0x90] sm:$0xff]
        %v273 = vld [vmem:[#allocation2 + $0x98] sm:$0xff]
        %v274 = vld [vmem:[#allocation2 + $0xa0] sm:$0xff]
        %v275 = vld [vmem:[#allocation2 + $0xa8] sm:$0xff]
        %v276 = vld [vmem:[#allocation2 + $0xb0] sm:$0xff]
        %v277 = vld [vmem:[#allocation2 + $0xb8] sm:$0xff]
        %v278 = vld [vmem:[#allocation2 + $0xc0] sm:$0xff]
        %v279 = vld [vmem:[#allocation2 + $0xc8] sm:$0xff]
        %v280 = vld [vmem:[#allocation2 + $0xd0] sm:$0xff]
        %v281 = vld [vmem:[#allocation2 + $0xd8] sm:$0xff]
        %v282 = vld [vmem:[#allocation2 + $0xe0] sm:$0xff]
        %v283 = vld [vmem:[#allocation2 + $0xe8] sm:$0xff]
        %v284 = vld [vmem:[#allocation2 + $0xf0] sm:$0xff]
        %v285 = vld [vmem:[#allocation2 + $0xf8] sm:$0xff]
        %v287 = vcombine.high %v253, %v253
        %289 = vmatprep.subr.mxu0 0.0
        %290 = vmatpush1.msra.mxu0 %v254
        %291 = vmatprep.subr.mxu0 0.0
        %292 = vmatpush1.msra.mxu0 %v255
        %293 = vmatprep.subr.mxu0 0.0
        %294 = vmatpush1.msra.mxu0 %v256
        %295 = vmatprep.subr.mxu0 0.0
        %296 = vmatpush1.msra.mxu0 %v257
        %297 = vmatprep.subr.mxu0 0.0
        %298 = vmatpush1.msra.mxu0 %v258
        %299 = vmatprep.subr.mxu0 0.0
        %300 = vmatpush1.msra.mxu0 %v259
        %301 = vmatprep.subr.mxu0 0.0
        %302 = vmatpush1.msra.mxu0 %v260
        %303 = vmatprep.subr.mxu0 0.0
        %304 = vmatpush1.msra.mxu0 %v261
        %305 = vmatprep.subr.mxu0 0.0
        %306 = vmatpush1.msra.mxu0 %v262
        %307 = vmatprep.subr.mxu0 0.0
        %308 = vmatpush1.msra.mxu0 %v263
        %309 = vmatprep.subr.mxu0 0.0
        %310 = vmatpush1.msra.mxu0 %v264
        %311 = vmatprep.subr.mxu0 0.0
        %312 = vmatpush1.msra.mxu0 %v265
        %313 = vmatprep.subr.mxu0 0.0
        %314 = vmatpush1.msra.mxu0 %v266
        %315 = vmatprep.subr.mxu0 0.0
        %316 = vmatpush1.msra.mxu0 %v267
        %317 = vmatprep.subr.mxu0 0.0
        %318 = vmatpush1.msra.mxu0 %v268
        %319 = vmatprep.subr.mxu0 0.0
        %320 = vmatpush1.msra.mxu0 %v269
        %321 = vmatprep.subr.mxu0 0.0
        %322 = vmatpush1.msra.mxu0 %v270
        %323 = vmatprep.subr.mxu0 0.0
        %324 = vmatpush1.msra.mxu0 %v271
        %325 = vmatprep.subr.mxu0 0.0
        %326 = vmatpush1.msra.mxu0 %v272
        %327 = vmatprep.subr.mxu0 0.0
        %328 = vmatpush1.msra.mxu0 %v273
        %329 = vmatprep.subr.mxu0 0.0
        %330 = vmatpush1.msra.mxu0 %v274
        %331 = vmatprep.subr.mxu0 0.0
        %332 = vmatpush1.msra.mxu0 %v275
        %333 = vmatprep.subr.mxu0 0.0
        %334 = vmatpush1.msra.mxu0 %v276
        %335 = vmatprep.subr.mxu0 0.0
        %336 = vmatpush1.msra.mxu0 %v277
        %337 = vmatprep.subr.mxu0 0.0
        %338 = vmatpush1.msra.mxu0 %v278
        %339 = vmatprep.subr.mxu0 0.0
        %340 = vmatpush1.msra.mxu0 %v279
        %341 = vmatprep.subr.mxu0 0.0
        %342 = vmatpush1.msra.mxu0 %v280
        %343 = vmatprep.subr.mxu0 0.0
        %344 = vmatpush1.msra.mxu0 %v281
        %345 = vmatprep.subr.mxu0 0.0
        %346 = vmatpush1.msra.mxu0 %v282
        %347 = vmatprep.subr.mxu0 0.0
        %348 = vmatpush1.msra.mxu0 %v283
        %349 = vmatprep.subr.mxu0 0.0
        %350 = vmatpush1.msra.mxu0 %v284
        %351 = vmatprep.subr.mxu0 0.0
        %352 = vmatpush1.msra.mxu0 %v285
        %353 = vmatprep.mubr.f32.mxu0 %v287
        %354 = vmatmul.mubr.f32.gmra.mrb[0].mxu0 %v253
        %v355 = vpop.f32.mrb[0].mxu0
        %v356 = vadd.f32 0.0, %v355
        %v357 = vpop.f32.mrb[0].mxu0
        %358 = vdwg.mxu0
        %v359 = vld [vmem:[#allocation4] sm:$0xff]
        %v360 = vld [vmem:[#allocation4 + $0x8] sm:$0xff]
        %v361 = vld [vmem:[#allocation4 + $0x10] sm:$0xff]
        %v362 = vld [vmem:[#allocation4 + $0x18] sm:$0xff]
        %s363 = scalar_lea.vmem [#allocation4], 64
        %v364 = vld [vmem:[%s363] sm:$0xff]
        %v365 = vld [vmem:[%s363 + $0x8] sm:$0xff]
        %v366 = vld [vmem:[%s363 + $0x10] sm:$0xff]
        %v367 = vld [vmem:[%s363 + $0x18] sm:$0xff]
        %s368 = scalar_lea.vmem [#allocation4], 128
        %v369 = vld [vmem:[%s368] sm:$0xff]
        %v370 = vld [vmem:[%s368 + $0x8] sm:$0xff]
        %v371 = vld [vmem:[%s368 + $0x10] sm:$0xff]
        %v372 = vld [vmem:[%s368 + $0x18] sm:$0xff]
        %s373 = scalar_lea.vmem [#allocation4], 192
        %v374 = vld [vmem:[%s373] sm:$0xff]
        %v375 = vld [vmem:[%s373 + $0x8] sm:$0xff]
        %v376 = vld [vmem:[%s373 + $0x10] sm:$0xff]
        %v377 = vld [vmem:[%s373 + $0x18] sm:$0xff]
        %v378 = vld [vmem:[%s4] sm:$0xff]
        %v379 = vld [vmem:[%s4 + $0x8] sm:$0xff]
        %v380 = vld [vmem:[%s4 + $0x10] sm:$0xff]
        %v381 = vld [vmem:[%s4 + $0x18] sm:$0xff]
        %vm382 = vcmask 31744
        %v384 = vsel %vm382, %v364, 0
        %v387 = vsel %vm382, %v365, 0
        %v390 = vsel %vm382, %v366, 0
        %v393 = vsel %vm382, %v367, 0
        %vm395 = vcmask 1043456
        %v397 = vsel %vm395, %v356, 0
        %399 = vmatprep.subr.mxu0 0.0
        %400 = vmatpush1.msra.mxu0 %v397
        %401 = vmatprep.subr.mxu0 0.0
        %402 = vmatpush1.msra.mxu0 0.0
        %403 = vmatprep.subr.mxu0 0.0
        %404 = vmatpush1.msra.mxu0 0.0
        %405 = vmatprep.subr.mxu0 0.0
        %406 = vmatpush1.msra.mxu0 0.0
        %407 = vmatprep.subr.mxu0 0.0
        %408 = vmatpush1.msra.mxu0 0.0
        %409 = vmatprep.subr.mxu0 0.0
        %410 = vmatpush1.msra.mxu0 0.0
        %411 = vmatprep.subr.mxu0 0.0
        %412 = vmatpush1.msra.mxu0 0.0
        %413 = vmatprep.subr.mxu0 0.0
        %414 = vmatpush1.msra.mxu0 0.0
        %415 = vmatprep.subr.mxu0 0.0
        %416 = vmatpush1.msra.mxu0 0.0
        %417 = vmatprep.subr.mxu0 0.0
        %418 = vmatpush1.msra.mxu0 0.0
        %419 = vmatprep.subr.mxu0 0.0
        %420 = vmatpush1.msra.mxu0 0.0
        %421 = vmatprep.subr.mxu0 0.0
        %422 = vmatpush1.msra.mxu0 0.0
        %423 = vmatprep.subr.mxu0 0.0
        %424 = vmatpush1.msra.mxu0 0.0
        %425 = vmatprep.subr.mxu0 0.0
        %426 = vmatpush1.msra.mxu0 0.0
        %427 = vmatprep.subr.mxu0 0.0
        %428 = vmatpush1.msra.mxu0 0.0
        %429 = vmatprep.subr.mxu0 0.0
        %430 = vmatpush1.msra.mxu0 0.0
        %431 = vmatprep.subr.mxu0 0.0
        %432 = vmatpush1.msra.mxu0 0.0
        %433 = vmatprep.subr.mxu0 0.0
        %434 = vmatpush1.msra.mxu0 0.0
        %435 = vmatprep.subr.mxu0 0.0
        %436 = vmatpush1.msra.mxu0 0.0
        %437 = vmatprep.subr.mxu0 0.0
        %438 = vmatpush1.msra.mxu0 0.0
        %439 = vmatprep.subr.mxu0 0.0
        %440 = vmatpush1.msra.mxu0 0.0
        %441 = vmatprep.subr.mxu0 0.0
        %442 = vmatpush1.msra.mxu0 0.0
        %443 = vmatprep.subr.mxu0 0.0
        %444 = vmatpush1.msra.mxu0 0.0
        %445 = vmatprep.subr.mxu0 0.0
        %446 = vmatpush1.msra.mxu0 0.0
        %447 = vmatprep.subr.mxu0 0.0
        %448 = vmatpush1.msra.mxu0 0.0
        %449 = vmatprep.subr.mxu0 0.0
        %450 = vmatpush1.msra.mxu0 0.0
        %451 = vmatprep.subr.mxu0 0.0
        %452 = vmatpush1.msra.mxu0 0.0
        %453 = vmatprep.subr.mxu0 0.0
        %454 = vmatpush1.msra.mxu0 0.0
        %455 = vmatprep.subr.mxu0 0.0
        %456 = vmatpush1.msra.mxu0 0.0
        %457 = vmatprep.subr.mxu0 0.0
        %458 = vmatpush1.msra.mxu0 0.0
        %459 = vmatprep.subr.mxu0 0.0
        %460 = vmatpush1.msra.mxu0 0.0
        %461 = vmatprep.subr.mxu0 0.0
        %462 = vmatpush1.msra.mxu0 0.0
        %463 = vmatprep.mubr.f32.mxu0 0.0
        %464 = vmatmul.mubr.f32.gmra.mrb[0].mxu0 %v384
        %v465 = vpop.f32.mrb[0].mxu0
        %v466 = vadd.f32 0.0, %v465
        %v467 = vpop.f32.mrb[0].mxu0
        %468 = vmatprep.mubr.f32.mxu0 0.0
        %469 = vmatmul.mubr.f32.gmra.mrb[0].mxu0 %v387
        %v470 = vpop.f32.mrb[0].mxu0
        %v471 = vadd.f32 0.0, %v470
        %v472 = vpop.f32.mrb[0].mxu0
        %473 = vmatprep.mubr.f32.mxu0 0.0
        %474 = vmatmul.mubr.f32.gmra.mrb[0].mxu0 %v390
        %v475 = vpop.f32.mrb[0].mxu0
        %v476 = vadd.f32 0.0, %v475
        %v477 = vpop.f32.mrb[0].mxu0
        %478 = vmatprep.mubr.f32.mxu0 0.0
        %479 = vmatmul.mubr.f32.gmra.mrb[0].mxu0 %v393
        %v480 = vpop.f32.mrb[0].mxu0
        %v481 = vadd.f32 0.0, %v480
        %v482 = vpop.f32.mrb[0].mxu0
        %483 = vdwg.mxu0
        %484 = vrot.lane.b32.xlu0 %v356, 112
        %v485 = vpop.permute.xlu0 %484
        %v487 = vsel %vm382, %v369, 0
        %v490 = vsel %vm382, %v370, 0
        %v493 = vsel %vm382, %v371, 0
        %v496 = vsel %vm382, %v372, 0
        %v498 = vsel %vm395, %v485, 0
        %500 = vmatprep.subr.mxu0 0.0
        %501 = vmatpush1.msra.mxu0 %v498
        %502 = vmatprep.subr.mxu0 0.0
        %503 = vmatpush1.msra.mxu0 0.0
        %504 = vmatprep.subr.mxu0 0.0
        %505 = vmatpush1.msra.mxu0 0.0
        %506 = vmatprep.subr.mxu0 0.0
        %507 = vmatpush1.msra.mxu0 0.0
        %508 = vmatprep.subr.mxu0 0.0
        %509 = vmatpush1.msra.mxu0 0.0
        %510 = vmatprep.subr.mxu0 0.0
        %511 = vmatpush1.msra.mxu0 0.0
        %512 = vmatprep.subr.mxu0 0.0
        %513 = vmatpush1.msra.mxu0 0.0
        %514 = vmatprep.subr.mxu0 0.0
        %515 = vmatpush1.msra.mxu0 0.0
        %516 = vmatprep.subr.mxu0 0.0
        %517 = vmatpush1.msra.mxu0 0.0
        %518 = vmatprep.subr.mxu0 0.0
        %519 = vmatpush1.msra.mxu0 0.0
        %520 = vmatprep.subr.mxu0 0.0
        %521 = vmatpush1.msra.mxu0 0.0
        %522 = vmatprep.subr.mxu0 0.0
        %523 = vmatpush1.msra.mxu0 0.0
        %524 = vmatprep.subr.mxu0 0.0
        %525 = vmatpush1.msra.mxu0 0.0
        %526 = vmatprep.subr.mxu0 0.0
        %527 = vmatpush1.msra.mxu0 0.0
        %528 = vmatprep.subr.mxu0 0.0
        %529 = vmatpush1.msra.mxu0 0.0
        %530 = vmatprep.subr.mxu0 0.0
        %531 = vmatpush1.msra.mxu0 0.0
        %532 = vmatprep.subr.mxu0 0.0
        %533 = vmatpush1.msra.mxu0 0.0
        %534 = vmatprep.subr.mxu0 0.0
        %535 = vmatpush1.msra.mxu0 0.0
        %536 = vmatprep.subr.mxu0 0.0
        %537 = vmatpush1.msra.mxu0 0.0
        %538 = vmatprep.subr.mxu0 0.0
        %539 = vmatpush1.msra.mxu0 0.0
        %540 = vmatprep.subr.mxu0 0.0
        %541 = vmatpush1.msra.mxu0 0.0
        %542 = vmatprep.subr.mxu0 0.0
        %543 = vmatpush1.msra.mxu0 0.0
        %544 = vmatprep.subr.mxu0 0.0
        %545 = vmatpush1.msra.mxu0 0.0
        %546 = vmatprep.subr.mxu0 0.0
        %547 = vmatpush1.msra.mxu0 0.0
        %548 = vmatprep.subr.mxu0 0.0
        %549 = vmatpush1.msra.mxu0 0.0
        %550 = vmatprep.subr.mxu0 0.0
        %551 = vmatpush1.msra.mxu0 0.0
        %552 = vmatprep.subr.mxu0 0.0
        %553 = vmatpush1.msra.mxu0 0.0
        %554 = vmatprep.subr.mxu0 0.0
        %555 = vmatpush1.msra.mxu0 0.0
        %556 = vmatprep.subr.mxu0 0.0
        %557 = vmatpush1.msra.mxu0 0.0
        %558 = vmatprep.subr.mxu0 0.0
        %559 = vmatpush1.msra.mxu0 0.0
        %560 = vmatprep.subr.mxu0 0.0
        %561 = vmatpush1.msra.mxu0 0.0
        %562 = vmatprep.subr.mxu0 0.0
        %563 = vmatpush1.msra.mxu0 0.0
        %564 = vmatprep.mubr.f32.mxu0 0.0
        %565 = vmatmul.mubr.f32.gmra.mrb[0].mxu0 %v487
        %v566 = vpop.f32.mrb[0].mxu0
        %v567 = vadd.f32 0.0, %v566
        %v568 = vpop.f32.mrb[0].mxu0
        %569 = vmatprep.mubr.f32.mxu0 0.0
        %570 = vmatmul.mubr.f32.gmra.mrb[0].mxu0 %v490
        %v571 = vpop.f32.mrb[0].mxu0
        %v572 = vadd.f32 0.0, %v571
        %v573 = vpop.f32.mrb[0].mxu0
        %574 = vmatprep.mubr.f32.mxu0 0.0
        %575 = vmatmul.mubr.f32.gmra.mrb[0].mxu0 %v493
        %v576 = vpop.f32.mrb[0].mxu0
        %v577 = vadd.f32 0.0, %v576
        %v578 = vpop.f32.mrb[0].mxu0
        %579 = vmatprep.mubr.f32.mxu0 0.0
        %580 = vmatmul.mubr.f32.gmra.mrb[0].mxu0 %v496
        %v581 = vpop.f32.mrb[0].mxu0
        %v582 = vadd.f32 0.0, %v581
        %v583 = vpop.f32.mrb[0].mxu0
        %584 = vdwg.mxu0
        %585 = vrot.lane.b32.xlu0 %v356, 96
        %v586 = vpop.permute.xlu0 %585
        %v588 = vsel %vm382, %v374, 0
        %v591 = vsel %vm382, %v375, 0
        %v594 = vsel %vm382, %v376, 0
        %v597 = vsel %vm382, %v377, 0
        %v599 = vsel %vm395, %v586, 0
        %601 = vmatprep.subr.mxu0 0.0
        %602 = vmatpush1.msra.mxu0 %v599
        %603 = vmatprep.subr.mxu0 0.0
        %604 = vmatpush1.msra.mxu0 0.0
        %605 = vmatprep.subr.mxu0 0.0
        %606 = vmatpush1.msra.mxu0 0.0
        %607 = vmatprep.subr.mxu0 0.0
        %608 = vmatpush1.msra.mxu0 0.0
        %609 = vmatprep.subr.mxu0 0.0
        %610 = vmatpush1.msra.mxu0 0.0
        %611 = vmatprep.subr.mxu0 0.0
        %612 = vmatpush1.msra.mxu0 0.0
        %613 = vmatprep.subr.mxu0 0.0
        %614 = vmatpush1.msra.mxu0 0.0
        %615 = vmatprep.subr.mxu0 0.0
        %616 = vmatpush1.msra.mxu0 0.0
        %617 = vmatprep.subr.mxu0 0.0
        %618 = vmatpush1.msra.mxu0 0.0
        %619 = vmatprep.subr.mxu0 0.0
        %620 = vmatpush1.msra.mxu0 0.0
        %621 = vmatprep.subr.mxu0 0.0
        %622 = vmatpush1.msra.mxu0 0.0
        %623 = vmatprep.subr.mxu0 0.0
        %624 = vmatpush1.msra.mxu0 0.0
        %625 = vmatprep.subr.mxu0 0.0
        %626 = vmatpush1.msra.mxu0 0.0
        %627 = vmatprep.subr.mxu0 0.0
        %628 = vmatpush1.msra.mxu0 0.0
        %629 = vmatprep.subr.mxu0 0.0
        %630 = vmatpush1.msra.mxu0 0.0
        %631 = vmatprep.subr.mxu0 0.0
        %632 = vmatpush1.msra.mxu0 0.0
        %633 = vmatprep.subr.mxu0 0.0
        %634 = vmatpush1.msra.mxu0 0.0
        %635 = vmatprep.subr.mxu0 0.0
        %636 = vmatpush1.msra.mxu0 0.0
        %637 = vmatprep.subr.mxu0 0.0
        %638 = vmatpush1.msra.mxu0 0.0
        %639 = vmatprep.subr.mxu0 0.0
        %640 = vmatpush1.msra.mxu0 0.0
        %641 = vmatprep.subr.mxu0 0.0
        %642 = vmatpush1.msra.mxu0 0.0
        %643 = vmatprep.subr.mxu0 0.0
        %644 = vmatpush1.msra.mxu0 0.0
        %645 = vmatprep.subr.mxu0 0.0
        %646 = vmatpush1.msra.mxu0 0.0
        %647 = vmatprep.subr.mxu0 0.0
        %648 = vmatpush1.msra.mxu0 0.0
        %649 = vmatprep.subr.mxu0 0.0
        %650 = vmatpush1.msra.mxu0 0.0
        %651 = vmatprep.subr.mxu0 0.0
        %652 = vmatpush1.msra.mxu0 0.0
        %653 = vmatprep.subr.mxu0 0.0
        %654 = vmatpush1.msra.mxu0 0.0
        %655 = vmatprep.subr.mxu0 0.0
        %656 = vmatpush1.msra.mxu0 0.0
        %657 = vmatprep.subr.mxu0 0.0
        %658 = vmatpush1.msra.mxu0 0.0
        %659 = vmatprep.subr.mxu0 0.0
        %660 = vmatpush1.msra.mxu0 0.0
        %661 = vmatprep.subr.mxu0 0.0
        %662 = vmatpush1.msra.mxu0 0.0
        %663 = vmatprep.subr.mxu0 0.0
        %664 = vmatpush1.msra.mxu0 0.0
        %665 = vmatprep.mubr.f32.mxu0 0.0
        %666 = vmatmul.mubr.f32.gmra.mrb[0].mxu0 %v588
        %v667 = vpop.f32.mrb[0].mxu0
        %v668 = vadd.f32 %v378, %v667
        %v669 = vpop.f32.mrb[0].mxu0
        %670 = vmatprep.mubr.f32.mxu0 0.0
        %671 = vmatmul.mubr.f32.gmra.mrb[0].mxu0 %v591
        %v672 = vpop.f32.mrb[0].mxu0
        %v673 = vadd.f32 %v379, %v672
        %v674 = vpop.f32.mrb[0].mxu0
        %675 = vmatprep.mubr.f32.mxu0 0.0
        %676 = vmatmul.mubr.f32.gmra.mrb[0].mxu0 %v594
        %v677 = vpop.f32.mrb[0].mxu0
        %v678 = vadd.f32 %v380, %v677
        %v679 = vpop.f32.mrb[0].mxu0
        %680 = vmatprep.mubr.f32.mxu0 0.0
        %681 = vmatmul.mubr.f32.gmra.mrb[0].mxu0 %v597
        %v682 = vpop.f32.mrb[0].mxu0
        %v683 = vadd.f32 %v381, %v682
        %v684 = vpop.f32.mrb[0].mxu0
        %685 = vdwg.mxu0
        %690 = vrot.lane.b32.xlu0 %v567, 16
        %v691 = vpop.permute.xlu0 %690
        %692 = vrot.lane.b32.xlu0 %v572, 16
        %v693 = vpop.permute.xlu0 %692
        %694 = vrot.lane.b32.xlu0 %v577, 16
        %v695 = vpop.permute.xlu0 %694
        %696 = vrot.lane.b32.xlu0 %v582, 16
        %v697 = vpop.permute.xlu0 %696
        %706 = vrot.lane.b32.xlu0 %v668, 32
        %v707 = vpop.permute.xlu0 %706
        %708 = vrot.lane.b32.xlu0 %v673, 32
        %v709 = vpop.permute.xlu0 %708
        %710 = vrot.lane.b32.xlu0 %v678, 32
        %v711 = vpop.permute.xlu0 %710
        %712 = vrot.lane.b32.xlu0 %v683, 32
        %v713 = vpop.permute.xlu0 %712
        %vm718 = vcmask 130048
        %v719 = vsel %vm718, %v466, %v691
        %v720 = vsel %vm718, %v471, %v693
        %v721 = vsel %vm718, %v476, %v695
        %v722 = vsel %vm718, %v481, %v697
        %vm723 = vcmask 261120
        %v724 = vsel %vm723, %v719, %v707
        %v725 = vsel %vm723, %v720, %v709
        %v726 = vsel %vm723, %v721, %v711
        %v727 = vsel %vm723, %v722, %v713
        %v728 = vld [vmem:[%s2] sm:$0xff]
        %v729 = vld [vmem:[%s2 + $0x8] sm:$0xff]
        %v730 = vld [vmem:[%s2 + $0x10] sm:$0xff]
        %v731 = vld [vmem:[%s2 + $0x18] sm:$0xff]
        %v732 = vld [vmem:[%s2 + $0x20] sm:$0xff]
        %v733 = vld [vmem:[%s2 + $0x28] sm:$0xff]
        %v734 = vld [vmem:[%s2 + $0x30] sm:$0xff]
        %v735 = vld [vmem:[%s2 + $0x38] sm:$0xff]
        %v736 = vld [vmem:[%s2 + $0x40] sm:$0x1]
        %v737 = vld [vmem:[%s2 + $0x48] sm:$0x1]
        %vm738 = vcmask 269312
        %v740 = vsel %vm738, %v724, 0
        %v743 = vsel %vm738, %v725, 0
        %v746 = vsel %vm738, %v726, 0
        %v749 = vsel %vm738, %v727, 0
        %vm751 = vcmask 1040384
        %v753 = vsel %vm751, %v736, 0
        %v756 = vsel %vm751, %v737, 0
        %758 = vmatprep.subr.mxu0 %v729
        %759 = vmatpush1.msra.mxu0 %v728
        %760 = vmatprep.subr.mxu0 %v731
        %761 = vmatpush1.msra.mxu0 %v730
        %762 = vmatprep.subr.mxu0 %v733
        %763 = vmatpush1.msra.mxu0 %v732
        %764 = vmatprep.subr.mxu0 %v735
        %765 = vmatpush1.msra.mxu0 %v734
        %766 = vmatprep.subr.mxu0 %v756
        %767 = vmatpush1.msra.mxu0 %v753
        %768 = vmatprep.subr.mxu0 0.0
        %769 = vmatpush1.msra.mxu0 0.0
        %770 = vmatprep.subr.mxu0 0.0
        %771 = vmatpush1.msra.mxu0 0.0
        %772 = vmatprep.subr.mxu0 0.0
        %773 = vmatpush1.msra.mxu0 0.0
        %774 = vmatprep.subr.mxu0 0.0
        %775 = vmatpush1.msra.mxu0 0.0
        %776 = vmatprep.subr.mxu0 0.0
        %777 = vmatpush1.msra.mxu0 0.0
        %778 = vmatprep.subr.mxu0 0.0
        %779 = vmatpush1.msra.mxu0 0.0
        %780 = vmatprep.subr.mxu0 0.0
        %781 = vmatpush1.msra.mxu0 0.0
        %782 = vmatprep.subr.mxu0 0.0
        %783 = vmatpush1.msra.mxu0 0.0
        %784 = vmatprep.subr.mxu0 0.0
        %785 = vmatpush1.msra.mxu0 0.0
        %786 = vmatprep.subr.mxu0 0.0
        %787 = vmatpush1.msra.mxu0 0.0
        %788 = vmatprep.subr.mxu0 0.0
        %789 = vmatpush1.msra.mxu0 0.0
        %790 = vmatprep.subr.mxu0 0.0
        %791 = vmatpush1.msra.mxu0 0.0
        %792 = vmatprep.subr.mxu0 0.0
        %793 = vmatpush1.msra.mxu0 0.0
        %794 = vmatprep.subr.mxu0 0.0
        %795 = vmatpush1.msra.mxu0 0.0
        %796 = vmatprep.subr.mxu0 0.0
        %797 = vmatpush1.msra.mxu0 0.0
        %798 = vmatprep.subr.mxu0 0.0
        %799 = vmatpush1.msra.mxu0 0.0
        %800 = vmatprep.subr.mxu0 0.0
        %801 = vmatpush1.msra.mxu0 0.0
        %802 = vmatprep.subr.mxu0 0.0
        %803 = vmatpush1.msra.mxu0 0.0
        %804 = vmatprep.subr.mxu0 0.0
        %805 = vmatpush1.msra.mxu0 0.0
        %806 = vmatprep.subr.mxu0 0.0
        %807 = vmatpush1.msra.mxu0 0.0
        %808 = vmatprep.subr.mxu0 0.0
        %809 = vmatpush1.msra.mxu0 0.0
        %810 = vmatprep.subr.mxu0 0.0
        %811 = vmatpush1.msra.mxu0 0.0
        %812 = vmatprep.subr.mxu0 0.0
        %813 = vmatpush1.msra.mxu0 0.0
        %814 = vmatprep.subr.mxu0 0.0
        %815 = vmatpush1.msra.mxu0 0.0
        %816 = vmatprep.subr.mxu0 0.0
        %817 = vmatpush1.msra.mxu0 0.0
        %818 = vmatprep.subr.mxu0 0.0
        %819 = vmatpush1.msra.mxu0 0.0
        %820 = vmatprep.subr.mxu0 0.0
        %821 = vmatpush1.msra.mxu0 0.0
        %822 = vmatprep.mubr.f32.mxu0 0.0
        %823 = vmatmul.mubr.f32.gmra.mrb[0].mxu0 %v740
        %v824 = vpop.f32.mrb[0].mxu0
        %v825 = vadd.f32 0.0, %v824
        %v826 = vpop.f32.mrb[0].mxu0
        %v827 = vadd.f32 0.0, %v826
        %828 = vmatprep.mubr.f32.mxu0 0.0
        %829 = vmatmul.mubr.f32.gmra.mrb[0].mxu0 %v743
        %v830 = vpop.f32.mrb[0].mxu0
        %v831 = vadd.f32 0.0, %v830
        %v832 = vpop.f32.mrb[0].mxu0
        %v833 = vadd.f32 0.0, %v832
        %834 = vmatprep.mubr.f32.mxu0 0.0
        %835 = vmatmul.mubr.f32.gmra.mrb[0].mxu0 %v746
        %v836 = vpop.f32.mrb[0].mxu0
        %v837 = vadd.f32 0.0, %v836
        %v838 = vpop.f32.mrb[0].mxu0
        %v839 = vadd.f32 0.0, %v838
        %840 = vmatprep.mubr.f32.mxu0 0.0
        %841 = vmatmul.mubr.f32.gmra.mrb[0].mxu0 %v749
        %v842 = vpop.f32.mrb[0].mxu0
        %v843 = vadd.f32 0.0, %v842
        %v844 = vpop.f32.mrb[0].mxu0
        %v845 = vadd.f32 0.0, %v844
        %846 = vdwg.mxu0
        %v848 = vsel %vm382, %v359, 0
        %v851 = vsel %vm382, %v360, 0
        %v854 = vsel %vm382, %v361, 0
        %v857 = vsel %vm382, %v362, 0
        %v859 = vsel %vm395, %v253, 0
        %v861 = vsel %vm395, %v287, 0
        %863 = vmatprep.subr.mxu0 %v861
        %864 = vmatpush1.msra.mxu0 %v859
        %865 = vmatprep.subr.mxu0 0.0
        %866 = vmatpush1.msra.mxu0 0.0
        %867 = vmatprep.subr.mxu0 0.0
        %868 = vmatpush1.msra.mxu0 0.0
        %869 = vmatprep.subr.mxu0 0.0
        %870 = vmatpush1.msra.mxu0 0.0
        %871 = vmatprep.subr.mxu0 0.0
        %872 = vmatpush1.msra.mxu0 0.0
        %873 = vmatprep.subr.mxu0 0.0
        %874 = vmatpush1.msra.mxu0 0.0
        %875 = vmatprep.subr.mxu0 0.0
        %876 = vmatpush1.msra.mxu0 0.0
        %877 = vmatprep.subr.mxu0 0.0
        %878 = vmatpush1.msra.mxu0 0.0
        %879 = vmatprep.subr.mxu0 0.0
        %880 = vmatpush1.msra.mxu0 0.0
        %881 = vmatprep.subr.mxu0 0.0
        %882 = vmatpush1.msra.mxu0 0.0
        %883 = vmatprep.subr.mxu0 0.0
        %884 = vmatpush1.msra.mxu0 0.0
        %885 = vmatprep.subr.mxu0 0.0
        %886 = vmatpush1.msra.mxu0 0.0
        %887 = vmatprep.subr.mxu0 0.0
        %888 = vmatpush1.msra.mxu0 0.0
        %889 = vmatprep.subr.mxu0 0.0
        %890 = vmatpush1.msra.mxu0 0.0
        %891 = vmatprep.subr.mxu0 0.0
        %892 = vmatpush1.msra.mxu0 0.0
        %893 = vmatprep.subr.mxu0 0.0
        %894 = vmatpush1.msra.mxu0 0.0
        %895 = vmatprep.subr.mxu0 0.0
        %896 = vmatpush1.msra.mxu0 0.0
        %897 = vmatprep.subr.mxu0 0.0
        %898 = vmatpush1.msra.mxu0 0.0
        %899 = vmatprep.subr.mxu0 0.0
        %900 = vmatpush1.msra.mxu0 0.0
        %901 = vmatprep.subr.mxu0 0.0
        %902 = vmatpush1.msra.mxu0 0.0
        %903 = vmatprep.subr.mxu0 0.0
        %904 = vmatpush1.msra.mxu0 0.0
        %905 = vmatprep.subr.mxu0 0.0
        %906 = vmatpush1.msra.mxu0 0.0
        %907 = vmatprep.subr.mxu0 0.0
        %908 = vmatpush1.msra.mxu0 0.0
        %909 = vmatprep.subr.mxu0 0.0
        %910 = vmatpush1.msra.mxu0 0.0
        %911 = vmatprep.subr.mxu0 0.0
        %912 = vmatpush1.msra.mxu0 0.0
        %913 = vmatprep.subr.mxu0 0.0
        %914 = vmatpush1.msra.mxu0 0.0
        %915 = vmatprep.subr.mxu0 0.0
        %916 = vmatpush1.msra.mxu0 0.0
        %917 = vmatprep.subr.mxu0 0.0
        %918 = vmatpush1.msra.mxu0 0.0
        %919 = vmatprep.subr.mxu0 0.0
        %920 = vmatpush1.msra.mxu0 0.0
        %921 = vmatprep.subr.mxu0 0.0
        %922 = vmatpush1.msra.mxu0 0.0
        %923 = vmatprep.subr.mxu0 0.0
        %924 = vmatpush1.msra.mxu0 0.0
        %925 = vmatprep.subr.mxu0 0.0
        %926 = vmatpush1.msra.mxu0 0.0
        %927 = vmatprep.mubr.f32.mxu0 0.0
        %928 = vmatmul.mubr.f32.gmra.mrb[0].mxu0 %v848
        %v929 = vpop.f32.mrb[0].mxu0
        %v930 = vadd.f32 %v825, %v929
        %v931 = vpop.f32.mrb[0].mxu0
        %v932 = vadd.f32 %v827, %v931
        %933 = vmatprep.mubr.f32.mxu0 0.0
        %934 = vmatmul.mubr.f32.gmra.mrb[0].mxu0 %v851
        %v935 = vpop.f32.mrb[0].mxu0
        %v936 = vadd.f32 %v831, %v935
        %v937 = vpop.f32.mrb[0].mxu0
        %v938 = vadd.f32 %v833, %v937
        %939 = vmatprep.mubr.f32.mxu0 0.0
        %940 = vmatmul.mubr.f32.gmra.mrb[0].mxu0 %v854
        %v941 = vpop.f32.mrb[0].mxu0
        %v942 = vadd.f32 %v837, %v941
        %v943 = vpop.f32.mrb[0].mxu0
        %v944 = vadd.f32 %v839, %v943
        %945 = vmatprep.mubr.f32.mxu0 0.0
        %946 = vmatmul.mubr.f32.gmra.mrb[0].mxu0 %v857
        %v947 = vpop.f32.mrb[0].mxu0
        %v948 = vadd.f32 %v843, %v947
        %v949 = vpop.f32.mrb[0].mxu0
        %v950 = vadd.f32 %v845, %v949
        %951 = vdwg.mxu0
        %v952 = vld [vmem:[%s4] sm:$0xff]
        %v953 = vld [vmem:[%s4 + $0x8] sm:$0xff]
        %v954 = vld [vmem:[%s4 + $0x10] sm:$0xff]
        %v955 = vld [vmem:[%s4 + $0x18] sm:$0xff]
        %v956 = vadd.f32 %v930, %v932
        %957 = vadd.xlane.f32.xlu0 %v956
        %v958 = vpop.xlane.xlu0 %957
        %v959 = vadd.f32 %v936, %v938
        %960 = vadd.xlane.f32.xlu0 %v959
        %v961 = vpop.xlane.xlu0 %960
        %v962 = vadd.f32 %v942, %v944
        %963 = vadd.xlane.f32.xlu0 %v962
        %v964 = vpop.xlane.xlu0 %963
        %v965 = vadd.f32 %v948, %v950
        %966 = vadd.xlane.f32.xlu0 %v965
        %v967 = vpop.xlane.xlu0 %966
        %v968 = vrcp.pop 256.0
        %v969 = vmul.f32 %v958, %v968
        %v970 = vmul.f32 %v961, %v968
        %v971 = vmul.f32 %v964, %v968
        %v972 = vmul.f32 %v967, %v968
        %v973 = vmul.f32 %v930, %v930
        %v974 = vmul.f32 %v932, %v932
        %v975 = vmul.f32 %v936, %v936
        %v976 = vmul.f32 %v938, %v938
        %v977 = vmul.f32 %v942, %v942
        %v978 = vmul.f32 %v944, %v944
        %v979 = vmul.f32 %v948, %v948
        %v980 = vmul.f32 %v950, %v950
        %v981 = vadd.f32 %v973, %v974
        %982 = vadd.xlane.f32.xlu0 %v981
        %v983 = vpop.xlane.xlu0 %982
        %v984 = vadd.f32 %v975, %v976
        %985 = vadd.xlane.f32.xlu0 %v984
        %v986 = vpop.xlane.xlu0 %985
        %v987 = vadd.f32 %v977, %v978
        %988 = vadd.xlane.f32.xlu0 %v987
        %v989 = vpop.xlane.xlu0 %988
        %v990 = vadd.f32 %v979, %v980
        %991 = vadd.xlane.f32.xlu0 %v990
        %v992 = vpop.xlane.xlu0 %991
        %v993 = vmul.f32 %v983, %v968
        %v994 = vmul.f32 %v986, %v968
        %v995 = vmul.f32 %v989, %v968
        %v996 = vmul.f32 %v992, %v968
        %v997 = vmul.f32 %v969, %v969
        %v998 = vmul.f32 %v970, %v970
        %v999 = vmul.f32 %v971, %v971
        %v1000 = vmul.f32 %v972, %v972
        %v1001 = vsub.f32 %v993, %v997
        %v1002 = vsub.f32 %v994, %v998
        %v1003 = vsub.f32 %v995, %v999
        %v1004 = vsub.f32 %v996, %v1000
        %v1005 = vadd.f32 %v1001, 1e-05
        %v1006 = vadd.f32 %v1002, 1e-05
        %v1007 = vadd.f32 %v1003, 1e-05
        %v1008 = vadd.f32 %v1004, 1e-05
        %v1009 = vrsqrt.pop %v1005
        %v1010 = vrsqrt.pop %v1006
        %v1011 = vrsqrt.pop %v1007
        %v1012 = vrsqrt.pop %v1008
        %v1013 = vmul.f32 %v952, %v1009
        %v1014 = vmul.f32 %v953, %v1010
        %v1015 = vmul.f32 %v954, %v1011
        %v1016 = vmul.f32 %v955, %v1012
        %v1017 = vmul.f32 %v969, %v1013
        %v1018 = vmul.f32 %v970, %v1014
        %v1019 = vmul.f32 %v971, %v1015
        %v1020 = vmul.f32 %v972, %v1016
        %1025 = vrot.lane.b32.xlu0 %v1017, 1
        %v1026 = vpop.permute.xlu0 %1025
        %1027 = vrot.lane.b32.xlu0 %v1018, 1
        %v1028 = vpop.permute.xlu0 %1027
        %1029 = vrot.lane.b32.xlu0 %v1019, 1
        %v1030 = vpop.permute.xlu0 %1029
        %1031 = vrot.lane.b32.xlu0 %v1020, 1
        %v1032 = vpop.permute.xlu0 %1031
        %v1037 = vsub.f32 %v952, %v1026
        %v1038 = vsub.f32 %v953, %v1028
        %v1039 = vsub.f32 %v954, %v1030
        %v1040 = vsub.f32 %v955, %v1032
        %1042 = vset.pattern.permute.xlu0 1
        %1043 = vperm.xlu0 %1042, %v1013
        %v1044 = vpop.permute.xlu0 %1043
        %1047 = vset.pattern.permute.xlu0 1
        %1048 = vperm.xlu0 %1047, %v1014
        %v1049 = vpop.permute.xlu0 %1048
        %1052 = vset.pattern.permute.xlu0 1
        %1053 = vperm.xlu0 %1052, %v1015
        %v1054 = vpop.permute.xlu0 %1053
        %1057 = vset.pattern.permute.xlu0 1
        %1058 = vperm.xlu0 %1057, %v1016
        %v1059 = vpop.permute.xlu0 %1058
        %v1061 = vmul.f32 %v930, %v1044
        %v1062 = vmul.f32 %v932, %v1044
        %v1063 = vmul.f32 %v936, %v1049
        %v1064 = vmul.f32 %v938, %v1049
        %v1065 = vmul.f32 %v942, %v1054
        %v1066 = vmul.f32 %v944, %v1054
        %v1067 = vmul.f32 %v948, %v1059
        %v1068 = vmul.f32 %v950, %v1059
        %1070 = vset.pattern.permute.xlu0 2
        %1071 = vperm.xlu0 %1070, %v1037
        %v1072 = vpop.permute.xlu0 %1071
        %1075 = vset.pattern.permute.xlu0 2
        %1076 = vperm.xlu0 %1075, %v1038
        %v1077 = vpop.permute.xlu0 %1076
        %1080 = vset.pattern.permute.xlu0 2
        %1081 = vperm.xlu0 %1080, %v1039
        %v1082 = vpop.permute.xlu0 %1081
        %1085 = vset.pattern.permute.xlu0 2
        %1086 = vperm.xlu0 %1085, %v1040
        %v1087 = vpop.permute.xlu0 %1086
        %v1089 = vadd.f32 %v1061, %v1072
        %v1090 = vadd.f32 %v1062, %v1072
        %v1091 = vadd.f32 %v1063, %v1077
        %v1092 = vadd.f32 %v1064, %v1077
        %v1093 = vadd.f32 %v1065, %v1082
        %v1094 = vadd.f32 %v1066, %v1082
        %v1095 = vadd.f32 %v1067, %v1087
        %v1096 = vadd.f32 %v1068, %v1087
        %v1097 = vmax.f32 %v1089, 0.0
        %v1098 = vmax.f32 %v1090, 0.0
        %v1099 = vmax.f32 %v1091, 0.0
        %v1100 = vmax.f32 %v1092, 0.0
        %v1101 = vmax.f32 %v1093, 0.0
        %v1102 = vmax.f32 %v1094, 0.0
        %v1103 = vmax.f32 %v1095, 0.0
        %v1104 = vmax.f32 %v1096, 0.0
        %1105 = vmatprep.subr.mxu0 0.0
        %1106 = vmatpush1.msra.mxu0 %v254
        %1107 = vmatprep.subr.mxu0 0.0
        %1108 = vmatpush1.msra.mxu0 %v255
        %1109 = vmatprep.subr.mxu0 0.0
        %1110 = vmatpush1.msra.mxu0 %v256
        %1111 = vmatprep.subr.mxu0 0.0
        %1112 = vmatpush1.msra.mxu0 %v257
        %1113 = vmatprep.subr.mxu0 0.0
        %1114 = vmatpush1.msra.mxu0 %v258
        %1115 = vmatprep.subr.mxu0 0.0
        %1116 = vmatpush1.msra.mxu0 %v259
        %1117 = vmatprep.subr.mxu0 0.0
        %1118 = vmatpush1.msra.mxu0 %v260
        %1119 = vmatprep.subr.mxu0 0.0
        %1120 = vmatpush1.msra.mxu0 %v261
        %1121 = vmatprep.subr.mxu0 0.0
        %1122 = vmatpush1.msra.mxu0 %v262
        %1123 = vmatprep.subr.mxu0 0.0
        %1124 = vmatpush1.msra.mxu0 %v263
        %1125 = vmatprep.subr.mxu0 0.0
        %1126 = vmatpush1.msra.mxu0 %v264
        %1127 = vmatprep.subr.mxu0 0.0
        %1128 = vmatpush1.msra.mxu0 %v265
        %1129 = vmatprep.subr.mxu0 0.0
        %1130 = vmatpush1.msra.mxu0 %v266
        %1131 = vmatprep.subr.mxu0 0.0
        %1132 = vmatpush1.msra.mxu0 %v267
        %1133 = vmatprep.subr.mxu0 0.0
        %1134 = vmatpush1.msra.mxu0 %v268
        %1135 = vmatprep.subr.mxu0 0.0
        %1136 = vmatpush1.msra.mxu0 %v269
        %1137 = vmatprep.subr.mxu0 0.0
        %1138 = vmatpush1.msra.mxu0 %v270
        %1139 = vmatprep.subr.mxu0 0.0
        %1140 = vmatpush1.msra.mxu0 %v271
        %1141 = vmatprep.subr.mxu0 0.0
        %1142 = vmatpush1.msra.mxu0 %v272
        %1143 = vmatprep.subr.mxu0 0.0
        %1144 = vmatpush1.msra.mxu0 %v273
        %1145 = vmatprep.subr.mxu0 0.0
        %1146 = vmatpush1.msra.mxu0 %v274
        %1147 = vmatprep.subr.mxu0 0.0
        %1148 = vmatpush1.msra.mxu0 %v275
        %1149 = vmatprep.subr.mxu0 0.0
        %1150 = vmatpush1.msra.mxu0 %v276
        %1151 = vmatprep.subr.mxu0 0.0
        %1152 = vmatpush1.msra.mxu0 %v277
        %1153 = vmatprep.subr.mxu0 0.0
        %1154 = vmatpush1.msra.mxu0 %v278
        %1155 = vmatprep.subr.mxu0 0.0
        %1156 = vmatpush1.msra.mxu0 %v279
        %1157 = vmatprep.subr.mxu0 0.0
        %1158 = vmatpush1.msra.mxu0 %v280
        %1159 = vmatprep.subr.mxu0 0.0
        %1160 = vmatpush1.msra.mxu0 %v281
        %1161 = vmatprep.subr.mxu0 0.0
        %1162 = vmatpush1.msra.mxu0 %v282
        %1163 = vmatprep.subr.mxu0 0.0
        %1164 = vmatpush1.msra.mxu0 %v283
        %1165 = vmatprep.subr.mxu0 0.0
        %1166 = vmatpush1.msra.mxu0 %v284
        %1167 = vmatprep.subr.mxu0 0.0
        %1168 = vmatpush1.msra.mxu0 %v285
        %1169 = vmatprep.mubr.f32.mxu0 %v1098
        %1170 = vmatmul.mubr.f32.gmra.mrb[0].mxu0 %v1097
        %v1171 = vpop.f32.mrb[0].mxu0
        %v1172 = vadd.f32 0.0, %v1171
        %v1173 = vpop.f32.mrb[0].mxu0
        %1174 = vmatprep.mubr.f32.mxu0 %v1100
        %1175 = vmatmul.mubr.f32.gmra.mrb[0].mxu0 %v1099
        %v1176 = vpop.f32.mrb[0].mxu0
        %v1177 = vadd.f32 0.0, %v1176
        %v1178 = vpop.f32.mrb[0].mxu0
        %1179 = vmatprep.mubr.f32.mxu0 %v1102
        %1180 = vmatmul.mubr.f32.gmra.mrb[0].mxu0 %v1101
        %v1181 = vpop.f32.mrb[0].mxu0
        %v1182 = vadd.f32 0.0, %v1181
        %v1183 = vpop.f32.mrb[0].mxu0
        %1184 = vmatprep.mubr.f32.mxu0 %v1104
        %1185 = vmatmul.mubr.f32.gmra.mrb[0].mxu0 %v1103
        %v1186 = vpop.f32.mrb[0].mxu0
        %v1187 = vadd.f32 0.0, %v1186
        %v1188 = vpop.f32.mrb[0].mxu0
        %1189 = vdwg.mxu0
        %s1190 = scalar_lea.vmem [#allocation4], 256
        %v1191 = vld [vmem:[%s1190] sm:$0xff]
        %v1192 = vld [vmem:[%s1190 + $0x8] sm:$0xff]
        %v1193 = vld [vmem:[%s1190 + $0x10] sm:$0xff]
        %v1194 = vld [vmem:[%s1190 + $0x18] sm:$0xff]
        %v1195 = vld [vmem:[%s1190 + $0x20] sm:$0xff]
        %v1196 = vld [vmem:[%s1190 + $0x28] sm:$0xff]
        %v1197 = vld [vmem:[%s1190 + $0x30] sm:$0xff]
        %v1198 = vld [vmem:[%s1190 + $0x38] sm:$0xff]
        %s1199 = scalar_lea.vmem [#allocation4], 320
        %v1200 = vld [vmem:[%s1199] sm:$0xff]
        %v1201 = vld [vmem:[%s1199 + $0x8] sm:$0xff]
        %v1202 = vld [vmem:[%s1199 + $0x10] sm:$0xff]
        %v1203 = vld [vmem:[%s1199 + $0x18] sm:$0xff]
        %v1204 = vld [vmem:[%s1199 + $0x20] sm:$0xff]
        %v1205 = vld [vmem:[%s1199 + $0x28] sm:$0xff]
        %v1206 = vld [vmem:[%s1199 + $0x30] sm:$0xff]
        %v1207 = vld [vmem:[%s1199 + $0x38] sm:$0xff]
        %s1208 = scalar_lea.vmem [#allocation4], 384
        %v1209 = vld [vmem:[%s1208] sm:$0xff]
        %v1210 = vld [vmem:[%s1208 + $0x8] sm:$0xff]
        %v1211 = vld [vmem:[%s1208 + $0x10] sm:$0xff]
        %v1212 = vld [vmem:[%s1208 + $0x18] sm:$0xff]
        %v1213 = vld [vmem:[%s1208 + $0x20] sm:$0xff]
        %v1214 = vld [vmem:[%s1208 + $0x28] sm:$0xff]
        %v1215 = vld [vmem:[%s1208 + $0x30] sm:$0xff]
        %v1216 = vld [vmem:[%s1208 + $0x38] sm:$0xff]
        %s1217 = scalar_lea.vmem [#allocation4], 448
        %v1218 = vld [vmem:[%s1217] sm:$0xff]
        %v1219 = vld [vmem:[%s1217 + $0x8] sm:$0xff]
        %v1220 = vld [vmem:[%s1217 + $0x10] sm:$0xff]
        %v1221 = vld [vmem:[%s1217 + $0x18] sm:$0xff]
        %v1222 = vld [vmem:[%s1217 + $0x20] sm:$0xff]
        %v1223 = vld [vmem:[%s1217 + $0x28] sm:$0xff]
        %v1224 = vld [vmem:[%s1217 + $0x30] sm:$0xff]
        %v1225 = vld [vmem:[%s1217 + $0x38] sm:$0xff]
        %v1226 = vld [vmem:[%s4] sm:$0xff]
        %v1227 = vld [vmem:[%s4 + $0x8] sm:$0xff]
        %v1228 = vld [vmem:[%s4 + $0x10] sm:$0xff]
        %v1229 = vld [vmem:[%s4 + $0x18] sm:$0xff]
        %v1230 = vld [vmem:[%s4 + $0x20] sm:$0xff]
        %v1231 = vld [vmem:[%s4 + $0x28] sm:$0xff]
        %v1232 = vld [vmem:[%s4 + $0x30] sm:$0xff]
        %v1233 = vld [vmem:[%s4 + $0x38] sm:$0xff]
        %v1235 = vsel %vm723, %v1200, 0
        %v1238 = vsel %vm723, %v1201, 0
        %v1241 = vsel %vm723, %v1202, 0
        %v1244 = vsel %vm723, %v1203, 0
        %v1247 = vsel %vm723, %v1204, 0
        %v1250 = vsel %vm723, %v1205, 0
        %v1253 = vsel %vm723, %v1206, 0
        %v1256 = vsel %vm723, %v1207, 0
        %1258 = vmatprep.subr.mxu0 0.0
        %1259 = vmatpush1.msra.mxu0 %v1172
        %1260 = vmatprep.subr.mxu0 0.0
        %1261 = vmatpush1.msra.mxu0 %v1177
        %1262 = vmatprep.subr.mxu0 0.0
        %1263 = vmatpush1.msra.mxu0 %v1182
        %1264 = vmatprep.subr.mxu0 0.0
        %1265 = vmatpush1.msra.mxu0 %v1187
        %1266 = vmatprep.subr.mxu0 0.0
        %1267 = vmatpush1.msra.mxu0 0.0
        %1268 = vmatprep.subr.mxu0 0.0
        %1269 = vmatpush1.msra.mxu0 0.0
        %1270 = vmatprep.subr.mxu0 0.0
        %1271 = vmatpush1.msra.mxu0 0.0
        %1272 = vmatprep.subr.mxu0 0.0
        %1273 = vmatpush1.msra.mxu0 0.0
        %1274 = vmatprep.subr.mxu0 0.0
        %1275 = vmatpush1.msra.mxu0 0.0
        %1276 = vmatprep.subr.mxu0 0.0
        %1277 = vmatpush1.msra.mxu0 0.0
        %1278 = vmatprep.subr.mxu0 0.0
        %1279 = vmatpush1.msra.mxu0 0.0
        %1280 = vmatprep.subr.mxu0 0.0
        %1281 = vmatpush1.msra.mxu0 0.0
        %1282 = vmatprep.subr.mxu0 0.0
        %1283 = vmatpush1.msra.mxu0 0.0
        %1284 = vmatprep.subr.mxu0 0.0
        %1285 = vmatpush1.msra.mxu0 0.0
        %1286 = vmatprep.subr.mxu0 0.0
        %1287 = vmatpush1.msra.mxu0 0.0
        %1288 = vmatprep.subr.mxu0 0.0
        %1289 = vmatpush1.msra.mxu0 0.0
        %1290 = vmatprep.subr.mxu0 0.0
        %1291 = vmatpush1.msra.mxu0 0.0
        %1292 = vmatprep.subr.mxu0 0.0
        %1293 = vmatpush1.msra.mxu0 0.0
        %1294 = vmatprep.subr.mxu0 0.0
        %1295 = vmatpush1.msra.mxu0 0.0
        %1296 = vmatprep.subr.mxu0 0.0
        %1297 = vmatpush1.msra.mxu0 0.0
        %1298 = vmatprep.subr.mxu0 0.0
        %1299 = vmatpush1.msra.mxu0 0.0
        %1300 = vmatprep.subr.mxu0 0.0
        %1301 = vmatpush1.msra.mxu0 0.0
        %1302 = vmatprep.subr.mxu0 0.0
        %1303 = vmatpush1.msra.mxu0 0.0
        %1304 = vmatprep.subr.mxu0 0.0
        %1305 = vmatpush1.msra.mxu0 0.0
        %1306 = vmatprep.subr.mxu0 0.0
        %1307 = vmatpush1.msra.mxu0 0.0
        %1308 = vmatprep.subr.mxu0 0.0
        %1309 = vmatpush1.msra.mxu0 0.0
        %1310 = vmatprep.subr.mxu0 0.0
        %1311 = vmatpush1.msra.mxu0 0.0
        %1312 = vmatprep.subr.mxu0 0.0
        %1313 = vmatpush1.msra.mxu0 0.0
        %1314 = vmatprep.subr.mxu0 0.0
        %1315 = vmatpush1.msra.mxu0 0.0
        %1316 = vmatprep.subr.mxu0 0.0
        %1317 = vmatpush1.msra.mxu0 0.0
        %1318 = vmatprep.subr.mxu0 0.0
        %1319 = vmatpush1.msra.mxu0 0.0
        %1320 = vmatprep.subr.mxu0 0.0
        %1321 = vmatpush1.msra.mxu0 0.0
        %1322 = vmatprep.mubr.f32.mxu0 0.0
        %1323 = vmatmul.mubr.f32.gmra.mrb[0].mxu0 %v1235
        %v1324 = vpop.f32.mrb[0].mxu0
        %v1325 = vadd.f32 0.0, %v1324
        %v1326 = vpop.f32.mrb[0].mxu0
        %1327 = vmatprep.mubr.f32.mxu0 0.0
        %1328 = vmatmul.mubr.f32.gmra.mrb[0].mxu0 %v1238
        %v1329 = vpop.f32.mrb[0].mxu0
        %v1330 = vadd.f32 0.0, %v1329
        %v1331 = vpop.f32.mrb[0].mxu0
        %1332 = vmatprep.mubr.f32.mxu0 0.0
        %1333 = vmatmul.mubr.f32.gmra.mrb[0].mxu0 %v1241
        %v1334 = vpop.f32.mrb[0].mxu0
        %v1335 = vadd.f32 0.0, %v1334
        %v1336 = vpop.f32.mrb[0].mxu0
        %1337 = vmatprep.mubr.f32.mxu0 0.0
        %1338 = vmatmul.mubr.f32.gmra.mrb[0].mxu0 %v1244
        %v1339 = vpop.f32.mrb[0].mxu0
        %v1340 = vadd.f32 0.0, %v1339
        %v1341 = vpop.f32.mrb[0].mxu0
        %1342 = vmatprep.mubr.f32.mxu0 0.0
        %1343 = vmatmul.mubr.f32.gmra.mrb[0].mxu0 %v1247
        %v1344 = vpop.f32.mrb[0].mxu0
        %v1345 = vadd.f32 0.0, %v1344
        %v1346 = vpop.f32.mrb[0].mxu0
        %1347 = vmatprep.mubr.f32.mxu0 0.0
        %1348 = vmatmul.mubr.f32.gmra.mrb[0].mxu0 %v1250
        %v1349 = vpop.f32.mrb[0].mxu0
        %v1350 = vadd.f32 0.0, %v1349
        %v1351 = vpop.f32.mrb[0].mxu0
        %1352 = vmatprep.mubr.f32.mxu0 0.0
        %1353 = vmatmul.mubr.f32.gmra.mrb[0].mxu0 %v1253
        %v1354 = vpop.f32.mrb[0].mxu0
        %v1355 = vadd.f32 0.0, %v1354
        %v1356 = vpop.f32.mrb[0].mxu0
        %1357 = vmatprep.mubr.f32.mxu0 0.0
        %1358 = vmatmul.mubr.f32.gmra.mrb[0].mxu0 %v1256
        %v1359 = vpop.f32.mrb[0].mxu0
        %v1360 = vadd.f32 0.0, %v1359
        %v1361 = vpop.f32.mrb[0].mxu0
        %1362 = vdwg.mxu0
        %1367 = vrot.lane.b32.xlu0 %v1172, 112
        %v1368 = vpop.permute.xlu0 %1367
        %1369 = vrot.lane.b32.xlu0 %v1177, 112
        %v1370 = vpop.permute.xlu0 %1369
        %1371 = vrot.lane.b32.xlu0 %v1182, 112
        %v1372 = vpop.permute.xlu0 %1371
        %1373 = vrot.lane.b32.xlu0 %v1187, 112
        %v1374 = vpop.permute.xlu0 %1373
        %v1380 = vsel %vm723, %v1209, 0
        %v1383 = vsel %vm723, %v1210, 0
        %v1386 = vsel %vm723, %v1211, 0
        %v1389 = vsel %vm723, %v1212, 0
        %v1392 = vsel %vm723, %v1213, 0
        %v1395 = vsel %vm723, %v1214, 0
        %v1398 = vsel %vm723, %v1215, 0
        %v1401 = vsel %vm723, %v1216, 0
        %1403 = vmatprep.subr.mxu0 0.0
        %1404 = vmatpush1.msra.mxu0 %v1368
        %1405 = vmatprep.subr.mxu0 0.0
        %1406 = vmatpush1.msra.mxu0 %v1370
        %1407 = vmatprep.subr.mxu0 0.0
        %1408 = vmatpush1.msra.mxu0 %v1372
        %1409 = vmatprep.subr.mxu0 0.0
        %1410 = vmatpush1.msra.mxu0 %v1374
        %1411 = vmatprep.subr.mxu0 0.0
        %1412 = vmatpush1.msra.mxu0 0.0
        %1413 = vmatprep.subr.mxu0 0.0
        %1414 = vmatpush1.msra.mxu0 0.0
        %1415 = vmatprep.subr.mxu0 0.0
        %1416 = vmatpush1.msra.mxu0 0.0
        %1417 = vmatprep.subr.mxu0 0.0
        %1418 = vmatpush1.msra.mxu0 0.0
        %1419 = vmatprep.subr.mxu0 0.0
        %1420 = vmatpush1.msra.mxu0 0.0
        %1421 = vmatprep.subr.mxu0 0.0
        %1422 = vmatpush1.msra.mxu0 0.0
        %1423 = vmatprep.subr.mxu0 0.0
        %1424 = vmatpush1.msra.mxu0 0.0
        %1425 = vmatprep.subr.mxu0 0.0
        %1426 = vmatpush1.msra.mxu0 0.0
        %1427 = vmatprep.subr.mxu0 0.0
        %1428 = vmatpush1.msra.mxu0 0.0
        %1429 = vmatprep.subr.mxu0 0.0
        %1430 = vmatpush1.msra.mxu0 0.0
        %1431 = vmatprep.subr.mxu0 0.0
        %1432 = vmatpush1.msra.mxu0 0.0
        %1433 = vmatprep.subr.mxu0 0.0
        %1434 = vmatpush1.msra.mxu0 0.0
        %1435 = vmatprep.subr.mxu0 0.0
        %1436 = vmatpush1.msra.mxu0 0.0
        %1437 = vmatprep.subr.mxu0 0.0
        %1438 = vmatpush1.msra.mxu0 0.0
        %1439 = vmatprep.subr.mxu0 0.0
        %1440 = vmatpush1.msra.mxu0 0.0
        %1441 = vmatprep.subr.mxu0 0.0
        %1442 = vmatpush1.msra.mxu0 0.0
        %1443 = vmatprep.subr.mxu0 0.0
        %1444 = vmatpush1.msra.mxu0 0.0
        %1445 = vmatprep.subr.mxu0 0.0
        %1446 = vmatpush1.msra.mxu0 0.0
        %1447 = vmatprep.subr.mxu0 0.0
        %1448 = vmatpush1.msra.mxu0 0.0
        %1449 = vmatprep.subr.mxu0 0.0
        %1450 = vmatpush1.msra.mxu0 0.0
        %1451 = vmatprep.subr.mxu0 0.0
        %1452 = vmatpush1.msra.mxu0 0.0
        %1453 = vmatprep.subr.mxu0 0.0
        %1454 = vmatpush1.msra.mxu0 0.0
        %1455 = vmatprep.subr.mxu0 0.0
        %1456 = vmatpush1.msra.mxu0 0.0
        %1457 = vmatprep.subr.mxu0 0.0
        %1458 = vmatpush1.msra.mxu0 0.0
        %1459 = vmatprep.subr.mxu0 0.0
        %1460 = vmatpush1.msra.mxu0 0.0
        %1461 = vmatprep.subr.mxu0 0.0
        %1462 = vmatpush1.msra.mxu0 0.0
        %1463 = vmatprep.subr.mxu0 0.0
        %1464 = vmatpush1.msra.mxu0 0.0
        %1465 = vmatprep.subr.mxu0 0.0
        %1466 = vmatpush1.msra.mxu0 0.0
        %1467 = vmatprep.mubr.f32.mxu0 0.0
        %1468 = vmatmul.mubr.f32.gmra.mrb[0].mxu0 %v1380
        %v1469 = vpop.f32.mrb[0].mxu0
        %v1470 = vadd.f32 0.0, %v1469
        %v1471 = vpop.f32.mrb[0].mxu0
        %1472 = vmatprep.mubr.f32.mxu0 0.0
        %1473 = vmatmul.mubr.f32.gmra.mrb[0].mxu0 %v1383
        %v1474 = vpop.f32.mrb[0].mxu0
        %v1475 = vadd.f32 0.0, %v1474
        %v1476 = vpop.f32.mrb[0].mxu0
        %1477 = vmatprep.mubr.f32.mxu0 0.0
        %1478 = vmatmul.mubr.f32.gmra.mrb[0].mxu0 %v1386
        %v1479 = vpop.f32.mrb[0].mxu0
        %v1480 = vadd.f32 0.0, %v1479
        %v1481 = vpop.f32.mrb[0].mxu0
        %1482 = vmatprep.mubr.f32.mxu0 0.0
        %1483 = vmatmul.mubr.f32.gmra.mrb[0].mxu0 %v1389
        %v1484 = vpop.f32.mrb[0].mxu0
        %v1485 = vadd.f32 0.0, %v1484
        %v1486 = vpop.f32.mrb[0].mxu0
        %1487 = vmatprep.mubr.f32.mxu0 0.0
        %1488 = vmatmul.mubr.f32.gmra.mrb[0].mxu0 %v1392
        %v1489 = vpop.f32.mrb[0].mxu0
        %v1490 = vadd.f32 0.0, %v1489
        %v1491 = vpop.f32.mrb[0].mxu0
        %1492 = vmatprep.mubr.f32.mxu0 0.0
        %1493 = vmatmul.mubr.f32.gmra.mrb[0].mxu0 %v1395
        %v1494 = vpop.f32.mrb[0].mxu0
        %v1495 = vadd.f32 0.0, %v1494
        %v1496 = vpop.f32.mrb[0].mxu0
        %1497 = vmatprep.mubr.f32.mxu0 0.0
        %1498 = vmatmul.mubr.f32.gmra.mrb[0].mxu0 %v1398
        %v1499 = vpop.f32.mrb[0].mxu0
        %v1500 = vadd.f32 0.0, %v1499
        %v1501 = vpop.f32.mrb[0].mxu0
        %1502 = vmatprep.mubr.f32.mxu0 0.0
        %1503 = vmatmul.mubr.f32.gmra.mrb[0].mxu0 %v1401
        %v1504 = vpop.f32.mrb[0].mxu0
        %v1505 = vadd.f32 0.0, %v1504
        %v1506 = vpop.f32.mrb[0].mxu0
        %1507 = vdwg.mxu0
        %1508 = vrot.lane.b32.xlu0 %v1172, 96
        %v1509 = vpop.permute.xlu0 %1508
        %1510 = vrot.lane.b32.xlu0 %v1177, 96
        %v1511 = vpop.permute.xlu0 %1510
        %1512 = vrot.lane.b32.xlu0 %v1182, 96
        %v1513 = vpop.permute.xlu0 %1512
        %1514 = vrot.lane.b32.xlu0 %v1187, 96
        %v1515 = vpop.permute.xlu0 %1514
        %1528 = vrot.lane.b32.xlu0 %v1226, 125
        %v1529 = vpop.permute.xlu0 %1528
        %1530 = vrot.lane.b32.xlu0 %v1227, 125
        %v1531 = vpop.permute.xlu0 %1530
        %1532 = vrot.lane.b32.xlu0 %v1228, 125
        %v1533 = vpop.permute.xlu0 %1532
        %1534 = vrot.lane.b32.xlu0 %v1229, 125
        %v1535 = vpop.permute.xlu0 %1534
        %1536 = vrot.lane.b32.xlu0 %v1230, 125
        %v1537 = vpop.permute.xlu0 %1536
        %1538 = vrot.lane.b32.xlu0 %v1231, 125
        %v1539 = vpop.permute.xlu0 %1538
        %1540 = vrot.lane.b32.xlu0 %v1232, 125
        %v1541 = vpop.permute.xlu0 %1540
        %1542 = vrot.lane.b32.xlu0 %v1233, 125
        %v1543 = vpop.permute.xlu0 %1542
        %v1553 = vsel %vm723, %v1218, 0
        %v1556 = vsel %vm723, %v1219, 0
        %v1559 = vsel %vm723, %v1220, 0
        %v1562 = vsel %vm723, %v1221, 0
        %v1565 = vsel %vm723, %v1222, 0
        %v1568 = vsel %vm723, %v1223, 0
        %v1571 = vsel %vm723, %v1224, 0
        %v1574 = vsel %vm723, %v1225, 0
        %1576 = vmatprep.subr.mxu0 0.0
        %1577 = vmatpush1.msra.mxu0 %v1509
        %1578 = vmatprep.subr.mxu0 0.0
        %1579 = vmatpush1.msra.mxu0 %v1511
        %1580 = vmatprep.subr.mxu0 0.0
        %1581 = vmatpush1.msra.mxu0 %v1513
        %1582 = vmatprep.subr.mxu0 0.0
        %1583 = vmatpush1.msra.mxu0 %v1515
        %1584 = vmatprep.subr.mxu0 0.0
        %1585 = vmatpush1.msra.mxu0 0.0
        %1586 = vmatprep.subr.mxu0 0.0
        %1587 = vmatpush1.msra.mxu0 0.0
        %1588 = vmatprep.subr.mxu0 0.0
        %1589 = vmatpush1.msra.mxu0 0.0
        %1590 = vmatprep.subr.mxu0 0.0
        %1591 = vmatpush1.msra.mxu0 0.0
        %1592 = vmatprep.subr.mxu0 0.0
        %1593 = vmatpush1.msra.mxu0 0.0
        %1594 = vmatprep.subr.mxu0 0.0
        %1595 = vmatpush1.msra.mxu0 0.0
        %1596 = vmatprep.subr.mxu0 0.0
        %1597 = vmatpush1.msra.mxu0 0.0
        %1598 = vmatprep.subr.mxu0 0.0
        %1599 = vmatpush1.msra.mxu0 0.0
        %1600 = vmatprep.subr.mxu0 0.0
        %1601 = vmatpush1.msra.mxu0 0.0
        %1602 = vmatprep.subr.mxu0 0.0
        %1603 = vmatpush1.msra.mxu0 0.0
        %1604 = vmatprep.subr.mxu0 0.0
        %1605 = vmatpush1.msra.mxu0 0.0
        %1606 = vmatprep.subr.mxu0 0.0
        %1607 = vmatpush1.msra.mxu0 0.0
        %1608 = vmatprep.subr.mxu0 0.0
        %1609 = vmatpush1.msra.mxu0 0.0
        %1610 = vmatprep.subr.mxu0 0.0
        %1611 = vmatpush1.msra.mxu0 0.0
        %1612 = vmatprep.subr.mxu0 0.0
        %1613 = vmatpush1.msra.mxu0 0.0
        %1614 = vmatprep.subr.mxu0 0.0
        %1615 = vmatpush1.msra.mxu0 0.0
        %1616 = vmatprep.subr.mxu0 0.0
        %1617 = vmatpush1.msra.mxu0 0.0
        %1618 = vmatprep.subr.mxu0 0.0
        %1619 = vmatpush1.msra.mxu0 0.0
        %1620 = vmatprep.subr.mxu0 0.0
        %1621 = vmatpush1.msra.mxu0 0.0
        %1622 = vmatprep.subr.mxu0 0.0
        %1623 = vmatpush1.msra.mxu0 0.0
        %1624 = vmatprep.subr.mxu0 0.0
        %1625 = vmatpush1.msra.mxu0 0.0
        %1626 = vmatprep.subr.mxu0 0.0
        %1627 = vmatpush1.msra.mxu0 0.0
        %1628 = vmatprep.subr.mxu0 0.0
        %1629 = vmatpush1.msra.mxu0 0.0
        %1630 = vmatprep.subr.mxu0 0.0
        %1631 = vmatpush1.msra.mxu0 0.0
        %1632 = vmatprep.subr.mxu0 0.0
        %1633 = vmatpush1.msra.mxu0 0.0
        %1634 = vmatprep.subr.mxu0 0.0
        %1635 = vmatpush1.msra.mxu0 0.0
        %1636 = vmatprep.subr.mxu0 0.0
        %1637 = vmatpush1.msra.mxu0 0.0
        %1638 = vmatprep.subr.mxu0 0.0
        %1639 = vmatpush1.msra.mxu0 0.0
        %1640 = vmatprep.mubr.f32.mxu0 0.0
        %1641 = vmatmul.mubr.f32.gmra.mrb[0].mxu0 %v1553
        %v1642 = vpop.f32.mrb[0].mxu0
        %v1643 = vadd.f32 %v1529, %v1642
        %v1644 = vpop.f32.mrb[0].mxu0
        %1645 = vmatprep.mubr.f32.mxu0 0.0
        %1646 = vmatmul.mubr.f32.gmra.mrb[0].mxu0 %v1556
        %v1647 = vpop.f32.mrb[0].mxu0
        %v1648 = vadd.f32 %v1531, %v1647
        %v1649 = vpop.f32.mrb[0].mxu0
        %1650 = vmatprep.mubr.f32.mxu0 0.0
        %1651 = vmatmul.mubr.f32.gmra.mrb[0].mxu0 %v1559
        %v1652 = vpop.f32.mrb[0].mxu0
        %v1653 = vadd.f32 %v1533, %v1652
        %v1654 = vpop.f32.mrb[0].mxu0
        %1655 = vmatprep.mubr.f32.mxu0 0.0
        %1656 = vmatmul.mubr.f32.gmra.mrb[0].mxu0 %v1562
        %v1657 = vpop.f32.mrb[0].mxu0
        %v1658 = vadd.f32 %v1535, %v1657
        %v1659 = vpop.f32.mrb[0].mxu0
        %1660 = vmatprep.mubr.f32.mxu0 0.0
        %1661 = vmatmul.mubr.f32.gmra.mrb[0].mxu0 %v1565
        %v1662 = vpop.f32.mrb[0].mxu0
        %v1663 = vadd.f32 %v1537, %v1662
        %v1664 = vpop.f32.mrb[0].mxu0
        %1665 = vmatprep.mubr.f32.mxu0 0.0
        %1666 = vmatmul.mubr.f32.gmra.mrb[0].mxu0 %v1568
        %v1667 = vpop.f32.mrb[0].mxu0
        %v1668 = vadd.f32 %v1539, %v1667
        %v1669 = vpop.f32.mrb[0].mxu0
        %1670 = vmatprep.mubr.f32.mxu0 0.0
        %1671 = vmatmul.mubr.f32.gmra.mrb[0].mxu0 %v1571
        %v1672 = vpop.f32.mrb[0].mxu0
        %v1673 = vadd.f32 %v1541, %v1672
        %v1674 = vpop.f32.mrb[0].mxu0
        %1675 = vmatprep.mubr.f32.mxu0 0.0
        %1676 = vmatmul.mubr.f32.gmra.mrb[0].mxu0 %v1574
        %v1677 = vpop.f32.mrb[0].mxu0
        %v1678 = vadd.f32 %v1543, %v1677
        %v1679 = vpop.f32.mrb[0].mxu0
        %1680 = vdwg.mxu0
        %1689 = vrot.lane.b32.xlu0 %v1470, 16
        %v1690 = vpop.permute.xlu0 %1689
        %1691 = vrot.lane.b32.xlu0 %v1475, 16
        %v1692 = vpop.permute.xlu0 %1691
        %1693 = vrot.lane.b32.xlu0 %v1480, 16
        %v1694 = vpop.permute.xlu0 %1693
        %1695 = vrot.lane.b32.xlu0 %v1485, 16
        %v1696 = vpop.permute.xlu0 %1695
        %1697 = vrot.lane.b32.xlu0 %v1490, 16
        %v1698 = vpop.permute.xlu0 %1697
        %1699 = vrot.lane.b32.xlu0 %v1495, 16
        %v1700 = vpop.permute.xlu0 %1699
        %1701 = vrot.lane.b32.xlu0 %v1500, 16
        %v1702 = vpop.permute.xlu0 %1701
        %1703 = vrot.lane.b32.xlu0 %v1505, 16
        %v1704 = vpop.permute.xlu0 %1703
        %1721 = vrot.lane.b32.xlu0 %v1643, 32
        %v1722 = vpop.permute.xlu0 %1721
        %1723 = vrot.lane.b32.xlu0 %v1648, 32
        %v1724 = vpop.permute.xlu0 %1723
        %1725 = vrot.lane.b32.xlu0 %v1653, 32
        %v1726 = vpop.permute.xlu0 %1725
        %1727 = vrot.lane.b32.xlu0 %v1658, 32
        %v1728 = vpop.permute.xlu0 %1727
        %1729 = vrot.lane.b32.xlu0 %v1663, 32
        %v1730 = vpop.permute.xlu0 %1729
        %1731 = vrot.lane.b32.xlu0 %v1668, 32
        %v1732 = vpop.permute.xlu0 %1731
        %1733 = vrot.lane.b32.xlu0 %v1673, 32
        %v1734 = vpop.permute.xlu0 %1733
        %1735 = vrot.lane.b32.xlu0 %v1678, 32
        %v1736 = vpop.permute.xlu0 %1735
        %v1745 = vsel %vm718, %v1325, %v1690
        %v1746 = vsel %vm718, %v1330, %v1692
        %v1747 = vsel %vm718, %v1335, %v1694
        %v1748 = vsel %vm718, %v1340, %v1696
        %v1749 = vsel %vm718, %v1345, %v1698
        %v1750 = vsel %vm718, %v1350, %v1700
        %v1751 = vsel %vm718, %v1355, %v1702
        %v1752 = vsel %vm718, %v1360, %v1704
        %v1753 = vsel %vm723, %v1745, %v1722
        %v1754 = vsel %vm723, %v1746, %v1724
        %v1755 = vsel %vm723, %v1747, %v1726
        %v1756 = vsel %vm723, %v1748, %v1728
        %v1757 = vsel %vm723, %v1749, %v1730
        %v1758 = vsel %vm723, %v1750, %v1732
        %v1759 = vsel %vm723, %v1751, %v1734
        %v1760 = vsel %vm723, %v1752, %v1736
        %v1762 = vsel %vm738, %v1753, 0
        %v1765 = vsel %vm738, %v1754, 0
        %v1768 = vsel %vm738, %v1755, 0
        %v1771 = vsel %vm738, %v1756, 0
        %v1774 = vsel %vm738, %v1757, 0
        %v1777 = vsel %vm738, %v1758, 0
        %v1780 = vsel %vm738, %v1759, 0
        %v1783 = vsel %vm738, %v1760, 0
        %1785 = vmatprep.subr.mxu0 %v729
        %1786 = vmatpush1.msra.mxu0 %v728
        %1787 = vmatprep.subr.mxu0 %v731
        %1788 = vmatpush1.msra.mxu0 %v730
        %1789 = vmatprep.subr.mxu0 %v733
        %1790 = vmatpush1.msra.mxu0 %v732
        %1791 = vmatprep.subr.mxu0 %v735
        %1792 = vmatpush1.msra.mxu0 %v734
        %1793 = vmatprep.subr.mxu0 %v756
        %1794 = vmatpush1.msra.mxu0 %v753
        %1795 = vmatprep.subr.mxu0 0.0
        %1796 = vmatpush1.msra.mxu0 0.0
        %1797 = vmatprep.subr.mxu0 0.0
        %1798 = vmatpush1.msra.mxu0 0.0
        %1799 = vmatprep.subr.mxu0 0.0
        %1800 = vmatpush1.msra.mxu0 0.0
        %1801 = vmatprep.subr.mxu0 0.0
        %1802 = vmatpush1.msra.mxu0 0.0
        %1803 = vmatprep.subr.mxu0 0.0
        %1804 = vmatpush1.msra.mxu0 0.0
        %1805 = vmatprep.subr.mxu0 0.0
        %1806 = vmatpush1.msra.mxu0 0.0
        %1807 = vmatprep.subr.mxu0 0.0
        %1808 = vmatpush1.msra.mxu0 0.0
        %1809 = vmatprep.subr.mxu0 0.0
        %1810 = vmatpush1.msra.mxu0 0.0
        %1811 = vmatprep.subr.mxu0 0.0
        %1812 = vmatpush1.msra.mxu0 0.0
        %1813 = vmatprep.subr.mxu0 0.0
        %1814 = vmatpush1.msra.mxu0 0.0
        %1815 = vmatprep.subr.mxu0 0.0
        %1816 = vmatpush1.msra.mxu0 0.0
        %1817 = vmatprep.subr.mxu0 0.0
        %1818 = vmatpush1.msra.mxu0 0.0
        %1819 = vmatprep.subr.mxu0 0.0
        %1820 = vmatpush1.msra.mxu0 0.0
        %1821 = vmatprep.subr.mxu0 0.0
        %1822 = vmatpush1.msra.mxu0 0.0
        %1823 = vmatprep.subr.mxu0 0.0
        %1824 = vmatpush1.msra.mxu0 0.0
        %1825 = vmatprep.subr.mxu0 0.0
        %1826 = vmatpush1.msra.mxu0 0.0
        %1827 = vmatprep.subr.mxu0 0.0
        %1828 = vmatpush1.msra.mxu0 0.0
        %1829 = vmatprep.subr.mxu0 0.0
        %1830 = vmatpush1.msra.mxu0 0.0
        %1831 = vmatprep.subr.mxu0 0.0
        %1832 = vmatpush1.msra.mxu0 0.0
        %1833 = vmatprep.subr.mxu0 0.0
        %1834 = vmatpush1.msra.mxu0 0.0
        %1835 = vmatprep.subr.mxu0 0.0
        %1836 = vmatpush1.msra.mxu0 0.0
        %1837 = vmatprep.subr.mxu0 0.0
        %1838 = vmatpush1.msra.mxu0 0.0
        %1839 = vmatprep.subr.mxu0 0.0
        %1840 = vmatpush1.msra.mxu0 0.0
        %1841 = vmatprep.subr.mxu0 0.0
        %1842 = vmatpush1.msra.mxu0 0.0
        %1843 = vmatprep.subr.mxu0 0.0
        %1844 = vmatpush1.msra.mxu0 0.0
        %1845 = vmatprep.subr.mxu0 0.0
        %1846 = vmatpush1.msra.mxu0 0.0
        %1847 = vmatprep.subr.mxu0 0.0
        %1848 = vmatpush1.msra.mxu0 0.0
        %1849 = vmatprep.mubr.f32.mxu0 0.0
        %1850 = vmatmul.mubr.f32.gmra.mrb[0].mxu0 %v1762
        %v1851 = vpop.f32.mrb[0].mxu0
        %v1852 = vadd.f32 0.0, %v1851
        %v1853 = vpop.f32.mrb[0].mxu0
        %v1854 = vadd.f32 0.0, %v1853
        %1855 = vmatprep.mubr.f32.mxu0 0.0
        %1856 = vmatmul.mubr.f32.gmra.mrb[0].mxu0 %v1765
        %v1857 = vpop.f32.mrb[0].mxu0
        %v1858 = vadd.f32 0.0, %v1857
        %v1859 = vpop.f32.mrb[0].mxu0
        %v1860 = vadd.f32 0.0, %v1859
        %1861 = vmatprep.mubr.f32.mxu0 0.0
        %1862 = vmatmul.mubr.f32.gmra.mrb[0].mxu0 %v1768
        %v1863 = vpop.f32.mrb[0].mxu0
        %v1864 = vadd.f32 0.0, %v1863
        %v1865 = vpop.f32.mrb[0].mxu0
        %v1866 = vadd.f32 0.0, %v1865
        %1867 = vmatprep.mubr.f32.mxu0 0.0
        %1868 = vmatmul.mubr.f32.gmra.mrb[0].mxu0 %v1771
        %v1869 = vpop.f32.mrb[0].mxu0
        %v1870 = vadd.f32 0.0, %v1869
        %v1871 = vpop.f32.mrb[0].mxu0
        %v1872 = vadd.f32 0.0, %v1871
        %1873 = vmatprep.mubr.f32.mxu0 0.0
        %1874 = vmatmul.mubr.f32.gmra.mrb[0].mxu0 %v1774
        %v1875 = vpop.f32.mrb[0].mxu0
        %v1876 = vadd.f32 0.0, %v1875
        %v1877 = vpop.f32.mrb[0].mxu0
        %v1878 = vadd.f32 0.0, %v1877
        %1879 = vmatprep.mubr.f32.mxu0 0.0
        %1880 = vmatmul.mubr.f32.gmra.mrb[0].mxu0 %v1777
        %v1881 = vpop.f32.mrb[0].mxu0
        %v1882 = vadd.f32 0.0, %v1881
        %v1883 = vpop.f32.mrb[0].mxu0
        %v1884 = vadd.f32 0.0, %v1883
        %1885 = vmatprep.mubr.f32.mxu0 0.0
        %1886 = vmatmul.mubr.f32.gmra.mrb[0].mxu0 %v1780
        %v1887 = vpop.f32.mrb[0].mxu0
        %v1888 = vadd.f32 0.0, %v1887
        %v1889 = vpop.f32.mrb[0].mxu0
        %v1890 = vadd.f32 0.0, %v1889
        %1891 = vmatprep.mubr.f32.mxu0 0.0
        %1892 = vmatmul.mubr.f32.gmra.mrb[0].mxu0 %v1783
        %v1893 = vpop.f32.mrb[0].mxu0
        %v1894 = vadd.f32 0.0, %v1893
        %v1895 = vpop.f32.mrb[0].mxu0
        %v1896 = vadd.f32 0.0, %v1895
        %1897 = vdwg.mxu0
        %v1899 = vsel %vm723, %v1191, 0
        %v1902 = vsel %vm723, %v1192, 0
        %v1905 = vsel %vm723, %v1193, 0
        %v1908 = vsel %vm723, %v1194, 0
        %v1911 = vsel %vm723, %v1195, 0
        %v1914 = vsel %vm723, %v1196, 0
        %v1917 = vsel %vm723, %v1197, 0
        %v1920 = vsel %vm723, %v1198, 0
        %1922 = vmatprep.subr.mxu0 %v1098
        %1923 = vmatpush1.msra.mxu0 %v1097
        %1924 = vmatprep.subr.mxu0 %v1100
        %1925 = vmatpush1.msra.mxu0 %v1099
        %1926 = vmatprep.subr.mxu0 %v1102
        %1927 = vmatpush1.msra.mxu0 %v1101
        %1928 = vmatprep.subr.mxu0 %v1104
        %1929 = vmatpush1.msra.mxu0 %v1103
        %1930 = vmatprep.subr.mxu0 0.0
        %1931 = vmatpush1.msra.mxu0 0.0
        %1932 = vmatprep.subr.mxu0 0.0
        %1933 = vmatpush1.msra.mxu0 0.0
        %1934 = vmatprep.subr.mxu0 0.0
        %1935 = vmatpush1.msra.mxu0 0.0
        %1936 = vmatprep.subr.mxu0 0.0
        %1937 = vmatpush1.msra.mxu0 0.0
        %1938 = vmatprep.subr.mxu0 0.0
        %1939 = vmatpush1.msra.mxu0 0.0
        %1940 = vmatprep.subr.mxu0 0.0
        %1941 = vmatpush1.msra.mxu0 0.0
        %1942 = vmatprep.subr.mxu0 0.0
        %1943 = vmatpush1.msra.mxu0 0.0
        %1944 = vmatprep.subr.mxu0 0.0
        %1945 = vmatpush1.msra.mxu0 0.0
        %1946 = vmatprep.subr.mxu0 0.0
        %1947 = vmatpush1.msra.mxu0 0.0
        %1948 = vmatprep.subr.mxu0 0.0
        %1949 = vmatpush1.msra.mxu0 0.0
        %1950 = vmatprep.subr.mxu0 0.0
        %1951 = vmatpush1.msra.mxu0 0.0
        %1952 = vmatprep.subr.mxu0 0.0
        %1953 = vmatpush1.msra.mxu0 0.0
        %1954 = vmatprep.subr.mxu0 0.0
        %1955 = vmatpush1.msra.mxu0 0.0
        %1956 = vmatprep.subr.mxu0 0.0
        %1957 = vmatpush1.msra.mxu0 0.0
        %1958 = vmatprep.subr.mxu0 0.0
        %1959 = vmatpush1.msra.mxu0 0.0
        %1960 = vmatprep.subr.mxu0 0.0
        %1961 = vmatpush1.msra.mxu0 0.0
        %1962 = vmatprep.subr.mxu0 0.0
        %1963 = vmatpush1.msra.mxu0 0.0
        %1964 = vmatprep.subr.mxu0 0.0
        %1965 = vmatpush1.msra.mxu0 0.0
        %1966 = vmatprep.subr.mxu0 0.0
        %1967 = vmatpush1.msra.mxu0 0.0
        %1968 = vmatprep.subr.mxu0 0.0
        %1969 = vmatpush1.msra.mxu0 0.0
        %1970 = vmatprep.subr.mxu0 0.0
        %1971 = vmatpush1.msra.mxu0 0.0
        %1972 = vmatprep.subr.mxu0 0.0
        %1973 = vmatpush1.msra.mxu0 0.0
        %1974 = vmatprep.subr.mxu0 0.0
        %1975 = vmatpush1.msra.mxu0 0.0
        %1976 = vmatprep.subr.mxu0 0.0
        %1977 = vmatpush1.msra.mxu0 0.0
        %1978 = vmatprep.subr.mxu0 0.0
        %1979 = vmatpush1.msra.mxu0 0.0
        %1980 = vmatprep.subr.mxu0 0.0
        %1981 = vmatpush1.msra.mxu0 0.0
        %1982 = vmatprep.subr.mxu0 0.0
        %1983 = vmatpush1.msra.mxu0 0.0
        %1984 = vmatprep.subr.mxu0 0.0
        %1985 = vmatpush1.msra.mxu0 0.0
        %1986 = vmatprep.mubr.f32.mxu0 0.0
        %1987 = vmatmul.mubr.f32.gmra.mrb[0].mxu0 %v1899
        %v1988 = vpop.f32.mrb[0].mxu0
        %v1989 = vadd.f32 %v1852, %v1988
        %v1990 = vpop.f32.mrb[0].mxu0
        %v1991 = vadd.f32 %v1854, %v1990
        %1992 = vmatprep.mubr.f32.mxu0 0.0
        %1993 = vmatmul.mubr.f32.gmra.mrb[0].mxu0 %v1902
        %v1994 = vpop.f32.mrb[0].mxu0
        %v1995 = vadd.f32 %v1858, %v1994
        %v1996 = vpop.f32.mrb[0].mxu0
        %v1997 = vadd.f32 %v1860, %v1996
        %1998 = vmatprep.mubr.f32.mxu0 0.0
        %1999 = vmatmul.mubr.f32.gmra.mrb[0].mxu0 %v1905
        %v2000 = vpop.f32.mrb[0].mxu0
        %v2001 = vadd.f32 %v1864, %v2000
        %v2002 = vpop.f32.mrb[0].mxu0
        %v2003 = vadd.f32 %v1866, %v2002
        %2004 = vmatprep.mubr.f32.mxu0 0.0
        %2005 = vmatmul.mubr.f32.gmra.mrb[0].mxu0 %v1908
        %v2006 = vpop.f32.mrb[0].mxu0
        %v2007 = vadd.f32 %v1870, %v2006
        %v2008 = vpop.f32.mrb[0].mxu0
        %v2009 = vadd.f32 %v1872, %v2008
        %2010 = vmatprep.mubr.f32.mxu0 0.0
        %2011 = vmatmul.mubr.f32.gmra.mrb[0].mxu0 %v1911
        %v2012 = vpop.f32.mrb[0].mxu0
        %v2013 = vadd.f32 %v1876, %v2012
        %v2014 = vpop.f32.mrb[0].mxu0
        %v2015 = vadd.f32 %v1878, %v2014
        %2016 = vmatprep.mubr.f32.mxu0 0.0
        %2017 = vmatmul.mubr.f32.gmra.mrb[0].mxu0 %v1914
        %v2018 = vpop.f32.mrb[0].mxu0
        %v2019 = vadd.f32 %v1882, %v2018
        %v2020 = vpop.f32.mrb[0].mxu0
        %v2021 = vadd.f32 %v1884, %v2020
        %2022 = vmatprep.mubr.f32.mxu0 0.0
        %2023 = vmatmul.mubr.f32.gmra.mrb[0].mxu0 %v1917
        %v2024 = vpop.f32.mrb[0].mxu0
        %v2025 = vadd.f32 %v1888, %v2024
        %v2026 = vpop.f32.mrb[0].mxu0
        %v2027 = vadd.f32 %v1890, %v2026
        %2028 = vmatprep.mubr.f32.mxu0 0.0
        %2029 = vmatmul.mubr.f32.gmra.mrb[0].mxu0 %v1920
        %v2030 = vpop.f32.mrb[0].mxu0
        %v2031 = vadd.f32 %v1894, %v2030
        %v2032 = vpop.f32.mrb[0].mxu0
        %v2033 = vadd.f32 %v1896, %v2032
        %2034 = vdwg.mxu0
        %v2035 = vadd.f32 %v1989, %v1991
        %2036 = vadd.xlane.f32.xlu0 %v2035
        %v2037 = vpop.xlane.xlu0 %2036
        %v2038 = vadd.f32 %v1995, %v1997
        %2039 = vadd.xlane.f32.xlu0 %v2038
        %v2040 = vpop.xlane.xlu0 %2039
        %v2041 = vadd.f32 %v2001, %v2003
        %2042 = vadd.xlane.f32.xlu0 %v2041
        %v2043 = vpop.xlane.xlu0 %2042
        %v2044 = vadd.f32 %v2007, %v2009
        %2045 = vadd.xlane.f32.xlu0 %v2044
        %v2046 = vpop.xlane.xlu0 %2045
        %v2047 = vadd.f32 %v2013, %v2015
        %2048 = vadd.xlane.f32.xlu0 %v2047
        %v2049 = vpop.xlane.xlu0 %2048
        %v2050 = vadd.f32 %v2019, %v2021
        %2051 = vadd.xlane.f32.xlu0 %v2050
        %v2052 = vpop.xlane.xlu0 %2051
        %v2053 = vadd.f32 %v2025, %v2027
        %2054 = vadd.xlane.f32.xlu0 %v2053
        %v2055 = vpop.xlane.xlu0 %2054
        %v2056 = vadd.f32 %v2031, %v2033
        %2057 = vadd.xlane.f32.xlu0 %v2056
        %v2058 = vpop.xlane.xlu0 %2057
        %v2059 = vmul.f32 %v2037, %v968
        %v2060 = vmul.f32 %v2040, %v968
        %v2061 = vmul.f32 %v2043, %v968
        %v2062 = vmul.f32 %v2046, %v968
        %v2063 = vmul.f32 %v2049, %v968
        %v2064 = vmul.f32 %v2052, %v968
        %v2065 = vmul.f32 %v2055, %v968
        %v2066 = vmul.f32 %v2058, %v968
        %v2067 = vmul.f32 %v1989, %v1989
        %v2068 = vmul.f32 %v1991, %v1991
        %v2069 = vmul.f32 %v1995, %v1995
        %v2070 = vmul.f32 %v1997, %v1997
        %v2071 = vmul.f32 %v2001, %v2001
        %v2072 = vmul.f32 %v2003, %v2003
        %v2073 = vmul.f32 %v2007, %v2007
        %v2074 = vmul.f32 %v2009, %v2009
        %v2075 = vmul.f32 %v2013, %v2013
        %v2076 = vmul.f32 %v2015, %v2015
        %v2077 = vmul.f32 %v2019, %v2019
        %v2078 = vmul.f32 %v2021, %v2021
        %v2079 = vmul.f32 %v2025, %v2025
        %v2080 = vmul.f32 %v2027, %v2027
        %v2081 = vmul.f32 %v2031, %v2031
        %v2082 = vmul.f32 %v2033, %v2033
        %v2083 = vadd.f32 %v2067, %v2068
        %2084 = vadd.xlane.f32.xlu0 %v2083
        %v2085 = vpop.xlane.xlu0 %2084
        %v2086 = vadd.f32 %v2069, %v2070
        %2087 = vadd.xlane.f32.xlu0 %v2086
        %v2088 = vpop.xlane.xlu0 %2087
        %v2089 = vadd.f32 %v2071, %v2072
        %2090 = vadd.xlane.f32.xlu0 %v2089
        %v2091 = vpop.xlane.xlu0 %2090
        %v2092 = vadd.f32 %v2073, %v2074
        %2093 = vadd.xlane.f32.xlu0 %v2092
        %v2094 = vpop.xlane.xlu0 %2093
        %v2095 = vadd.f32 %v2075, %v2076
        %2096 = vadd.xlane.f32.xlu0 %v2095
        %v2097 = vpop.xlane.xlu0 %2096
        %v2098 = vadd.f32 %v2077, %v2078
        %2099 = vadd.xlane.f32.xlu0 %v2098
        %v2100 = vpop.xlane.xlu0 %2099
        %v2101 = vadd.f32 %v2079, %v2080
        %2102 = vadd.xlane.f32.xlu0 %v2101
        %v2103 = vpop.xlane.xlu0 %2102
        %v2104 = vadd.f32 %v2081, %v2082
        %2105 = vadd.xlane.f32.xlu0 %v2104
        %v2106 = vpop.xlane.xlu0 %2105
        %v2107 = vmul.f32 %v2085, %v968
        %v2108 = vmul.f32 %v2088, %v968
        %v2109 = vmul.f32 %v2091, %v968
        %v2110 = vmul.f32 %v2094, %v968
        %v2111 = vmul.f32 %v2097, %v968
        %v2112 = vmul.f32 %v2100, %v968
        %v2113 = vmul.f32 %v2103, %v968
        %v2114 = vmul.f32 %v2106, %v968
        %v2115 = vmul.f32 %v2059, %v2059
        %v2116 = vmul.f32 %v2060, %v2060
        %v2117 = vmul.f32 %v2061, %v2061
        %v2118 = vmul.f32 %v2062, %v2062
        %v2119 = vmul.f32 %v2063, %v2063
        %v2120 = vmul.f32 %v2064, %v2064
        %v2121 = vmul.f32 %v2065, %v2065
        %v2122 = vmul.f32 %v2066, %v2066
        %v2123 = vsub.f32 %v2107, %v2115
        %v2124 = vsub.f32 %v2108, %v2116
        %v2125 = vsub.f32 %v2109, %v2117
        %v2126 = vsub.f32 %v2110, %v2118
        %v2127 = vsub.f32 %v2111, %v2119
        %v2128 = vsub.f32 %v2112, %v2120
        %v2129 = vsub.f32 %v2113, %v2121
        %v2130 = vsub.f32 %v2114, %v2122
        %v2131 = vadd.f32 %v2123, 1e-05
        %v2132 = vadd.f32 %v2124, 1e-05
        %v2133 = vadd.f32 %v2125, 1e-05
        %v2134 = vadd.f32 %v2126, 1e-05
        %v2135 = vadd.f32 %v2127, 1e-05
        %v2136 = vadd.f32 %v2128, 1e-05
        %v2137 = vadd.f32 %v2129, 1e-05
        %v2138 = vadd.f32 %v2130, 1e-05
        %v2139 = vrsqrt.pop %v2131
        %v2140 = vrsqrt.pop %v2132
        %v2141 = vrsqrt.pop %v2133
        %v2142 = vrsqrt.pop %v2134
        %v2143 = vrsqrt.pop %v2135
        %v2144 = vrsqrt.pop %v2136
        %v2145 = vrsqrt.pop %v2137
        %v2146 = vrsqrt.pop %v2138
        %v2147 = vmul.f32 %v1226, %v2139
        %v2148 = vmul.f32 %v1227, %v2140
        %v2149 = vmul.f32 %v1228, %v2141
        %v2150 = vmul.f32 %v1229, %v2142
        %v2151 = vmul.f32 %v1230, %v2143
        %v2152 = vmul.f32 %v1231, %v2144
        %v2153 = vmul.f32 %v1232, %v2145
        %v2154 = vmul.f32 %v1233, %v2146
        %v2155 = vmul.f32 %v2059, %v2147
        %v2156 = vmul.f32 %v2060, %v2148
        %v2157 = vmul.f32 %v2061, %v2149
        %v2158 = vmul.f32 %v2062, %v2150
        %v2159 = vmul.f32 %v2063, %v2151
        %v2160 = vmul.f32 %v2064, %v2152
        %v2161 = vmul.f32 %v2065, %v2153
        %v2162 = vmul.f32 %v2066, %v2154
        %2171 = vrot.lane.b32.xlu0 %v2155, 1
        %v2172 = vpop.permute.xlu0 %2171
        %2173 = vrot.lane.b32.xlu0 %v2156, 1
        %v2174 = vpop.permute.xlu0 %2173
        %2175 = vrot.lane.b32.xlu0 %v2157, 1
        %v2176 = vpop.permute.xlu0 %2175
        %2177 = vrot.lane.b32.xlu0 %v2158, 1
        %v2178 = vpop.permute.xlu0 %2177
        %2179 = vrot.lane.b32.xlu0 %v2159, 1
        %v2180 = vpop.permute.xlu0 %2179
        %2181 = vrot.lane.b32.xlu0 %v2160, 1
        %v2182 = vpop.permute.xlu0 %2181
        %2183 = vrot.lane.b32.xlu0 %v2161, 1
        %v2184 = vpop.permute.xlu0 %2183
        %2185 = vrot.lane.b32.xlu0 %v2162, 1
        %v2186 = vpop.permute.xlu0 %2185
        %v2195 = vsub.f32 %v1226, %v2172
        %v2196 = vsub.f32 %v1227, %v2174
        %v2197 = vsub.f32 %v1228, %v2176
        %v2198 = vsub.f32 %v1229, %v2178
        %v2199 = vsub.f32 %v1230, %v2180
        %v2200 = vsub.f32 %v1231, %v2182
        %v2201 = vsub.f32 %v1232, %v2184
        %v2202 = vsub.f32 %v1233, %v2186
        %2204 = vset.pattern.permute.xlu0 4
        %2205 = vperm.xlu0 %2204, %v2147
        %v2206 = vpop.permute.xlu0 %2205
        %2209 = vset.pattern.permute.xlu0 4
        %2210 = vperm.xlu0 %2209, %v2148
        %v2211 = vpop.permute.xlu0 %2210
        %2214 = vset.pattern.permute.xlu0 4
        %2215 = vperm.xlu0 %2214, %v2149
        %v2216 = vpop.permute.xlu0 %2215
        %2219 = vset.pattern.permute.xlu0 4
        %2220 = vperm.xlu0 %2219, %v2150
        %v2221 = vpop.permute.xlu0 %2220
        %2224 = vset.pattern.permute.xlu0 4
        %2225 = vperm.xlu0 %2224, %v2151
        %v2226 = vpop.permute.xlu0 %2225
        %2229 = vset.pattern.permute.xlu0 4
        %2230 = vperm.xlu0 %2229, %v2152
        %v2231 = vpop.permute.xlu0 %2230
        %2234 = vset.pattern.permute.xlu0 4
        %2235 = vperm.xlu0 %2234, %v2153
        %v2236 = vpop.permute.xlu0 %2235
        %2239 = vset.pattern.permute.xlu0 4
        %2240 = vperm.xlu0 %2239, %v2154
        %v2241 = vpop.permute.xlu0 %2240
        %v2243 = vmul.f32 %v1989, %v2206
        %v2244 = vmul.f32 %v1991, %v2206
        %v2245 = vmul.f32 %v1995, %v2211
        %v2246 = vmul.f32 %v1997, %v2211
        %v2247 = vmul.f32 %v2001, %v2216
        %v2248 = vmul.f32 %v2003, %v2216
        %v2249 = vmul.f32 %v2007, %v2221
        %v2250 = vmul.f32 %v2009, %v2221
        %v2251 = vmul.f32 %v2013, %v2226
        %v2252 = vmul.f32 %v2015, %v2226
        %v2253 = vmul.f32 %v2019, %v2231
        %v2254 = vmul.f32 %v2021, %v2231
        %v2255 = vmul.f32 %v2025, %v2236
        %v2256 = vmul.f32 %v2027, %v2236
        %v2257 = vmul.f32 %v2031, %v2241
        %v2258 = vmul.f32 %v2033, %v2241
        %2260 = vset.pattern.permute.xlu0 5
        %2261 = vperm.xlu0 %2260, %v2195
        %v2262 = vpop.permute.xlu0 %2261
        %2265 = vset.pattern.permute.xlu0 5
        %2266 = vperm.xlu0 %2265, %v2196
        %v2267 = vpop.permute.xlu0 %2266
        %2270 = vset.pattern.permute.xlu0 5
        %2271 = vperm.xlu0 %2270, %v2197
        %v2272 = vpop.permute.xlu0 %2271
        %2275 = vset.pattern.permute.xlu0 5
        %2276 = vperm.xlu0 %2275, %v2198
        %v2277 = vpop.permute.xlu0 %2276
        %2280 = vset.pattern.permute.xlu0 5
        %2281 = vperm.xlu0 %2280, %v2199
        %v2282 = vpop.permute.xlu0 %2281
        %2285 = vset.pattern.permute.xlu0 5
        %2286 = vperm.xlu0 %2285, %v2200
        %v2287 = vpop.permute.xlu0 %2286
        %2290 = vset.pattern.permute.xlu0 5
        %2291 = vperm.xlu0 %2290, %v2201
        %v2292 = vpop.permute.xlu0 %2291
        %2295 = vset.pattern.permute.xlu0 5
        %2296 = vperm.xlu0 %2295, %v2202
        %v2297 = vpop.permute.xlu0 %2296
        %v2299 = vadd.f32 %v2243, %v2262
        %v2300 = vadd.f32 %v2244, %v2262
        %v2301 = vadd.f32 %v2245, %v2267
        %v2302 = vadd.f32 %v2246, %v2267
        %v2303 = vadd.f32 %v2247, %v2272
        %v2304 = vadd.f32 %v2248, %v2272
        %v2305 = vadd.f32 %v2249, %v2277
        %v2306 = vadd.f32 %v2250, %v2277
        %v2307 = vadd.f32 %v2251, %v2282
        %v2308 = vadd.f32 %v2252, %v2282
        %v2309 = vadd.f32 %v2253, %v2287
        %v2310 = vadd.f32 %v2254, %v2287
        %v2311 = vadd.f32 %v2255, %v2292
        %v2312 = vadd.f32 %v2256, %v2292
        %v2313 = vadd.f32 %v2257, %v2297
        %v2314 = vadd.f32 %v2258, %v2297
        %v2315 = vmax.f32 %v2299, 0.0
        %v2316 = vmax.f32 %v2300, 0.0
        %v2317 = vmax.f32 %v2301, 0.0
        %v2318 = vmax.f32 %v2302, 0.0
        %v2319 = vmax.f32 %v2303, 0.0
        %v2320 = vmax.f32 %v2304, 0.0
        %v2321 = vmax.f32 %v2305, 0.0
        %v2322 = vmax.f32 %v2306, 0.0
        %v2323 = vmax.f32 %v2307, 0.0
        %v2324 = vmax.f32 %v2308, 0.0
        %v2325 = vmax.f32 %v2309, 0.0
        %v2326 = vmax.f32 %v2310, 0.0
        %v2327 = vmax.f32 %v2311, 0.0
        %v2328 = vmax.f32 %v2312, 0.0
        %v2329 = vmax.f32 %v2313, 0.0
        %v2330 = vmax.f32 %v2314, 0.0
        %2331 = vmatprep.subr.mxu0 0.0
        %2332 = vmatpush1.msra.mxu0 %v254
        %2333 = vmatprep.subr.mxu0 0.0
        %2334 = vmatpush1.msra.mxu0 %v255
        %2335 = vmatprep.subr.mxu0 0.0
        %2336 = vmatpush1.msra.mxu0 %v256
        %2337 = vmatprep.subr.mxu0 0.0
        %2338 = vmatpush1.msra.mxu0 %v257
        %2339 = vmatprep.subr.mxu0 0.0
        %2340 = vmatpush1.msra.mxu0 %v258
        %2341 = vmatprep.subr.mxu0 0.0
        %2342 = vmatpush1.msra.mxu0 %v259
        %2343 = vmatprep.subr.mxu0 0.0
        %2344 = vmatpush1.msra.mxu0 %v260
        %2345 = vmatprep.subr.mxu0 0.0
        %2346 = vmatpush1.msra.mxu0 %v261
        %2347 = vmatprep.subr.mxu0 0.0
        %2348 = vmatpush1.msra.mxu0 %v262
        %2349 = vmatprep.subr.mxu0 0.0
        %2350 = vmatpush1.msra.mxu0 %v263
        %2351 = vmatprep.subr.mxu0 0.0
        %2352 = vmatpush1.msra.mxu0 %v264
        %2353 = vmatprep.subr.mxu0 0.0
        %2354 = vmatpush1.msra.mxu0 %v265
        %2355 = vmatprep.subr.mxu0 0.0
        %2356 = vmatpush1.msra.mxu0 %v266
        %2357 = vmatprep.subr.mxu0 0.0
        %2358 = vmatpush1.msra.mxu0 %v267
        %2359 = vmatprep.subr.mxu0 0.0
        %2360 = vmatpush1.msra.mxu0 %v268
        %2361 = vmatprep.subr.mxu0 0.0
        %2362 = vmatpush1.msra.mxu0 %v269
        %2363 = vmatprep.subr.mxu0 0.0
        %2364 = vmatpush1.msra.mxu0 %v270
        %2365 = vmatprep.subr.mxu0 0.0
        %2366 = vmatpush1.msra.mxu0 %v271
        %2367 = vmatprep.subr.mxu0 0.0
        %2368 = vmatpush1.msra.mxu0 %v272
        %2369 = vmatprep.subr.mxu0 0.0
        %2370 = vmatpush1.msra.mxu0 %v273
        %2371 = vmatprep.subr.mxu0 0.0
        %2372 = vmatpush1.msra.mxu0 %v274
        %2373 = vmatprep.subr.mxu0 0.0
        %2374 = vmatpush1.msra.mxu0 %v275
        %2375 = vmatprep.subr.mxu0 0.0
        %2376 = vmatpush1.msra.mxu0 %v276
        %2377 = vmatprep.subr.mxu0 0.0
        %2378 = vmatpush1.msra.mxu0 %v277
        %2379 = vmatprep.subr.mxu0 0.0
        %2380 = vmatpush1.msra.mxu0 %v278
        %2381 = vmatprep.subr.mxu0 0.0
        %2382 = vmatpush1.msra.mxu0 %v279
        %2383 = vmatprep.subr.mxu0 0.0
        %2384 = vmatpush1.msra.mxu0 %v280
        %2385 = vmatprep.subr.mxu0 0.0
        %2386 = vmatpush1.msra.mxu0 %v281
        %2387 = vmatprep.subr.mxu0 0.0
        %2388 = vmatpush1.msra.mxu0 %v282
        %2389 = vmatprep.subr.mxu0 0.0
        %2390 = vmatpush1.msra.mxu0 %v283
        %2391 = vmatprep.subr.mxu0 0.0
        %2392 = vmatpush1.msra.mxu0 %v284
        %2393 = vmatprep.subr.mxu0 0.0
        %2394 = vmatpush1.msra.mxu0 %v285
        %2395 = vmatprep.mubr.f32.mxu0 %v2316
        %2396 = vmatmul.mubr.f32.gmra.mrb[0].mxu0 %v2315
        %v2397 = vpop.f32.mrb[0].mxu0
        %v2398 = vadd.f32 0.0, %v2397
        %v2399 = vpop.f32.mrb[0].mxu0
        %2400 = vmatprep.mubr.f32.mxu0 %v2318
        %2401 = vmatmul.mubr.f32.gmra.mrb[0].mxu0 %v2317
        %v2402 = vpop.f32.mrb[0].mxu0
        %v2403 = vadd.f32 0.0, %v2402
        %v2404 = vpop.f32.mrb[0].mxu0
        %2405 = vmatprep.mubr.f32.mxu0 %v2320
        %2406 = vmatmul.mubr.f32.gmra.mrb[0].mxu0 %v2319
        %v2407 = vpop.f32.mrb[0].mxu0
        %v2408 = vadd.f32 0.0, %v2407
        %v2409 = vpop.f32.mrb[0].mxu0
        %2410 = vmatprep.mubr.f32.mxu0 %v2322
        %2411 = vmatmul.mubr.f32.gmra.mrb[0].mxu0 %v2321
        %v2412 = vpop.f32.mrb[0].mxu0
        %v2413 = vadd.f32 0.0, %v2412
        %v2414 = vpop.f32.mrb[0].mxu0
        %2415 = vmatprep.mubr.f32.mxu0 %v2324
        %2416 = vmatmul.mubr.f32.gmra.mrb[0].mxu0 %v2323
        %v2417 = vpop.f32.mrb[0].mxu0
        %v2418 = vadd.f32 0.0, %v2417
        %v2419 = vpop.f32.mrb[0].mxu0
        %2420 = vmatprep.mubr.f32.mxu0 %v2326
        %2421 = vmatmul.mubr.f32.gmra.mrb[0].mxu0 %v2325
        %v2422 = vpop.f32.mrb[0].mxu0
        %v2423 = vadd.f32 0.0, %v2422
        %v2424 = vpop.f32.mrb[0].mxu0
        %2425 = vmatprep.mubr.f32.mxu0 %v2328
        %2426 = vmatmul.mubr.f32.gmra.mrb[0].mxu0 %v2327
        %v2427 = vpop.f32.mrb[0].mxu0
        %v2428 = vadd.f32 0.0, %v2427
        %v2429 = vpop.f32.mrb[0].mxu0
        %2430 = vmatprep.mubr.f32.mxu0 %v2330
        %2431 = vmatmul.mubr.f32.gmra.mrb[0].mxu0 %v2329
        %v2432 = vpop.f32.mrb[0].mxu0
        %v2433 = vadd.f32 0.0, %v2432
        %v2434 = vpop.f32.mrb[0].mxu0
        %2435 = vdwg.mxu0
        %s2436 = scalar_lea.vmem [#allocation4], 512
        %v2437 = vld [vmem:[%s2436] sm:$0xff]
        %v2438 = vld [vmem:[%s2436 + $0x8] sm:$0xff]
        %v2439 = vld [vmem:[%s2436 + $0x10] sm:$0xff]
        %v2440 = vld [vmem:[%s2436 + $0x18] sm:$0xff]
        %s2441 = scalar_lea.vmem [#allocation4], 576
        %v2442 = vld [vmem:[%s2441] sm:$0xff]
        %v2443 = vld [vmem:[%s2441 + $0x8] sm:$0xff]
        %v2444 = vld [vmem:[%s2441 + $0x10] sm:$0xff]
        %v2445 = vld [vmem:[%s2441 + $0x18] sm:$0xff]
        %s2446 = scalar_lea.vmem [#allocation4], 640
        %v2447 = vld [vmem:[%s2446] sm:$0xff]
        %v2448 = vld [vmem:[%s2446 + $0x8] sm:$0xff]
        %v2449 = vld [vmem:[%s2446 + $0x10] sm:$0xff]
        %v2450 = vld [vmem:[%s2446 + $0x18] sm:$0xff]
        %s2451 = scalar_lea.vmem [#allocation4], 704
        %v2452 = vld [vmem:[%s2451] sm:$0xff]
        %v2453 = vld [vmem:[%s2451 + $0x8] sm:$0xff]
        %v2454 = vld [vmem:[%s2451 + $0x10] sm:$0xff]
        %v2455 = vld [vmem:[%s2451 + $0x18] sm:$0xff]
        %vm2456 = vcmask 523264
        %v2458 = vsel %vm2456, %v2442, 0
        %v2461 = vsel %vm2456, %v2443, 0
        %v2464 = vsel %vm2456, %v2444, 0
        %v2467 = vsel %vm2456, %v2445, 0
        %2469 = vmatprep.subr.mxu0 0.0
        %2470 = vmatpush1.msra.mxu0 %v2398
        %2471 = vmatprep.subr.mxu0 0.0
        %2472 = vmatpush1.msra.mxu0 %v2403
        %2473 = vmatprep.subr.mxu0 0.0
        %2474 = vmatpush1.msra.mxu0 %v2408
        %2475 = vmatprep.subr.mxu0 0.0
        %2476 = vmatpush1.msra.mxu0 %v2413
        %2477 = vmatprep.subr.mxu0 0.0
        %2478 = vmatpush1.msra.mxu0 %v2418
        %2479 = vmatprep.subr.mxu0 0.0
        %2480 = vmatpush1.msra.mxu0 %v2423
        %2481 = vmatprep.subr.mxu0 0.0
        %2482 = vmatpush1.msra.mxu0 %v2428
        %2483 = vmatprep.subr.mxu0 0.0
        %2484 = vmatpush1.msra.mxu0 %v2433
        %2485 = vmatprep.subr.mxu0 0.0
        %2486 = vmatpush1.msra.mxu0 0.0
        %2487 = vmatprep.subr.mxu0 0.0
        %2488 = vmatpush1.msra.mxu0 0.0
        %2489 = vmatprep.subr.mxu0 0.0
        %2490 = vmatpush1.msra.mxu0 0.0
        %2491 = vmatprep.subr.mxu0 0.0
        %2492 = vmatpush1.msra.mxu0 0.0
        %2493 = vmatprep.subr.mxu0 0.0
        %2494 = vmatpush1.msra.mxu0 0.0
        %2495 = vmatprep.subr.mxu0 0.0
        %2496 = vmatpush1.msra.mxu0 0.0
        %2497 = vmatprep.subr.mxu0 0.0
        %2498 = vmatpush1.msra.mxu0 0.0
        %2499 = vmatprep.subr.mxu0 0.0
        %2500 = vmatpush1.msra.mxu0 0.0
        %2501 = vmatprep.subr.mxu0 0.0
        %2502 = vmatpush1.msra.mxu0 0.0
        %2503 = vmatprep.subr.mxu0 0.0
        %2504 = vmatpush1.msra.mxu0 0.0
        %2505 = vmatprep.subr.mxu0 0.0
        %2506 = vmatpush1.msra.mxu0 0.0
        %2507 = vmatprep.subr.mxu0 0.0
        %2508 = vmatpush1.msra.mxu0 0.0
        %2509 = vmatprep.subr.mxu0 0.0
        %2510 = vmatpush1.msra.mxu0 0.0
        %2511 = vmatprep.subr.mxu0 0.0
        %2512 = vmatpush1.msra.mxu0 0.0
        %2513 = vmatprep.subr.mxu0 0.0
        %2514 = vmatpush1.msra.mxu0 0.0
        %2515 = vmatprep.subr.mxu0 0.0
        %2516 = vmatpush1.msra.mxu0 0.0
        %2517 = vmatprep.subr.mxu0 0.0
        %2518 = vmatpush1.msra.mxu0 0.0
        %2519 = vmatprep.subr.mxu0 0.0
        %2520 = vmatpush1.msra.mxu0 0.0
        %2521 = vmatprep.subr.mxu0 0.0
        %2522 = vmatpush1.msra.mxu0 0.0
        %2523 = vmatprep.subr.mxu0 0.0
        %2524 = vmatpush1.msra.mxu0 0.0
        %2525 = vmatprep.subr.mxu0 0.0
        %2526 = vmatpush1.msra.mxu0 0.0
        %2527 = vmatprep.subr.mxu0 0.0
        %2528 = vmatpush1.msra.mxu0 0.0
        %2529 = vmatprep.subr.mxu0 0.0
        %2530 = vmatpush1.msra.mxu0 0.0
        %2531 = vmatprep.subr.mxu0 0.0
        %2532 = vmatpush1.msra.mxu0 0.0
        %2533 = vmatprep.mubr.f32.mxu0 0.0
        %2534 = vmatmul.mubr.f32.gmra.mrb[0].mxu0 %v2458
        %v2535 = vpop.f32.mrb[0].mxu0
        %v2536 = vadd.f32 0.0, %v2535
        %v2537 = vpop.f32.mrb[0].mxu0
        %2538 = vmatprep.mubr.f32.mxu0 0.0
        %2539 = vmatmul.mubr.f32.gmra.mrb[0].mxu0 %v2461
        %v2540 = vpop.f32.mrb[0].mxu0
        %v2541 = vadd.f32 0.0, %v2540
        %v2542 = vpop.f32.mrb[0].mxu0
        %2543 = vmatprep.mubr.f32.mxu0 0.0
        %2544 = vmatmul.mubr.f32.gmra.mrb[0].mxu0 %v2464
        %v2545 = vpop.f32.mrb[0].mxu0
        %v2546 = vadd.f32 0.0, %v2545
        %v2547 = vpop.f32.mrb[0].mxu0
        %2548 = vmatprep.mubr.f32.mxu0 0.0
        %2549 = vmatmul.mubr.f32.gmra.mrb[0].mxu0 %v2467
        %v2550 = vpop.f32.mrb[0].mxu0
        %v2551 = vadd.f32 0.0, %v2550
        %v2552 = vpop.f32.mrb[0].mxu0
        %2553 = vdwg.mxu0
        %2562 = vrot.lane.b32.xlu0 %v2398, 112
        %v2563 = vpop.permute.xlu0 %2562
        %2564 = vrot.lane.b32.xlu0 %v2403, 112
        %v2565 = vpop.permute.xlu0 %2564
        %2566 = vrot.lane.b32.xlu0 %v2408, 112
        %v2567 = vpop.permute.xlu0 %2566
        %2568 = vrot.lane.b32.xlu0 %v2413, 112
        %v2569 = vpop.permute.xlu0 %2568
        %2570 = vrot.lane.b32.xlu0 %v2418, 112
        %v2571 = vpop.permute.xlu0 %2570
        %2572 = vrot.lane.b32.xlu0 %v2423, 112
        %v2573 = vpop.permute.xlu0 %2572
        %2574 = vrot.lane.b32.xlu0 %v2428, 112
        %v2575 = vpop.permute.xlu0 %2574
        %2576 = vrot.lane.b32.xlu0 %v2433, 112
        %v2577 = vpop.permute.xlu0 %2576
        %v2587 = vsel %vm2456, %v2447, 0
        %v2590 = vsel %vm2456, %v2448, 0
        %v2593 = vsel %vm2456, %v2449, 0
        %v2596 = vsel %vm2456, %v2450, 0
        %2598 = vmatprep.subr.mxu0 0.0
        %2599 = vmatpush1.msra.mxu0 %v2563
        %2600 = vmatprep.subr.mxu0 0.0
        %2601 = vmatpush1.msra.mxu0 %v2565
        %2602 = vmatprep.subr.mxu0 0.0
        %2603 = vmatpush1.msra.mxu0 %v2567
        %2604 = vmatprep.subr.mxu0 0.0
        %2605 = vmatpush1.msra.mxu0 %v2569
        %2606 = vmatprep.subr.mxu0 0.0
        %2607 = vmatpush1.msra.mxu0 %v2571
        %2608 = vmatprep.subr.mxu0 0.0
        %2609 = vmatpush1.msra.mxu0 %v2573
        %2610 = vmatprep.subr.mxu0 0.0
        %2611 = vmatpush1.msra.mxu0 %v2575
        %2612 = vmatprep.subr.mxu0 0.0
        %2613 = vmatpush1.msra.mxu0 %v2577
        %2614 = vmatprep.subr.mxu0 0.0
        %2615 = vmatpush1.msra.mxu0 0.0
        %2616 = vmatprep.subr.mxu0 0.0
        %2617 = vmatpush1.msra.mxu0 0.0
        %2618 = vmatprep.subr.mxu0 0.0
        %2619 = vmatpush1.msra.mxu0 0.0
        %2620 = vmatprep.subr.mxu0 0.0
        %2621 = vmatpush1.msra.mxu0 0.0
        %2622 = vmatprep.subr.mxu0 0.0
        %2623 = vmatpush1.msra.mxu0 0.0
        %2624 = vmatprep.subr.mxu0 0.0
        %2625 = vmatpush1.msra.mxu0 0.0
        %2626 = vmatprep.subr.mxu0 0.0
        %2627 = vmatpush1.msra.mxu0 0.0
        %2628 = vmatprep.subr.mxu0 0.0
        %2629 = vmatpush1.msra.mxu0 0.0
        %2630 = vmatprep.subr.mxu0 0.0
        %2631 = vmatpush1.msra.mxu0 0.0
        %2632 = vmatprep.subr.mxu0 0.0
        %2633 = vmatpush1.msra.mxu0 0.0
        %2634 = vmatprep.subr.mxu0 0.0
        %2635 = vmatpush1.msra.mxu0 0.0
        %2636 = vmatprep.subr.mxu0 0.0
        %2637 = vmatpush1.msra.mxu0 0.0
        %2638 = vmatprep.subr.mxu0 0.0
        %2639 = vmatpush1.msra.mxu0 0.0
        %2640 = vmatprep.subr.mxu0 0.0
        %2641 = vmatpush1.msra.mxu0 0.0
        %2642 = vmatprep.subr.mxu0 0.0
        %2643 = vmatpush1.msra.mxu0 0.0
        %2644 = vmatprep.subr.mxu0 0.0
        %2645 = vmatpush1.msra.mxu0 0.0
        %2646 = vmatprep.subr.mxu0 0.0
        %2647 = vmatpush1.msra.mxu0 0.0
        %2648 = vmatprep.subr.mxu0 0.0
        %2649 = vmatpush1.msra.mxu0 0.0
        %2650 = vmatprep.subr.mxu0 0.0
        %2651 = vmatpush1.msra.mxu0 0.0
        %2652 = vmatprep.subr.mxu0 0.0
        %2653 = vmatpush1.msra.mxu0 0.0
        %2654 = vmatprep.subr.mxu0 0.0
        %2655 = vmatpush1.msra.mxu0 0.0
        %2656 = vmatprep.subr.mxu0 0.0
        %2657 = vmatpush1.msra.mxu0 0.0
        %2658 = vmatprep.subr.mxu0 0.0
        %2659 = vmatpush1.msra.mxu0 0.0
        %2660 = vmatprep.subr.mxu0 0.0
        %2661 = vmatpush1.msra.mxu0 0.0
        %2662 = vmatprep.mubr.f32.mxu0 0.0
        %2663 = vmatmul.mubr.f32.gmra.mrb[0].mxu0 %v2587
        %v2664 = vpop.f32.mrb[0].mxu0
        %v2665 = vadd.f32 0.0, %v2664
        %v2666 = vpop.f32.mrb[0].mxu0
        %2667 = vmatprep.mubr.f32.mxu0 0.0
        %2668 = vmatmul.mubr.f32.gmra.mrb[0].mxu0 %v2590
        %v2669 = vpop.f32.mrb[0].mxu0
        %v2670 = vadd.f32 0.0, %v2669
        %v2671 = vpop.f32.mrb[0].mxu0
        %2672 = vmatprep.mubr.f32.mxu0 0.0
        %2673 = vmatmul.mubr.f32.gmra.mrb[0].mxu0 %v2593
        %v2674 = vpop.f32.mrb[0].mxu0
        %v2675 = vadd.f32 0.0, %v2674
        %v2676 = vpop.f32.mrb[0].mxu0
        %2677 = vmatprep.mubr.f32.mxu0 0.0
        %2678 = vmatmul.mubr.f32.gmra.mrb[0].mxu0 %v2596
        %v2679 = vpop.f32.mrb[0].mxu0
        %v2680 = vadd.f32 0.0, %v2679
        %v2681 = vpop.f32.mrb[0].mxu0
        %2682 = vdwg.mxu0
        %2683 = vrot.lane.b32.xlu0 %v2398, 96
        %v2684 = vpop.permute.xlu0 %2683
        %2685 = vrot.lane.b32.xlu0 %v2403, 96
        %v2686 = vpop.permute.xlu0 %2685
        %2687 = vrot.lane.b32.xlu0 %v2408, 96
        %v2688 = vpop.permute.xlu0 %2687
        %2689 = vrot.lane.b32.xlu0 %v2413, 96
        %v2690 = vpop.permute.xlu0 %2689
        %2691 = vrot.lane.b32.xlu0 %v2418, 96
        %v2692 = vpop.permute.xlu0 %2691
        %2693 = vrot.lane.b32.xlu0 %v2423, 96
        %v2694 = vpop.permute.xlu0 %2693
        %2695 = vrot.lane.b32.xlu0 %v2428, 96
        %v2696 = vpop.permute.xlu0 %2695
        %2697 = vrot.lane.b32.xlu0 %v2433, 96
        %v2698 = vpop.permute.xlu0 %2697
        %2711 = vrot.lane.b32.xlu0 %v952, 122
        %v2712 = vpop.permute.xlu0 %2711
        %2713 = vrot.lane.b32.xlu0 %v953, 122
        %v2714 = vpop.permute.xlu0 %2713
        %2715 = vrot.lane.b32.xlu0 %v954, 122
        %v2716 = vpop.permute.xlu0 %2715
        %2717 = vrot.lane.b32.xlu0 %v955, 122
        %v2718 = vpop.permute.xlu0 %2717
        %v2724 = vsel %vm2456, %v2452, 0
        %v2727 = vsel %vm2456, %v2453, 0
        %v2730 = vsel %vm2456, %v2454, 0
        %v2733 = vsel %vm2456, %v2455, 0
        %2735 = vmatprep.subr.mxu0 0.0
        %2736 = vmatpush1.msra.mxu0 %v2684
        %2737 = vmatprep.subr.mxu0 0.0
        %2738 = vmatpush1.msra.mxu0 %v2686
        %2739 = vmatprep.subr.mxu0 0.0
        %2740 = vmatpush1.msra.mxu0 %v2688
        %2741 = vmatprep.subr.mxu0 0.0
        %2742 = vmatpush1.msra.mxu0 %v2690
        %2743 = vmatprep.subr.mxu0 0.0
        %2744 = vmatpush1.msra.mxu0 %v2692
        %2745 = vmatprep.subr.mxu0 0.0
        %2746 = vmatpush1.msra.mxu0 %v2694
        %2747 = vmatprep.subr.mxu0 0.0
        %2748 = vmatpush1.msra.mxu0 %v2696
        %2749 = vmatprep.subr.mxu0 0.0
        %2750 = vmatpush1.msra.mxu0 %v2698
        %2751 = vmatprep.subr.mxu0 0.0
        %2752 = vmatpush1.msra.mxu0 0.0
        %2753 = vmatprep.subr.mxu0 0.0
        %2754 = vmatpush1.msra.mxu0 0.0
        %2755 = vmatprep.subr.mxu0 0.0
        %2756 = vmatpush1.msra.mxu0 0.0
        %2757 = vmatprep.subr.mxu0 0.0
        %2758 = vmatpush1.msra.mxu0 0.0
        %2759 = vmatprep.subr.mxu0 0.0
        %2760 = vmatpush1.msra.mxu0 0.0
        %2761 = vmatprep.subr.mxu0 0.0
        %2762 = vmatpush1.msra.mxu0 0.0
        %2763 = vmatprep.subr.mxu0 0.0
        %2764 = vmatpush1.msra.mxu0 0.0
        %2765 = vmatprep.subr.mxu0 0.0
        %2766 = vmatpush1.msra.mxu0 0.0
        %2767 = vmatprep.subr.mxu0 0.0
        %2768 = vmatpush1.msra.mxu0 0.0
        %2769 = vmatprep.subr.mxu0 0.0
        %2770 = vmatpush1.msra.mxu0 0.0
        %2771 = vmatprep.subr.mxu0 0.0
        %2772 = vmatpush1.msra.mxu0 0.0
        %2773 = vmatprep.subr.mxu0 0.0
        %2774 = vmatpush1.msra.mxu0 0.0
        %2775 = vmatprep.subr.mxu0 0.0
        %2776 = vmatpush1.msra.mxu0 0.0
        %2777 = vmatprep.subr.mxu0 0.0
        %2778 = vmatpush1.msra.mxu0 0.0
        %2779 = vmatprep.subr.mxu0 0.0
        %2780 = vmatpush1.msra.mxu0 0.0
        %2781 = vmatprep.subr.mxu0 0.0
        %2782 = vmatpush1.msra.mxu0 0.0
        %2783 = vmatprep.subr.mxu0 0.0
        %2784 = vmatpush1.msra.mxu0 0.0
        %2785 = vmatprep.subr.mxu0 0.0
        %2786 = vmatpush1.msra.mxu0 0.0
        %2787 = vmatprep.subr.mxu0 0.0
        %2788 = vmatpush1.msra.mxu0 0.0
        %2789 = vmatprep.subr.mxu0 0.0
        %2790 = vmatpush1.msra.mxu0 0.0
        %2791 = vmatprep.subr.mxu0 0.0
        %2792 = vmatpush1.msra.mxu0 0.0
        %2793 = vmatprep.subr.mxu0 0.0
        %2794 = vmatpush1.msra.mxu0 0.0
        %2795 = vmatprep.subr.mxu0 0.0
        %2796 = vmatpush1.msra.mxu0 0.0
        %2797 = vmatprep.subr.mxu0 0.0
        %2798 = vmatpush1.msra.mxu0 0.0
        %2799 = vmatprep.mubr.f32.mxu0 0.0
        %2800 = vmatmul.mubr.f32.gmra.mrb[0].mxu0 %v2724
        %v2801 = vpop.f32.mrb[0].mxu0
        %v2802 = vadd.f32 %v2712, %v2801
        %v2803 = vpop.f32.mrb[0].mxu0
        %2804 = vmatprep.mubr.f32.mxu0 0.0
        %2805 = vmatmul.mubr.f32.gmra.mrb[0].mxu0 %v2727
        %v2806 = vpop.f32.mrb[0].mxu0
        %v2807 = vadd.f32 %v2714, %v2806
        %v2808 = vpop.f32.mrb[0].mxu0
        %2809 = vmatprep.mubr.f32.mxu0 0.0
        %2810 = vmatmul.mubr.f32.gmra.mrb[0].mxu0 %v2730
        %v2811 = vpop.f32.mrb[0].mxu0
        %v2812 = vadd.f32 %v2716, %v2811
        %v2813 = vpop.f32.mrb[0].mxu0
        %2814 = vmatprep.mubr.f32.mxu0 0.0
        %2815 = vmatmul.mubr.f32.gmra.mrb[0].mxu0 %v2733
        %v2816 = vpop.f32.mrb[0].mxu0
        %v2817 = vadd.f32 %v2718, %v2816
        %v2818 = vpop.f32.mrb[0].mxu0
        %2819 = vdwg.mxu0
        %2824 = vrot.lane.b32.xlu0 %v2665, 16
        %v2825 = vpop.permute.xlu0 %2824
        %2826 = vrot.lane.b32.xlu0 %v2670, 16
        %v2827 = vpop.permute.xlu0 %2826
        %2828 = vrot.lane.b32.xlu0 %v2675, 16
        %v2829 = vpop.permute.xlu0 %2828
        %2830 = vrot.lane.b32.xlu0 %v2680, 16
        %v2831 = vpop.permute.xlu0 %2830
        %2840 = vrot.lane.b32.xlu0 %v2802, 32
        %v2841 = vpop.permute.xlu0 %2840
        %2842 = vrot.lane.b32.xlu0 %v2807, 32
        %v2843 = vpop.permute.xlu0 %2842
        %2844 = vrot.lane.b32.xlu0 %v2812, 32
        %v2845 = vpop.permute.xlu0 %2844
        %2846 = vrot.lane.b32.xlu0 %v2817, 32
        %v2847 = vpop.permute.xlu0 %2846
        %v2852 = vsel %vm718, %v2536, %v2825
        %v2853 = vsel %vm718, %v2541, %v2827
        %v2854 = vsel %vm718, %v2546, %v2829
        %v2855 = vsel %vm718, %v2551, %v2831
        %v2856 = vsel %vm723, %v2852, %v2841
        %v2857 = vsel %vm723, %v2853, %v2843
        %v2858 = vsel %vm723, %v2854, %v2845
        %v2859 = vsel %vm723, %v2855, %v2847
        %v2861 = vsel %vm738, %v2856, 0
        %v2864 = vsel %vm738, %v2857, 0
        %v2867 = vsel %vm738, %v2858, 0
        %v2870 = vsel %vm738, %v2859, 0
        %2872 = vmatprep.subr.mxu0 %v729
        %2873 = vmatpush1.msra.mxu0 %v728
        %2874 = vmatprep.subr.mxu0 %v731
        %2875 = vmatpush1.msra.mxu0 %v730
        %2876 = vmatprep.subr.mxu0 %v733
        %2877 = vmatpush1.msra.mxu0 %v732
        %2878 = vmatprep.subr.mxu0 %v735
        %2879 = vmatpush1.msra.mxu0 %v734
        %2880 = vmatprep.subr.mxu0 %v756
        %2881 = vmatpush1.msra.mxu0 %v753
        %2882 = vmatprep.subr.mxu0 0.0
        %2883 = vmatpush1.msra.mxu0 0.0
        %2884 = vmatprep.subr.mxu0 0.0
        %2885 = vmatpush1.msra.mxu0 0.0
        %2886 = vmatprep.subr.mxu0 0.0
        %2887 = vmatpush1.msra.mxu0 0.0
        %2888 = vmatprep.subr.mxu0 0.0
        %2889 = vmatpush1.msra.mxu0 0.0
        %2890 = vmatprep.subr.mxu0 0.0
        %2891 = vmatpush1.msra.mxu0 0.0
        %2892 = vmatprep.subr.mxu0 0.0
        %2893 = vmatpush1.msra.mxu0 0.0
        %2894 = vmatprep.subr.mxu0 0.0
        %2895 = vmatpush1.msra.mxu0 0.0
        %2896 = vmatprep.subr.mxu0 0.0
        %2897 = vmatpush1.msra.mxu0 0.0
        %2898 = vmatprep.subr.mxu0 0.0
        %2899 = vmatpush1.msra.mxu0 0.0
        %2900 = vmatprep.subr.mxu0 0.0
        %2901 = vmatpush1.msra.mxu0 0.0
        %2902 = vmatprep.subr.mxu0 0.0
        %2903 = vmatpush1.msra.mxu0 0.0
        %2904 = vmatprep.subr.mxu0 0.0
        %2905 = vmatpush1.msra.mxu0 0.0
        %2906 = vmatprep.subr.mxu0 0.0
        %2907 = vmatpush1.msra.mxu0 0.0
        %2908 = vmatprep.subr.mxu0 0.0
        %2909 = vmatpush1.msra.mxu0 0.0
        %2910 = vmatprep.subr.mxu0 0.0
        %2911 = vmatpush1.msra.mxu0 0.0
        %2912 = vmatprep.subr.mxu0 0.0
        %2913 = vmatpush1.msra.mxu0 0.0
        %2914 = vmatprep.subr.mxu0 0.0
        %2915 = vmatpush1.msra.mxu0 0.0
        %2916 = vmatprep.subr.mxu0 0.0
        %2917 = vmatpush1.msra.mxu0 0.0
        %2918 = vmatprep.subr.mxu0 0.0
        %2919 = vmatpush1.msra.mxu0 0.0
        %2920 = vmatprep.subr.mxu0 0.0
        %2921 = vmatpush1.msra.mxu0 0.0
        %2922 = vmatprep.subr.mxu0 0.0
        %2923 = vmatpush1.msra.mxu0 0.0
        %2924 = vmatprep.subr.mxu0 0.0
        %2925 = vmatpush1.msra.mxu0 0.0
        %2926 = vmatprep.subr.mxu0 0.0
        %2927 = vmatpush1.msra.mxu0 0.0
        %2928 = vmatprep.subr.mxu0 0.0
        %2929 = vmatpush1.msra.mxu0 0.0
        %2930 = vmatprep.subr.mxu0 0.0
        %2931 = vmatpush1.msra.mxu0 0.0
        %2932 = vmatprep.subr.mxu0 0.0
        %2933 = vmatpush1.msra.mxu0 0.0
        %2934 = vmatprep.subr.mxu0 0.0
        %2935 = vmatpush1.msra.mxu0 0.0
        %2936 = vmatprep.mubr.f32.mxu0 0.0
        %2937 = vmatmul.mubr.f32.gmra.mrb[0].mxu0 %v2861
        %v2938 = vpop.f32.mrb[0].mxu0
        %v2939 = vadd.f32 0.0, %v2938
        %v2940 = vpop.f32.mrb[0].mxu0
        %v2941 = vadd.f32 0.0, %v2940
        %2942 = vmatprep.mubr.f32.mxu0 0.0
        %2943 = vmatmul.mubr.f32.gmra.mrb[0].mxu0 %v2864
        %v2944 = vpop.f32.mrb[0].mxu0
        %v2945 = vadd.f32 0.0, %v2944
        %v2946 = vpop.f32.mrb[0].mxu0
        %v2947 = vadd.f32 0.0, %v2946
        %2948 = vmatprep.mubr.f32.mxu0 0.0
        %2949 = vmatmul.mubr.f32.gmra.mrb[0].mxu0 %v2867
        %v2950 = vpop.f32.mrb[0].mxu0
        %v2951 = vadd.f32 0.0, %v2950
        %v2952 = vpop.f32.mrb[0].mxu0
        %v2953 = vadd.f32 0.0, %v2952
        %2954 = vmatprep.mubr.f32.mxu0 0.0
        %2955 = vmatmul.mubr.f32.gmra.mrb[0].mxu0 %v2870
        %v2956 = vpop.f32.mrb[0].mxu0
        %v2957 = vadd.f32 0.0, %v2956
        %v2958 = vpop.f32.mrb[0].mxu0
        %v2959 = vadd.f32 0.0, %v2958
        %2960 = vdwg.mxu0
        %v2962 = vsel %vm2456, %v2437, 0
        %v2965 = vsel %vm2456, %v2438, 0
        %v2968 = vsel %vm2456, %v2439, 0
        %v2971 = vsel %vm2456, %v2440, 0
        %2973 = vmatprep.subr.mxu0 %v2316
        %2974 = vmatpush1.msra.mxu0 %v2315
        %2975 = vmatprep.subr.mxu0 %v2318
        %2976 = vmatpush1.msra.mxu0 %v2317
        %2977 = vmatprep.subr.mxu0 %v2320
        %2978 = vmatpush1.msra.mxu0 %v2319
        %2979 = vmatprep.subr.mxu0 %v2322
        %2980 = vmatpush1.msra.mxu0 %v2321
        %2981 = vmatprep.subr.mxu0 %v2324
        %2982 = vmatpush1.msra.mxu0 %v2323
        %2983 = vmatprep.subr.mxu0 %v2326
        %2984 = vmatpush1.msra.mxu0 %v2325
        %2985 = vmatprep.subr.mxu0 %v2328
        %2986 = vmatpush1.msra.mxu0 %v2327
        %2987 = vmatprep.subr.mxu0 %v2330
        %2988 = vmatpush1.msra.mxu0 %v2329
        %2989 = vmatprep.subr.mxu0 0.0
        %2990 = vmatpush1.msra.mxu0 0.0
        %2991 = vmatprep.subr.mxu0 0.0
        %2992 = vmatpush1.msra.mxu0 0.0
        %2993 = vmatprep.subr.mxu0 0.0
        %2994 = vmatpush1.msra.mxu0 0.0
        %2995 = vmatprep.subr.mxu0 0.0
        %2996 = vmatpush1.msra.mxu0 0.0
        %2997 = vmatprep.subr.mxu0 0.0
        %2998 = vmatpush1.msra.mxu0 0.0
        %2999 = vmatprep.subr.mxu0 0.0
        %3000 = vmatpush1.msra.mxu0 0.0
        %3001 = vmatprep.subr.mxu0 0.0
        %3002 = vmatpush1.msra.mxu0 0.0
        %3003 = vmatprep.subr.mxu0 0.0
        %3004 = vmatpush1.msra.mxu0 0.0
        %3005 = vmatprep.subr.mxu0 0.0
        %3006 = vmatpush1.msra.mxu0 0.0
        %3007 = vmatprep.subr.mxu0 0.0
        %3008 = vmatpush1.msra.mxu0 0.0
        %3009 = vmatprep.subr.mxu0 0.0
        %3010 = vmatpush1.msra.mxu0 0.0
        %3011 = vmatprep.subr.mxu0 0.0
        %3012 = vmatpush1.msra.mxu0 0.0
        %3013 = vmatprep.subr.mxu0 0.0
        %3014 = vmatpush1.msra.mxu0 0.0
        %3015 = vmatprep.subr.mxu0 0.0
        %3016 = vmatpush1.msra.mxu0 0.0
        %3017 = vmatprep.subr.mxu0 0.0
        %3018 = vmatpush1.msra.mxu0 0.0
        %3019 = vmatprep.subr.mxu0 0.0
        %3020 = vmatpush1.msra.mxu0 0.0
        %3021 = vmatprep.subr.mxu0 0.0
        %3022 = vmatpush1.msra.mxu0 0.0
        %3023 = vmatprep.subr.mxu0 0.0
        %3024 = vmatpush1.msra.mxu0 0.0
        %3025 = vmatprep.subr.mxu0 0.0
        %3026 = vmatpush1.msra.mxu0 0.0
        %3027 = vmatprep.subr.mxu0 0.0
        %3028 = vmatpush1.msra.mxu0 0.0
        %3029 = vmatprep.subr.mxu0 0.0
        %3030 = vmatpush1.msra.mxu0 0.0
        %3031 = vmatprep.subr.mxu0 0.0
        %3032 = vmatpush1.msra.mxu0 0.0
        %3033 = vmatprep.subr.mxu0 0.0
        %3034 = vmatpush1.msra.mxu0 0.0
        %3035 = vmatprep.subr.mxu0 0.0
        %3036 = vmatpush1.msra.mxu0 0.0
        %3037 = vmatprep.mubr.f32.mxu0 0.0
        %3038 = vmatmul.mubr.f32.gmra.mrb[0].mxu0 %v2962
        %v3039 = vpop.f32.mrb[0].mxu0
        %v3040 = vadd.f32 %v2939, %v3039
        %v3041 = vpop.f32.mrb[0].mxu0
        %v3042 = vadd.f32 %v2941, %v3041
        %3043 = vmatprep.mubr.f32.mxu0 0.0
        %3044 = vmatmul.mubr.f32.gmra.mrb[0].mxu0 %v2965
        %v3045 = vpop.f32.mrb[0].mxu0
        %v3046 = vadd.f32 %v2945, %v3045
        %v3047 = vpop.f32.mrb[0].mxu0
        %v3048 = vadd.f32 %v2947, %v3047
        %3049 = vmatprep.mubr.f32.mxu0 0.0
        %3050 = vmatmul.mubr.f32.gmra.mrb[0].mxu0 %v2968
        %v3051 = vpop.f32.mrb[0].mxu0
        %v3052 = vadd.f32 %v2951, %v3051
        %v3053 = vpop.f32.mrb[0].mxu0
        %v3054 = vadd.f32 %v2953, %v3053
        %3055 = vmatprep.mubr.f32.mxu0 0.0
        %3056 = vmatmul.mubr.f32.gmra.mrb[0].mxu0 %v2971
        %v3057 = vpop.f32.mrb[0].mxu0
        %v3058 = vadd.f32 %v2957, %v3057
        %v3059 = vpop.f32.mrb[0].mxu0
        %v3060 = vadd.f32 %v2959, %v3059
        %3061 = vdwg.mxu0
        %v3062 = vadd.f32 %v3040, %v3042
        %3063 = vadd.xlane.f32.xlu0 %v3062
        %v3064 = vpop.xlane.xlu0 %3063
        %v3065 = vadd.f32 %v3046, %v3048
        %3066 = vadd.xlane.f32.xlu0 %v3065
        %v3067 = vpop.xlane.xlu0 %3066
        %v3068 = vadd.f32 %v3052, %v3054
        %3069 = vadd.xlane.f32.xlu0 %v3068
        %v3070 = vpop.xlane.xlu0 %3069
        %v3071 = vadd.f32 %v3058, %v3060
        %3072 = vadd.xlane.f32.xlu0 %v3071
        %v3073 = vpop.xlane.xlu0 %3072
        %v3074 = vmul.f32 %v3064, %v968
        %v3075 = vmul.f32 %v3067, %v968
        %v3076 = vmul.f32 %v3070, %v968
        %v3077 = vmul.f32 %v3073, %v968
        %v3078 = vmul.f32 %v3040, %v3040
        %v3079 = vmul.f32 %v3042, %v3042
        %v3080 = vmul.f32 %v3046, %v3046
        %v3081 = vmul.f32 %v3048, %v3048
        %v3082 = vmul.f32 %v3052, %v3052
        %v3083 = vmul.f32 %v3054, %v3054
        %v3084 = vmul.f32 %v3058, %v3058
        %v3085 = vmul.f32 %v3060, %v3060
        %v3086 = vadd.f32 %v3078, %v3079
        %3087 = vadd.xlane.f32.xlu0 %v3086
        %v3088 = vpop.xlane.xlu0 %3087
        %v3089 = vadd.f32 %v3080, %v3081
        %3090 = vadd.xlane.f32.xlu0 %v3089
        %v3091 = vpop.xlane.xlu0 %3090
        %v3092 = vadd.f32 %v3082, %v3083
        %3093 = vadd.xlane.f32.xlu0 %v3092
        %v3094 = vpop.xlane.xlu0 %3093
        %v3095 = vadd.f32 %v3084, %v3085
        %3096 = vadd.xlane.f32.xlu0 %v3095
        %v3097 = vpop.xlane.xlu0 %3096
        %v3098 = vmul.f32 %v3088, %v968
        %v3099 = vmul.f32 %v3091, %v968
        %v3100 = vmul.f32 %v3094, %v968
        %v3101 = vmul.f32 %v3097, %v968
        %v3102 = vmul.f32 %v3074, %v3074
        %v3103 = vmul.f32 %v3075, %v3075
        %v3104 = vmul.f32 %v3076, %v3076
        %v3105 = vmul.f32 %v3077, %v3077
        %v3106 = vsub.f32 %v3098, %v3102
        %v3107 = vsub.f32 %v3099, %v3103
        %v3108 = vsub.f32 %v3100, %v3104
        %v3109 = vsub.f32 %v3101, %v3105
        %v3110 = vadd.f32 %v3106, 1e-05
        %v3111 = vadd.f32 %v3107, 1e-05
        %v3112 = vadd.f32 %v3108, 1e-05
        %v3113 = vadd.f32 %v3109, 1e-05
        %v3114 = vrsqrt.pop %v3110
        %v3115 = vrsqrt.pop %v3111
        %v3116 = vrsqrt.pop %v3112
        %v3117 = vrsqrt.pop %v3113
        %v3118 = vmul.f32 %v952, %v3114
        %v3119 = vmul.f32 %v953, %v3115
        %v3120 = vmul.f32 %v954, %v3116
        %v3121 = vmul.f32 %v955, %v3117
        %v3122 = vmul.f32 %v3074, %v3118
        %v3123 = vmul.f32 %v3075, %v3119
        %v3124 = vmul.f32 %v3076, %v3120
        %v3125 = vmul.f32 %v3077, %v3121
        %3130 = vrot.lane.b32.xlu0 %v3122, 1
        %v3131 = vpop.permute.xlu0 %3130
        %3132 = vrot.lane.b32.xlu0 %v3123, 1
        %v3133 = vpop.permute.xlu0 %3132
        %3134 = vrot.lane.b32.xlu0 %v3124, 1
        %v3135 = vpop.permute.xlu0 %3134
        %3136 = vrot.lane.b32.xlu0 %v3125, 1
        %v3137 = vpop.permute.xlu0 %3136
        %v3142 = vsub.f32 %v952, %v3131
        %v3143 = vsub.f32 %v953, %v3133
        %v3144 = vsub.f32 %v954, %v3135
        %v3145 = vsub.f32 %v955, %v3137
        %3147 = vset.pattern.permute.xlu0 7
        %3148 = vperm.xlu0 %3147, %v3118
        %v3149 = vpop.permute.xlu0 %3148
        %3152 = vset.pattern.permute.xlu0 7
        %3153 = vperm.xlu0 %3152, %v3119
        %v3154 = vpop.permute.xlu0 %3153
        %3157 = vset.pattern.permute.xlu0 7
        %3158 = vperm.xlu0 %3157, %v3120
        %v3159 = vpop.permute.xlu0 %3158
        %3162 = vset.pattern.permute.xlu0 7
        %3163 = vperm.xlu0 %3162, %v3121
        %v3164 = vpop.permute.xlu0 %3163
        %v3166 = vmul.f32 %v3040, %v3149
        %v3167 = vmul.f32 %v3042, %v3149
        %v3168 = vmul.f32 %v3046, %v3154
        %v3169 = vmul.f32 %v3048, %v3154
        %v3170 = vmul.f32 %v3052, %v3159
        %v3171 = vmul.f32 %v3054, %v3159
        %v3172 = vmul.f32 %v3058, %v3164
        %v3173 = vmul.f32 %v3060, %v3164
        %3175 = vset.pattern.permute.xlu0 8
        %3176 = vperm.xlu0 %3175, %v3142
        %v3177 = vpop.permute.xlu0 %3176
        %3180 = vset.pattern.permute.xlu0 8
        %3181 = vperm.xlu0 %3180, %v3143
        %v3182 = vpop.permute.xlu0 %3181
        %3185 = vset.pattern.permute.xlu0 8
        %3186 = vperm.xlu0 %3185, %v3144
        %v3187 = vpop.permute.xlu0 %3186
        %3190 = vset.pattern.permute.xlu0 8
        %3191 = vperm.xlu0 %3190, %v3145
        %v3192 = vpop.permute.xlu0 %3191
        %v3194 = vadd.f32 %v3166, %v3177
        %v3195 = vadd.f32 %v3167, %v3177
        %v3196 = vadd.f32 %v3168, %v3182
        %v3197 = vadd.f32 %v3169, %v3182
        %v3198 = vadd.f32 %v3170, %v3187
        %v3199 = vadd.f32 %v3171, %v3187
        %v3200 = vadd.f32 %v3172, %v3192
        %v3201 = vadd.f32 %v3173, %v3192
        %v3202 = vmax.f32 %v3194, 0.0
        %v3203 = vmax.f32 %v3195, 0.0
        %v3204 = vmax.f32 %v3196, 0.0
        %v3205 = vmax.f32 %v3197, 0.0
        %v3206 = vmax.f32 %v3198, 0.0
        %v3207 = vmax.f32 %v3199, 0.0
        %v3208 = vmax.f32 %v3200, 0.0
        %v3209 = vmax.f32 %v3201, 0.0
        %3210 = vmatprep.subr.mxu0 0.0
        %3211 = vmatpush1.msra.mxu0 %v254
        %3212 = vmatprep.subr.mxu0 0.0
        %3213 = vmatpush1.msra.mxu0 %v255
        %3214 = vmatprep.subr.mxu0 0.0
        %3215 = vmatpush1.msra.mxu0 %v256
        %3216 = vmatprep.subr.mxu0 0.0
        %3217 = vmatpush1.msra.mxu0 %v257
        %3218 = vmatprep.subr.mxu0 0.0
        %3219 = vmatpush1.msra.mxu0 %v258
        %3220 = vmatprep.subr.mxu0 0.0
        %3221 = vmatpush1.msra.mxu0 %v259
        %3222 = vmatprep.subr.mxu0 0.0
        %3223 = vmatpush1.msra.mxu0 %v260
        %3224 = vmatprep.subr.mxu0 0.0
        %3225 = vmatpush1.msra.mxu0 %v261
        %3226 = vmatprep.subr.mxu0 0.0
        %3227 = vmatpush1.msra.mxu0 %v262
        %3228 = vmatprep.subr.mxu0 0.0
        %3229 = vmatpush1.msra.mxu0 %v263
        %3230 = vmatprep.subr.mxu0 0.0
        %3231 = vmatpush1.msra.mxu0 %v264
        %3232 = vmatprep.subr.mxu0 0.0
        %3233 = vmatpush1.msra.mxu0 %v265
        %3234 = vmatprep.subr.mxu0 0.0
        %3235 = vmatpush1.msra.mxu0 %v266
        %3236 = vmatprep.subr.mxu0 0.0
        %3237 = vmatpush1.msra.mxu0 %v267
        %3238 = vmatprep.subr.mxu0 0.0
        %3239 = vmatpush1.msra.mxu0 %v268
        %3240 = vmatprep.subr.mxu0 0.0
        %3241 = vmatpush1.msra.mxu0 %v269
        %3242 = vmatprep.subr.mxu0 0.0
        %3243 = vmatpush1.msra.mxu0 %v270
        %3244 = vmatprep.subr.mxu0 0.0
        %3245 = vmatpush1.msra.mxu0 %v271
        %3246 = vmatprep.subr.mxu0 0.0
        %3247 = vmatpush1.msra.mxu0 %v272
        %3248 = vmatprep.subr.mxu0 0.0
        %3249 = vmatpush1.msra.mxu0 %v273
        %3250 = vmatprep.subr.mxu0 0.0
        %3251 = vmatpush1.msra.mxu0 %v274
        %3252 = vmatprep.subr.mxu0 0.0
        %3253 = vmatpush1.msra.mxu0 %v275
        %3254 = vmatprep.subr.mxu0 0.0
        %3255 = vmatpush1.msra.mxu0 %v276
        %3256 = vmatprep.subr.mxu0 0.0
        %3257 = vmatpush1.msra.mxu0 %v277
        %3258 = vmatprep.subr.mxu0 0.0
        %3259 = vmatpush1.msra.mxu0 %v278
        %3260 = vmatprep.subr.mxu0 0.0
        %3261 = vmatpush1.msra.mxu0 %v279
        %3262 = vmatprep.subr.mxu0 0.0
        %3263 = vmatpush1.msra.mxu0 %v280
        %3264 = vmatprep.subr.mxu0 0.0
        %3265 = vmatpush1.msra.mxu0 %v281
        %3266 = vmatprep.subr.mxu0 0.0
        %3267 = vmatpush1.msra.mxu0 %v282
        %3268 = vmatprep.subr.mxu0 0.0
        %3269 = vmatpush1.msra.mxu0 %v283
        %3270 = vmatprep.subr.mxu0 0.0
        %3271 = vmatpush1.msra.mxu0 %v284
        %3272 = vmatprep.subr.mxu0 0.0
        %3273 = vmatpush1.msra.mxu0 %v285
        %3274 = vmatprep.mubr.f32.mxu0 %v3203
        %3275 = vmatmul.mubr.f32.gmra.mrb[0].mxu0 %v3202
        %v3276 = vpop.f32.mrb[0].mxu0
        %v3277 = vadd.f32 0.0, %v3276
        %v3278 = vpop.f32.mrb[0].mxu0
        %3279 = vmatprep.mubr.f32.mxu0 %v3205
        %3280 = vmatmul.mubr.f32.gmra.mrb[0].mxu0 %v3204
        %v3281 = vpop.f32.mrb[0].mxu0
        %v3282 = vadd.f32 0.0, %v3281
        %v3283 = vpop.f32.mrb[0].mxu0
        %3284 = vmatprep.mubr.f32.mxu0 %v3207
        %3285 = vmatmul.mubr.f32.gmra.mrb[0].mxu0 %v3206
        %v3286 = vpop.f32.mrb[0].mxu0
        %v3287 = vadd.f32 0.0, %v3286
        %v3288 = vpop.f32.mrb[0].mxu0
        %3289 = vmatprep.mubr.f32.mxu0 %v3209
        %3290 = vmatmul.mubr.f32.gmra.mrb[0].mxu0 %v3208
        %v3291 = vpop.f32.mrb[0].mxu0
        %v3292 = vadd.f32 0.0, %v3291
        %v3293 = vpop.f32.mrb[0].mxu0
        %3294 = vdwg.mxu0
        %s3295 = scalar_lea.vmem [#allocation4], 768
        %v3296 = vld [vmem:[%s3295] sm:$0xff]
        %v3297 = vld [vmem:[%s3295 + $0x8] sm:$0xff]
        %v3298 = vld [vmem:[%s3295 + $0x10] sm:$0xff]
        %v3299 = vld [vmem:[%s3295 + $0x18] sm:$0xff]
        %s3300 = scalar_lea.vmem [#allocation4], 832
        %v3301 = vld [vmem:[%s3300] sm:$0xff]
        %v3302 = vld [vmem:[%s3300 + $0x8] sm:$0xff]
        %v3303 = vld [vmem:[%s3300 + $0x10] sm:$0xff]
        %v3304 = vld [vmem:[%s3300 + $0x18] sm:$0xff]
        %s3305 = scalar_lea.vmem [#allocation4], 896
        %v3306 = vld [vmem:[%s3305] sm:$0xff]
        %v3307 = vld [vmem:[%s3305 + $0x8] sm:$0xff]
        %v3308 = vld [vmem:[%s3305 + $0x10] sm:$0xff]
        %v3309 = vld [vmem:[%s3305 + $0x18] sm:$0xff]
        %s3310 = scalar_lea.vmem [#allocation4], 960
        %v3311 = vld [vmem:[%s3310] sm:$0xff]
        %v3312 = vld [vmem:[%s3310 + $0x8] sm:$0xff]
        %v3313 = vld [vmem:[%s3310 + $0x10] sm:$0xff]
        %v3314 = vld [vmem:[%s3310 + $0x18] sm:$0xff]
        %v3316 = vsel %vm723, %v3301, 0
        %v3319 = vsel %vm723, %v3302, 0
        %v3322 = vsel %vm723, %v3303, 0
        %v3325 = vsel %vm723, %v3304, 0
        %3327 = vmatprep.subr.mxu0 0.0
        %3328 = vmatpush1.msra.mxu0 %v3277
        %3329 = vmatprep.subr.mxu0 0.0
        %3330 = vmatpush1.msra.mxu0 %v3282
        %3331 = vmatprep.subr.mxu0 0.0
        %3332 = vmatpush1.msra.mxu0 %v3287
        %3333 = vmatprep.subr.mxu0 0.0
        %3334 = vmatpush1.msra.mxu0 %v3292
        %3335 = vmatprep.subr.mxu0 0.0
        %3336 = vmatpush1.msra.mxu0 0.0
        %3337 = vmatprep.subr.mxu0 0.0
        %3338 = vmatpush1.msra.mxu0 0.0
        %3339 = vmatprep.subr.mxu0 0.0
        %3340 = vmatpush1.msra.mxu0 0.0
        %3341 = vmatprep.subr.mxu0 0.0
        %3342 = vmatpush1.msra.mxu0 0.0
        %3343 = vmatprep.subr.mxu0 0.0
        %3344 = vmatpush1.msra.mxu0 0.0
        %3345 = vmatprep.subr.mxu0 0.0
        %3346 = vmatpush1.msra.mxu0 0.0
        %3347 = vmatprep.subr.mxu0 0.0
        %3348 = vmatpush1.msra.mxu0 0.0
        %3349 = vmatprep.subr.mxu0 0.0
        %3350 = vmatpush1.msra.mxu0 0.0
        %3351 = vmatprep.subr.mxu0 0.0
        %3352 = vmatpush1.msra.mxu0 0.0
        %3353 = vmatprep.subr.mxu0 0.0
        %3354 = vmatpush1.msra.mxu0 0.0
        %3355 = vmatprep.subr.mxu0 0.0
        %3356 = vmatpush1.msra.mxu0 0.0
        %3357 = vmatprep.subr.mxu0 0.0
        %3358 = vmatpush1.msra.mxu0 0.0
        %3359 = vmatprep.subr.mxu0 0.0
        %3360 = vmatpush1.msra.mxu0 0.0
        %3361 = vmatprep.subr.mxu0 0.0
        %3362 = vmatpush1.msra.mxu0 0.0
        %3363 = vmatprep.subr.mxu0 0.0
        %3364 = vmatpush1.msra.mxu0 0.0
        %3365 = vmatprep.subr.mxu0 0.0
        %3366 = vmatpush1.msra.mxu0 0.0
        %3367 = vmatprep.subr.mxu0 0.0
        %3368 = vmatpush1.msra.mxu0 0.0
        %3369 = vmatprep.subr.mxu0 0.0
        %3370 = vmatpush1.msra.mxu0 0.0
        %3371 = vmatprep.subr.mxu0 0.0
        %3372 = vmatpush1.msra.mxu0 0.0
        %3373 = vmatprep.subr.mxu0 0.0
        %3374 = vmatpush1.msra.mxu0 0.0
        %3375 = vmatprep.subr.mxu0 0.0
        %3376 = vmatpush1.msra.mxu0 0.0
        %3377 = vmatprep.subr.mxu0 0.0
        %3378 = vmatpush1.msra.mxu0 0.0
        %3379 = vmatprep.subr.mxu0 0.0
        %3380 = vmatpush1.msra.mxu0 0.0
        %3381 = vmatprep.subr.mxu0 0.0
        %3382 = vmatpush1.msra.mxu0 0.0
        %3383 = vmatprep.subr.mxu0 0.0
        %3384 = vmatpush1.msra.mxu0 0.0
        %3385 = vmatprep.subr.mxu0 0.0
        %3386 = vmatpush1.msra.mxu0 0.0
        %3387 = vmatprep.subr.mxu0 0.0
        %3388 = vmatpush1.msra.mxu0 0.0
        %3389 = vmatprep.subr.mxu0 0.0
        %3390 = vmatpush1.msra.mxu0 0.0
        %3391 = vmatprep.mubr.f32.mxu0 0.0
        %3392 = vmatmul.mubr.f32.gmra.mrb[0].mxu0 %v3316
        %v3393 = vpop.f32.mrb[0].mxu0
        %v3394 = vadd.f32 0.0, %v3393
        %v3395 = vpop.f32.mrb[0].mxu0
        %3396 = vmatprep.mubr.f32.mxu0 0.0
        %3397 = vmatmul.mubr.f32.gmra.mrb[0].mxu0 %v3319
        %v3398 = vpop.f32.mrb[0].mxu0
        %v3399 = vadd.f32 0.0, %v3398
        %v3400 = vpop.f32.mrb[0].mxu0
        %3401 = vmatprep.mubr.f32.mxu0 0.0
        %3402 = vmatmul.mubr.f32.gmra.mrb[0].mxu0 %v3322
        %v3403 = vpop.f32.mrb[0].mxu0
        %v3404 = vadd.f32 0.0, %v3403
        %v3405 = vpop.f32.mrb[0].mxu0
        %3406 = vmatprep.mubr.f32.mxu0 0.0
        %3407 = vmatmul.mubr.f32.gmra.mrb[0].mxu0 %v3325
        %v3408 = vpop.f32.mrb[0].mxu0
        %v3409 = vadd.f32 0.0, %v3408
        %v3410 = vpop.f32.mrb[0].mxu0
        %3411 = vdwg.mxu0
        %3416 = vrot.lane.b32.xlu0 %v3277, 112
        %v3417 = vpop.permute.xlu0 %3416
        %3418 = vrot.lane.b32.xlu0 %v3282, 112
        %v3419 = vpop.permute.xlu0 %3418
        %3420 = vrot.lane.b32.xlu0 %v3287, 112
        %v3421 = vpop.permute.xlu0 %3420
        %3422 = vrot.lane.b32.xlu0 %v3292, 112
        %v3423 = vpop.permute.xlu0 %3422
        %v3429 = vsel %vm723, %v3306, 0
        %v3432 = vsel %vm723, %v3307, 0
        %v3435 = vsel %vm723, %v3308, 0
        %v3438 = vsel %vm723, %v3309, 0
        %3440 = vmatprep.subr.mxu0 0.0
        %3441 = vmatpush1.msra.mxu0 %v3417
        %3442 = vmatprep.subr.mxu0 0.0
        %3443 = vmatpush1.msra.mxu0 %v3419
        %3444 = vmatprep.subr.mxu0 0.0
        %3445 = vmatpush1.msra.mxu0 %v3421
        %3446 = vmatprep.subr.mxu0 0.0
        %3447 = vmatpush1.msra.mxu0 %v3423
        %3448 = vmatprep.subr.mxu0 0.0
        %3449 = vmatpush1.msra.mxu0 0.0
        %3450 = vmatprep.subr.mxu0 0.0
        %3451 = vmatpush1.msra.mxu0 0.0
        %3452 = vmatprep.subr.mxu0 0.0
        %3453 = vmatpush1.msra.mxu0 0.0
        %3454 = vmatprep.subr.mxu0 0.0
        %3455 = vmatpush1.msra.mxu0 0.0
        %3456 = vmatprep.subr.mxu0 0.0
        %3457 = vmatpush1.msra.mxu0 0.0
        %3458 = vmatprep.subr.mxu0 0.0
        %3459 = vmatpush1.msra.mxu0 0.0
        %3460 = vmatprep.subr.mxu0 0.0
        %3461 = vmatpush1.msra.mxu0 0.0
        %3462 = vmatprep.subr.mxu0 0.0
        %3463 = vmatpush1.msra.mxu0 0.0
        %3464 = vmatprep.subr.mxu0 0.0
        %3465 = vmatpush1.msra.mxu0 0.0
        %3466 = vmatprep.subr.mxu0 0.0
        %3467 = vmatpush1.msra.mxu0 0.0
        %3468 = vmatprep.subr.mxu0 0.0
        %3469 = vmatpush1.msra.mxu0 0.0
        %3470 = vmatprep.subr.mxu0 0.0
        %3471 = vmatpush1.msra.mxu0 0.0
        %3472 = vmatprep.subr.mxu0 0.0
        %3473 = vmatpush1.msra.mxu0 0.0
        %3474 = vmatprep.subr.mxu0 0.0
        %3475 = vmatpush1.msra.mxu0 0.0
        %3476 = vmatprep.subr.mxu0 0.0
        %3477 = vmatpush1.msra.mxu0 0.0
        %3478 = vmatprep.subr.mxu0 0.0
        %3479 = vmatpush1.msra.mxu0 0.0
        %3480 = vmatprep.subr.mxu0 0.0
        %3481 = vmatpush1.msra.mxu0 0.0
        %3482 = vmatprep.subr.mxu0 0.0
        %3483 = vmatpush1.msra.mxu0 0.0
        %3484 = vmatprep.subr.mxu0 0.0
        %3485 = vmatpush1.msra.mxu0 0.0
        %3486 = vmatprep.subr.mxu0 0.0
        %3487 = vmatpush1.msra.mxu0 0.0
        %3488 = vmatprep.subr.mxu0 0.0
        %3489 = vmatpush1.msra.mxu0 0.0
        %3490 = vmatprep.subr.mxu0 0.0
        %3491 = vmatpush1.msra.mxu0 0.0
        %3492 = vmatprep.subr.mxu0 0.0
        %3493 = vmatpush1.msra.mxu0 0.0
        %3494 = vmatprep.subr.mxu0 0.0
        %3495 = vmatpush1.msra.mxu0 0.0
        %3496 = vmatprep.subr.mxu0 0.0
        %3497 = vmatpush1.msra.mxu0 0.0
        %3498 = vmatprep.subr.mxu0 0.0
        %3499 = vmatpush1.msra.mxu0 0.0
        %3500 = vmatprep.subr.mxu0 0.0
        %3501 = vmatpush1.msra.mxu0 0.0
        %3502 = vmatprep.subr.mxu0 0.0
        %3503 = vmatpush1.msra.mxu0 0.0
        %3504 = vmatprep.mubr.f32.mxu0 0.0
        %3505 = vmatmul.mubr.f32.gmra.mrb[0].mxu0 %v3429
        %v3506 = vpop.f32.mrb[0].mxu0
        %v3507 = vadd.f32 0.0, %v3506
        %v3508 = vpop.f32.mrb[0].mxu0
        %3509 = vmatprep.mubr.f32.mxu0 0.0
        %3510 = vmatmul.mubr.f32.gmra.mrb[0].mxu0 %v3432
        %v3511 = vpop.f32.mrb[0].mxu0
        %v3512 = vadd.f32 0.0, %v3511
        %v3513 = vpop.f32.mrb[0].mxu0
        %3514 = vmatprep.mubr.f32.mxu0 0.0
        %3515 = vmatmul.mubr.f32.gmra.mrb[0].mxu0 %v3435
        %v3516 = vpop.f32.mrb[0].mxu0
        %v3517 = vadd.f32 0.0, %v3516
        %v3518 = vpop.f32.mrb[0].mxu0
        %3519 = vmatprep.mubr.f32.mxu0 0.0
        %3520 = vmatmul.mubr.f32.gmra.mrb[0].mxu0 %v3438
        %v3521 = vpop.f32.mrb[0].mxu0
        %v3522 = vadd.f32 0.0, %v3521
        %v3523 = vpop.f32.mrb[0].mxu0
        %3524 = vdwg.mxu0
        %3525 = vrot.lane.b32.xlu0 %v3277, 96
        %v3526 = vpop.permute.xlu0 %3525
        %3527 = vrot.lane.b32.xlu0 %v3282, 96
        %v3528 = vpop.permute.xlu0 %3527
        %3529 = vrot.lane.b32.xlu0 %v3287, 96
        %v3530 = vpop.permute.xlu0 %3529
        %3531 = vrot.lane.b32.xlu0 %v3292, 96
        %v3532 = vpop.permute.xlu0 %3531
        %3537 = vrot.lane.b32.xlu0 %v952, 119
        %v3538 = vpop.permute.xlu0 %3537
        %3539 = vrot.lane.b32.xlu0 %v953, 119
        %v3540 = vpop.permute.xlu0 %3539
        %3541 = vrot.lane.b32.xlu0 %v954, 119
        %v3542 = vpop.permute.xlu0 %3541
        %3543 = vrot.lane.b32.xlu0 %v955, 119
        %v3544 = vpop.permute.xlu0 %3543
        %v3550 = vsel %vm723, %v3311, 0
        %v3553 = vsel %vm723, %v3312, 0
        %v3556 = vsel %vm723, %v3313, 0
        %v3559 = vsel %vm723, %v3314, 0
        %3561 = vmatprep.subr.mxu0 0.0
        %3562 = vmatpush1.msra.mxu0 %v3526
        %3563 = vmatprep.subr.mxu0 0.0
        %3564 = vmatpush1.msra.mxu0 %v3528
        %3565 = vmatprep.subr.mxu0 0.0
        %3566 = vmatpush1.msra.mxu0 %v3530
        %3567 = vmatprep.subr.mxu0 0.0
        %3568 = vmatpush1.msra.mxu0 %v3532
        %3569 = vmatprep.subr.mxu0 0.0
        %3570 = vmatpush1.msra.mxu0 0.0
        %3571 = vmatprep.subr.mxu0 0.0
        %3572 = vmatpush1.msra.mxu0 0.0
        %3573 = vmatprep.subr.mxu0 0.0
        %3574 = vmatpush1.msra.mxu0 0.0
        %3575 = vmatprep.subr.mxu0 0.0
        %3576 = vmatpush1.msra.mxu0 0.0
        %3577 = vmatprep.subr.mxu0 0.0
        %3578 = vmatpush1.msra.mxu0 0.0
        %3579 = vmatprep.subr.mxu0 0.0
        %3580 = vmatpush1.msra.mxu0 0.0
        %3581 = vmatprep.subr.mxu0 0.0
        %3582 = vmatpush1.msra.mxu0 0.0
        %3583 = vmatprep.subr.mxu0 0.0
        %3584 = vmatpush1.msra.mxu0 0.0
        %3585 = vmatprep.subr.mxu0 0.0
        %3586 = vmatpush1.msra.mxu0 0.0
        %3587 = vmatprep.subr.mxu0 0.0
        %3588 = vmatpush1.msra.mxu0 0.0
        %3589 = vmatprep.subr.mxu0 0.0
        %3590 = vmatpush1.msra.mxu0 0.0
        %3591 = vmatprep.subr.mxu0 0.0
        %3592 = vmatpush1.msra.mxu0 0.0
        %3593 = vmatprep.subr.mxu0 0.0
        %3594 = vmatpush1.msra.mxu0 0.0
        %3595 = vmatprep.subr.mxu0 0.0
        %3596 = vmatpush1.msra.mxu0 0.0
        %3597 = vmatprep.subr.mxu0 0.0
        %3598 = vmatpush1.msra.mxu0 0.0
        %3599 = vmatprep.subr.mxu0 0.0
        %3600 = vmatpush1.msra.mxu0 0.0
        %3601 = vmatprep.subr.mxu0 0.0
        %3602 = vmatpush1.msra.mxu0 0.0
        %3603 = vmatprep.subr.mxu0 0.0
        %3604 = vmatpush1.msra.mxu0 0.0
        %3605 = vmatprep.subr.mxu0 0.0
        %3606 = vmatpush1.msra.mxu0 0.0
        %3607 = vmatprep.subr.mxu0 0.0
        %3608 = vmatpush1.msra.mxu0 0.0
        %3609 = vmatprep.subr.mxu0 0.0
        %3610 = vmatpush1.msra.mxu0 0.0
        %3611 = vmatprep.subr.mxu0 0.0
        %3612 = vmatpush1.msra.mxu0 0.0
        %3613 = vmatprep.subr.mxu0 0.0
        %3614 = vmatpush1.msra.mxu0 0.0
        %3615 = vmatprep.subr.mxu0 0.0
        %3616 = vmatpush1.msra.mxu0 0.0
        %3617 = vmatprep.subr.mxu0 0.0
        %3618 = vmatpush1.msra.mxu0 0.0
        %3619 = vmatprep.subr.mxu0 0.0
        %3620 = vmatpush1.msra.mxu0 0.0
        %3621 = vmatprep.subr.mxu0 0.0
        %3622 = vmatpush1.msra.mxu0 0.0
        %3623 = vmatprep.subr.mxu0 0.0
        %3624 = vmatpush1.msra.mxu0 0.0
        %3625 = vmatprep.mubr.f32.mxu0 0.0
        %3626 = vmatmul.mubr.f32.gmra.mrb[0].mxu0 %v3550
        %v3627 = vpop.f32.mrb[0].mxu0
        %v3628 = vadd.f32 %v3538, %v3627
        %v3629 = vpop.f32.mrb[0].mxu0
        %3630 = vmatprep.mubr.f32.mxu0 0.0
        %3631 = vmatmul.mubr.f32.gmra.mrb[0].mxu0 %v3553
        %v3632 = vpop.f32.mrb[0].mxu0
        %v3633 = vadd.f32 %v3540, %v3632
        %v3634 = vpop.f32.mrb[0].mxu0
        %3635 = vmatprep.mubr.f32.mxu0 0.0
        %3636 = vmatmul.mubr.f32.gmra.mrb[0].mxu0 %v3556
        %v3637 = vpop.f32.mrb[0].mxu0
        %v3638 = vadd.f32 %v3542, %v3637
        %v3639 = vpop.f32.mrb[0].mxu0
        %3640 = vmatprep.mubr.f32.mxu0 0.0
        %3641 = vmatmul.mubr.f32.gmra.mrb[0].mxu0 %v3559
        %v3642 = vpop.f32.mrb[0].mxu0
        %v3643 = vadd.f32 %v3544, %v3642
        %v3644 = vpop.f32.mrb[0].mxu0
        %3645 = vdwg.mxu0
        %3650 = vrot.lane.b32.xlu0 %v3507, 16
        %v3651 = vpop.permute.xlu0 %3650
        %3652 = vrot.lane.b32.xlu0 %v3512, 16
        %v3653 = vpop.permute.xlu0 %3652
        %3654 = vrot.lane.b32.xlu0 %v3517, 16
        %v3655 = vpop.permute.xlu0 %3654
        %3656 = vrot.lane.b32.xlu0 %v3522, 16
        %v3657 = vpop.permute.xlu0 %3656
        %3666 = vrot.lane.b32.xlu0 %v3628, 32
        %v3667 = vpop.permute.xlu0 %3666
        %3668 = vrot.lane.b32.xlu0 %v3633, 32
        %v3669 = vpop.permute.xlu0 %3668
        %3670 = vrot.lane.b32.xlu0 %v3638, 32
        %v3671 = vpop.permute.xlu0 %3670
        %3672 = vrot.lane.b32.xlu0 %v3643, 32
        %v3673 = vpop.permute.xlu0 %3672
        %v3678 = vsel %vm718, %v3394, %v3651
        %v3679 = vsel %vm718, %v3399, %v3653
        %v3680 = vsel %vm718, %v3404, %v3655
        %v3681 = vsel %vm718, %v3409, %v3657
        %v3682 = vsel %vm723, %v3678, %v3667
        %v3683 = vsel %vm723, %v3679, %v3669
        %v3684 = vsel %vm723, %v3680, %v3671
        %v3685 = vsel %vm723, %v3681, %v3673
        %v3687 = vsel %vm738, %v3682, 0
        %v3690 = vsel %vm738, %v3683, 0
        %v3693 = vsel %vm738, %v3684, 0
        %v3696 = vsel %vm738, %v3685, 0
        %3698 = vmatprep.subr.mxu0 %v729
        %3699 = vmatpush1.msra.mxu0 %v728
        %3700 = vmatprep.subr.mxu0 %v731
        %3701 = vmatpush1.msra.mxu0 %v730
        %3702 = vmatprep.subr.mxu0 %v733
        %3703 = vmatpush1.msra.mxu0 %v732
        %3704 = vmatprep.subr.mxu0 %v735
        %3705 = vmatpush1.msra.mxu0 %v734
        %3706 = vmatprep.subr.mxu0 %v756
        %3707 = vmatpush1.msra.mxu0 %v753
        %3708 = vmatprep.subr.mxu0 0.0
        %3709 = vmatpush1.msra.mxu0 0.0
        %3710 = vmatprep.subr.mxu0 0.0
        %3711 = vmatpush1.msra.mxu0 0.0
        %3712 = vmatprep.subr.mxu0 0.0
        %3713 = vmatpush1.msra.mxu0 0.0
        %3714 = vmatprep.subr.mxu0 0.0
        %3715 = vmatpush1.msra.mxu0 0.0
        %3716 = vmatprep.subr.mxu0 0.0
        %3717 = vmatpush1.msra.mxu0 0.0
        %3718 = vmatprep.subr.mxu0 0.0
        %3719 = vmatpush1.msra.mxu0 0.0
        %3720 = vmatprep.subr.mxu0 0.0
        %3721 = vmatpush1.msra.mxu0 0.0
        %3722 = vmatprep.subr.mxu0 0.0
        %3723 = vmatpush1.msra.mxu0 0.0
        %3724 = vmatprep.subr.mxu0 0.0
        %3725 = vmatpush1.msra.mxu0 0.0
        %3726 = vmatprep.subr.mxu0 0.0
        %3727 = vmatpush1.msra.mxu0 0.0
        %3728 = vmatprep.subr.mxu0 0.0
        %3729 = vmatpush1.msra.mxu0 0.0
        %3730 = vmatprep.subr.mxu0 0.0
        %3731 = vmatpush1.msra.mxu0 0.0
        %3732 = vmatprep.subr.mxu0 0.0
        %3733 = vmatpush1.msra.mxu0 0.0
        %3734 = vmatprep.subr.mxu0 0.0
        %3735 = vmatpush1.msra.mxu0 0.0
        %3736 = vmatprep.subr.mxu0 0.0
        %3737 = vmatpush1.msra.mxu0 0.0
        %3738 = vmatprep.subr.mxu0 0.0
        %3739 = vmatpush1.msra.mxu0 0.0
        %3740 = vmatprep.subr.mxu0 0.0
        %3741 = vmatpush1.msra.mxu0 0.0
        %3742 = vmatprep.subr.mxu0 0.0
        %3743 = vmatpush1.msra.mxu0 0.0
        %3744 = vmatprep.subr.mxu0 0.0
        %3745 = vmatpush1.msra.mxu0 0.0
        %3746 = vmatprep.subr.mxu0 0.0
        %3747 = vmatpush1.msra.mxu0 0.0
        %3748 = vmatprep.subr.mxu0 0.0
        %3749 = vmatpush1.msra.mxu0 0.0
        %3750 = vmatprep.subr.mxu0 0.0
        %3751 = vmatpush1.msra.mxu0 0.0
        %3752 = vmatprep.subr.mxu0 0.0
        %3753 = vmatpush1.msra.mxu0 0.0
        %3754 = vmatprep.subr.mxu0 0.0
        %3755 = vmatpush1.msra.mxu0 0.0
        %3756 = vmatprep.subr.mxu0 0.0
        %3757 = vmatpush1.msra.mxu0 0.0
        %3758 = vmatprep.subr.mxu0 0.0
        %3759 = vmatpush1.msra.mxu0 0.0
        %3760 = vmatprep.subr.mxu0 0.0
        %3761 = vmatpush1.msra.mxu0 0.0
        %3762 = vmatprep.mubr.f32.mxu0 0.0
        %3763 = vmatmul.mubr.f32.gmra.mrb[0].mxu0 %v3687
        %v3764 = vpop.f32.mrb[0].mxu0
        %v3765 = vadd.f32 0.0, %v3764
        %v3766 = vpop.f32.mrb[0].mxu0
        %v3767 = vadd.f32 0.0, %v3766
        %3768 = vmatprep.mubr.f32.mxu0 0.0
        %3769 = vmatmul.mubr.f32.gmra.mrb[0].mxu0 %v3690
        %v3770 = vpop.f32.mrb[0].mxu0
        %v3771 = vadd.f32 0.0, %v3770
        %v3772 = vpop.f32.mrb[0].mxu0
        %v3773 = vadd.f32 0.0, %v3772
        %3774 = vmatprep.mubr.f32.mxu0 0.0
        %3775 = vmatmul.mubr.f32.gmra.mrb[0].mxu0 %v3693
        %v3776 = vpop.f32.mrb[0].mxu0
        %v3777 = vadd.f32 0.0, %v3776
        %v3778 = vpop.f32.mrb[0].mxu0
        %v3779 = vadd.f32 0.0, %v3778
        %3780 = vmatprep.mubr.f32.mxu0 0.0
        %3781 = vmatmul.mubr.f32.gmra.mrb[0].mxu0 %v3696
        %v3782 = vpop.f32.mrb[0].mxu0
        %v3783 = vadd.f32 0.0, %v3782
        %v3784 = vpop.f32.mrb[0].mxu0
        %v3785 = vadd.f32 0.0, %v3784
        %3786 = vdwg.mxu0
        %v3788 = vsel %vm723, %v3296, 0
        %v3791 = vsel %vm723, %v3297, 0
        %v3794 = vsel %vm723, %v3298, 0
        %v3797 = vsel %vm723, %v3299, 0
        %3799 = vmatprep.subr.mxu0 %v3203
        %3800 = vmatpush1.msra.mxu0 %v3202
        %3801 = vmatprep.subr.mxu0 %v3205
        %3802 = vmatpush1.msra.mxu0 %v3204
        %3803 = vmatprep.subr.mxu0 %v3207
        %3804 = vmatpush1.msra.mxu0 %v3206
        %3805 = vmatprep.subr.mxu0 %v3209
        %3806 = vmatpush1.msra.mxu0 %v3208
        %3807 = vmatprep.subr.mxu0 0.0
        %3808 = vmatpush1.msra.mxu0 0.0
        %3809 = vmatprep.subr.mxu0 0.0
        %3810 = vmatpush1.msra.mxu0 0.0
        %3811 = vmatprep.subr.mxu0 0.0
        %3812 = vmatpush1.msra.mxu0 0.0
        %3813 = vmatprep.subr.mxu0 0.0
        %3814 = vmatpush1.msra.mxu0 0.0
        %3815 = vmatprep.subr.mxu0 0.0
        %3816 = vmatpush1.msra.mxu0 0.0
        %3817 = vmatprep.subr.mxu0 0.0
        %3818 = vmatpush1.msra.mxu0 0.0
        %3819 = vmatprep.subr.mxu0 0.0
        %3820 = vmatpush1.msra.mxu0 0.0
        %3821 = vmatprep.subr.mxu0 0.0
        %3822 = vmatpush1.msra.mxu0 0.0
        %3823 = vmatprep.subr.mxu0 0.0
        %3824 = vmatpush1.msra.mxu0 0.0
        %3825 = vmatprep.subr.mxu0 0.0
        %3826 = vmatpush1.msra.mxu0 0.0
        %3827 = vmatprep.subr.mxu0 0.0
        %3828 = vmatpush1.msra.mxu0 0.0
        %3829 = vmatprep.subr.mxu0 0.0
        %3830 = vmatpush1.msra.mxu0 0.0
        %3831 = vmatprep.subr.mxu0 0.0
        %3832 = vmatpush1.msra.mxu0 0.0
        %3833 = vmatprep.subr.mxu0 0.0
        %3834 = vmatpush1.msra.mxu0 0.0
        %3835 = vmatprep.subr.mxu0 0.0
        %3836 = vmatpush1.msra.mxu0 0.0
        %3837 = vmatprep.subr.mxu0 0.0
        %3838 = vmatpush1.msra.mxu0 0.0
        %3839 = vmatprep.subr.mxu0 0.0
        %3840 = vmatpush1.msra.mxu0 0.0
        %3841 = vmatprep.subr.mxu0 0.0
        %3842 = vmatpush1.msra.mxu0 0.0
        %3843 = vmatprep.subr.mxu0 0.0
        %3844 = vmatpush1.msra.mxu0 0.0
        %3845 = vmatprep.subr.mxu0 0.0
        %3846 = vmatpush1.msra.mxu0 0.0
        %3847 = vmatprep.subr.mxu0 0.0
        %3848 = vmatpush1.msra.mxu0 0.0
        %3849 = vmatprep.subr.mxu0 0.0
        %3850 = vmatpush1.msra.mxu0 0.0
        %3851 = vmatprep.subr.mxu0 0.0
        %3852 = vmatpush1.msra.mxu0 0.0
        %3853 = vmatprep.subr.mxu0 0.0
        %3854 = vmatpush1.msra.mxu0 0.0
        %3855 = vmatprep.subr.mxu0 0.0
        %3856 = vmatpush1.msra.mxu0 0.0
        %3857 = vmatprep.subr.mxu0 0.0
        %3858 = vmatpush1.msra.mxu0 0.0
        %3859 = vmatprep.subr.mxu0 0.0
        %3860 = vmatpush1.msra.mxu0 0.0
        %3861 = vmatprep.subr.mxu0 0.0
        %3862 = vmatpush1.msra.mxu0 0.0
        %3863 = vmatprep.mubr.f32.mxu0 0.0
        %3864 = vmatmul.mubr.f32.gmra.mrb[0].mxu0 %v3788
        %v3865 = vpop.f32.mrb[0].mxu0
        %v3866 = vadd.f32 %v3765, %v3865
        %v3867 = vpop.f32.mrb[0].mxu0
        %v3868 = vadd.f32 %v3767, %v3867
        %3869 = vmatprep.mubr.f32.mxu0 0.0
        %3870 = vmatmul.mubr.f32.gmra.mrb[0].mxu0 %v3791
        %v3871 = vpop.f32.mrb[0].mxu0
        %v3872 = vadd.f32 %v3771, %v3871
        %v3873 = vpop.f32.mrb[0].mxu0
        %v3874 = vadd.f32 %v3773, %v3873
        %3875 = vmatprep.mubr.f32.mxu0 0.0
        %3876 = vmatmul.mubr.f32.gmra.mrb[0].mxu0 %v3794
        %v3877 = vpop.f32.mrb[0].mxu0
        %v3878 = vadd.f32 %v3777, %v3877
        %v3879 = vpop.f32.mrb[0].mxu0
        %v3880 = vadd.f32 %v3779, %v3879
        %3881 = vmatprep.mubr.f32.mxu0 0.0
        %3882 = vmatmul.mubr.f32.gmra.mrb[0].mxu0 %v3797
        %v3883 = vpop.f32.mrb[0].mxu0
        %v3884 = vadd.f32 %v3783, %v3883
        %v3885 = vpop.f32.mrb[0].mxu0
        %v3886 = vadd.f32 %v3785, %v3885
        %3887 = vdwg.mxu0
        %v3888 = vadd.f32 %v3866, %v3868
        %3889 = vadd.xlane.f32.xlu0 %v3888
        %v3890 = vpop.xlane.xlu0 %3889
        %v3891 = vadd.f32 %v3872, %v3874
        %3892 = vadd.xlane.f32.xlu0 %v3891
        %v3893 = vpop.xlane.xlu0 %3892
        %v3894 = vadd.f32 %v3878, %v3880
        %3895 = vadd.xlane.f32.xlu0 %v3894
        %v3896 = vpop.xlane.xlu0 %3895
        %v3897 = vadd.f32 %v3884, %v3886
        %3898 = vadd.xlane.f32.xlu0 %v3897
        %v3899 = vpop.xlane.xlu0 %3898
        %v3900 = vmul.f32 %v3890, %v968
        %v3901 = vmul.f32 %v3893, %v968
        %v3902 = vmul.f32 %v3896, %v968
        %v3903 = vmul.f32 %v3899, %v968
        %v3904 = vmul.f32 %v3866, %v3866
        %v3905 = vmul.f32 %v3868, %v3868
        %v3906 = vmul.f32 %v3872, %v3872
        %v3907 = vmul.f32 %v3874, %v3874
        %v3908 = vmul.f32 %v3878, %v3878
        %v3909 = vmul.f32 %v3880, %v3880
        %v3910 = vmul.f32 %v3884, %v3884
        %v3911 = vmul.f32 %v3886, %v3886
        %v3912 = vadd.f32 %v3904, %v3905
        %3913 = vadd.xlane.f32.xlu0 %v3912
        %v3914 = vpop.xlane.xlu0 %3913
        %v3915 = vadd.f32 %v3906, %v3907
        %3916 = vadd.xlane.f32.xlu0 %v3915
        %v3917 = vpop.xlane.xlu0 %3916
        %v3918 = vadd.f32 %v3908, %v3909
        %3919 = vadd.xlane.f32.xlu0 %v3918
        %v3920 = vpop.xlane.xlu0 %3919
        %v3921 = vadd.f32 %v3910, %v3911
        %3922 = vadd.xlane.f32.xlu0 %v3921
        %v3923 = vpop.xlane.xlu0 %3922
        %v3924 = vmul.f32 %v3914, %v968
        %v3925 = vmul.f32 %v3917, %v968
        %v3926 = vmul.f32 %v3920, %v968
        %v3927 = vmul.f32 %v3923, %v968
        %v3928 = vmul.f32 %v3900, %v3900
        %v3929 = vmul.f32 %v3901, %v3901
        %v3930 = vmul.f32 %v3902, %v3902
        %v3931 = vmul.f32 %v3903, %v3903
        %v3932 = vsub.f32 %v3924, %v3928
        %v3933 = vsub.f32 %v3925, %v3929
        %v3934 = vsub.f32 %v3926, %v3930
        %v3935 = vsub.f32 %v3927, %v3931
        %v3936 = vadd.f32 %v3932, 1e-05
        %v3937 = vadd.f32 %v3933, 1e-05
        %v3938 = vadd.f32 %v3934, 1e-05
        %v3939 = vadd.f32 %v3935, 1e-05
        %v3940 = vrsqrt.pop %v3936
        %v3941 = vrsqrt.pop %v3937
        %v3942 = vrsqrt.pop %v3938
        %v3943 = vrsqrt.pop %v3939
        %v3944 = vmul.f32 %v952, %v3940
        %v3945 = vmul.f32 %v953, %v3941
        %v3946 = vmul.f32 %v954, %v3942
        %v3947 = vmul.f32 %v955, %v3943
        %v3948 = vmul.f32 %v3900, %v3944
        %v3949 = vmul.f32 %v3901, %v3945
        %v3950 = vmul.f32 %v3902, %v3946
        %v3951 = vmul.f32 %v3903, %v3947
        %3956 = vrot.lane.b32.xlu0 %v3948, 1
        %v3957 = vpop.permute.xlu0 %3956
        %3958 = vrot.lane.b32.xlu0 %v3949, 1
        %v3959 = vpop.permute.xlu0 %3958
        %3960 = vrot.lane.b32.xlu0 %v3950, 1
        %v3961 = vpop.permute.xlu0 %3960
        %3962 = vrot.lane.b32.xlu0 %v3951, 1
        %v3963 = vpop.permute.xlu0 %3962
        %v3968 = vsub.f32 %v952, %v3957
        %v3969 = vsub.f32 %v953, %v3959
        %v3970 = vsub.f32 %v954, %v3961
        %v3971 = vsub.f32 %v955, %v3963
        %3973 = vset.pattern.permute.xlu0 10
        %3974 = vperm.xlu0 %3973, %v3944
        %v3975 = vpop.permute.xlu0 %3974
        %3978 = vset.pattern.permute.xlu0 10
        %3979 = vperm.xlu0 %3978, %v3945
        %v3980 = vpop.permute.xlu0 %3979
        %3983 = vset.pattern.permute.xlu0 10
        %3984 = vperm.xlu0 %3983, %v3946
        %v3985 = vpop.permute.xlu0 %3984
        %3988 = vset.pattern.permute.xlu0 10
        %3989 = vperm.xlu0 %3988, %v3947
        %v3990 = vpop.permute.xlu0 %3989
        %v3992 = vmul.f32 %v3866, %v3975
        %v3993 = vmul.f32 %v3868, %v3975
        %v3994 = vmul.f32 %v3872, %v3980
        %v3995 = vmul.f32 %v3874, %v3980
        %v3996 = vmul.f32 %v3878, %v3985
        %v3997 = vmul.f32 %v3880, %v3985
        %v3998 = vmul.f32 %v3884, %v3990
        %v3999 = vmul.f32 %v3886, %v3990
        %4001 = vset.pattern.permute.xlu0 11
        %4002 = vperm.xlu0 %4001, %v3968
        %v4003 = vpop.permute.xlu0 %4002
        %4006 = vset.pattern.permute.xlu0 11
        %4007 = vperm.xlu0 %4006, %v3969
        %v4008 = vpop.permute.xlu0 %4007
        %4011 = vset.pattern.permute.xlu0 11
        %4012 = vperm.xlu0 %4011, %v3970
        %v4013 = vpop.permute.xlu0 %4012
        %4016 = vset.pattern.permute.xlu0 11
        %4017 = vperm.xlu0 %4016, %v3971
        %v4018 = vpop.permute.xlu0 %4017
        %v4020 = vadd.f32 %v3992, %v4003
        %v4021 = vadd.f32 %v3993, %v4003
        %v4022 = vadd.f32 %v3994, %v4008
        %v4023 = vadd.f32 %v3995, %v4008
        %v4024 = vadd.f32 %v3996, %v4013
        %v4025 = vadd.f32 %v3997, %v4013
        %v4026 = vadd.f32 %v3998, %v4018
        %v4027 = vadd.f32 %v3999, %v4018
        %v4028 = vmax.f32 %v4020, 0.0
        %v4029 = vmax.f32 %v4021, 0.0
        %v4030 = vmax.f32 %v4022, 0.0
        %v4031 = vmax.f32 %v4023, 0.0
        %v4032 = vmax.f32 %v4024, 0.0
        %v4033 = vmax.f32 %v4025, 0.0
        %v4034 = vmax.f32 %v4026, 0.0
        %v4035 = vmax.f32 %v4027, 0.0
        %4036 = vmatprep.subr.mxu0 0.0
        %4037 = vmatpush1.msra.mxu0 %v254
        %4038 = vmatprep.subr.mxu0 0.0
        %4039 = vmatpush1.msra.mxu0 %v255
        %4040 = vmatprep.subr.mxu0 0.0
        %4041 = vmatpush1.msra.mxu0 %v256
        %4042 = vmatprep.subr.mxu0 0.0
        %4043 = vmatpush1.msra.mxu0 %v257
        %4044 = vmatprep.subr.mxu0 0.0
        %4045 = vmatpush1.msra.mxu0 %v258
        %4046 = vmatprep.subr.mxu0 0.0
        %4047 = vmatpush1.msra.mxu0 %v259
        %4048 = vmatprep.subr.mxu0 0.0
        %4049 = vmatpush1.msra.mxu0 %v260
        %4050 = vmatprep.subr.mxu0 0.0
        %4051 = vmatpush1.msra.mxu0 %v261
        %4052 = vmatprep.subr.mxu0 0.0
        %4053 = vmatpush1.msra.mxu0 %v262
        %4054 = vmatprep.subr.mxu0 0.0
        %4055 = vmatpush1.msra.mxu0 %v263
        %4056 = vmatprep.subr.mxu0 0.0
        %4057 = vmatpush1.msra.mxu0 %v264
        %4058 = vmatprep.subr.mxu0 0.0
        %4059 = vmatpush1.msra.mxu0 %v265
        %4060 = vmatprep.subr.mxu0 0.0
        %4061 = vmatpush1.msra.mxu0 %v266
        %4062 = vmatprep.subr.mxu0 0.0
        %4063 = vmatpush1.msra.mxu0 %v267
        %4064 = vmatprep.subr.mxu0 0.0
        %4065 = vmatpush1.msra.mxu0 %v268
        %4066 = vmatprep.subr.mxu0 0.0
        %4067 = vmatpush1.msra.mxu0 %v269
        %4068 = vmatprep.subr.mxu0 0.0
        %4069 = vmatpush1.msra.mxu0 %v270
        %4070 = vmatprep.subr.mxu0 0.0
        %4071 = vmatpush1.msra.mxu0 %v271
        %4072 = vmatprep.subr.mxu0 0.0
        %4073 = vmatpush1.msra.mxu0 %v272
        %4074 = vmatprep.subr.mxu0 0.0
        %4075 = vmatpush1.msra.mxu0 %v273
        %4076 = vmatprep.subr.mxu0 0.0
        %4077 = vmatpush1.msra.mxu0 %v274
        %4078 = vmatprep.subr.mxu0 0.0
        %4079 = vmatpush1.msra.mxu0 %v275
        %4080 = vmatprep.subr.mxu0 0.0
        %4081 = vmatpush1.msra.mxu0 %v276
        %4082 = vmatprep.subr.mxu0 0.0
        %4083 = vmatpush1.msra.mxu0 %v277
        %4084 = vmatprep.subr.mxu0 0.0
        %4085 = vmatpush1.msra.mxu0 %v278
        %4086 = vmatprep.subr.mxu0 0.0
        %4087 = vmatpush1.msra.mxu0 %v279
        %4088 = vmatprep.subr.mxu0 0.0
        %4089 = vmatpush1.msra.mxu0 %v280
        %4090 = vmatprep.subr.mxu0 0.0
        %4091 = vmatpush1.msra.mxu0 %v281
        %4092 = vmatprep.subr.mxu0 0.0
        %4093 = vmatpush1.msra.mxu0 %v282
        %4094 = vmatprep.subr.mxu0 0.0
        %4095 = vmatpush1.msra.mxu0 %v283
        %4096 = vmatprep.subr.mxu0 0.0
        %4097 = vmatpush1.msra.mxu0 %v284
        %4098 = vmatprep.subr.mxu0 0.0
        %4099 = vmatpush1.msra.mxu0 %v285
        %4100 = vmatprep.mubr.f32.mxu0 %v4029
        %4101 = vmatmul.mubr.f32.gmra.mrb[0].mxu0 %v4028
        %v4102 = vpop.f32.mrb[0].mxu0
        %v4103 = vadd.f32 0.0, %v4102
        %v4104 = vpop.f32.mrb[0].mxu0
        %4105 = vmatprep.mubr.f32.mxu0 %v4031
        %4106 = vmatmul.mubr.f32.gmra.mrb[0].mxu0 %v4030
        %v4107 = vpop.f32.mrb[0].mxu0
        %v4108 = vadd.f32 0.0, %v4107
        %v4109 = vpop.f32.mrb[0].mxu0
        %4110 = vmatprep.mubr.f32.mxu0 %v4033
        %4111 = vmatmul.mubr.f32.gmra.mrb[0].mxu0 %v4032
        %v4112 = vpop.f32.mrb[0].mxu0
        %v4113 = vadd.f32 0.0, %v4112
        %v4114 = vpop.f32.mrb[0].mxu0
        %4115 = vmatprep.mubr.f32.mxu0 %v4035
        %4116 = vmatmul.mubr.f32.gmra.mrb[0].mxu0 %v4034
        %v4117 = vpop.f32.mrb[0].mxu0
        %v4118 = vadd.f32 0.0, %v4117
        %v4119 = vpop.f32.mrb[0].mxu0
        %4120 = vdwg.mxu0
        %s4121 = scalar_lea.vmem [#allocation4], 1024
        %v4122 = vld [vmem:[%s4121] sm:$0x1]
        %s4123 = scalar_lea.vmem [#allocation4], 1088
        %v4124 = vld [vmem:[%s4123] sm:$0x1]
        %s4125 = scalar_lea.vmem [#allocation4], 1152
        %v4126 = vld [vmem:[%s4125] sm:$0x1]
        %s4127 = scalar_lea.vmem [#allocation4], 1216
        %v4128 = vld [vmem:[%s4127] sm:$0x1]
        %v4129 = vld [vmem:[%s4] sm:$0x1]
        %v4131 = vsel %vm723, %v4124, 0
        %4133 = vmatprep.subr.mxu0 0.0
        %4134 = vmatpush1.msra.mxu0 %v4103
        %4135 = vmatprep.subr.mxu0 0.0
        %4136 = vmatpush1.msra.mxu0 %v4108
        %4137 = vmatprep.subr.mxu0 0.0
        %4138 = vmatpush1.msra.mxu0 %v4113
        %4139 = vmatprep.subr.mxu0 0.0
        %4140 = vmatpush1.msra.mxu0 %v4118
        %4141 = vmatprep.subr.mxu0 0.0
        %4142 = vmatpush1.msra.mxu0 0.0
        %4143 = vmatprep.subr.mxu0 0.0
        %4144 = vmatpush1.msra.mxu0 0.0
        %4145 = vmatprep.subr.mxu0 0.0
        %4146 = vmatpush1.msra.mxu0 0.0
        %4147 = vmatprep.subr.mxu0 0.0
        %4148 = vmatpush1.msra.mxu0 0.0
        %4149 = vmatprep.subr.mxu0 0.0
        %4150 = vmatpush1.msra.mxu0 0.0
        %4151 = vmatprep.subr.mxu0 0.0
        %4152 = vmatpush1.msra.mxu0 0.0
        %4153 = vmatprep.subr.mxu0 0.0
        %4154 = vmatpush1.msra.mxu0 0.0
        %4155 = vmatprep.subr.mxu0 0.0
        %4156 = vmatpush1.msra.mxu0 0.0
        %4157 = vmatprep.subr.mxu0 0.0
        %4158 = vmatpush1.msra.mxu0 0.0
        %4159 = vmatprep.subr.mxu0 0.0
        %4160 = vmatpush1.msra.mxu0 0.0
        %4161 = vmatprep.subr.mxu0 0.0
        %4162 = vmatpush1.msra.mxu0 0.0
        %4163 = vmatprep.subr.mxu0 0.0
        %4164 = vmatpush1.msra.mxu0 0.0
        %4165 = vmatprep.subr.mxu0 0.0
        %4166 = vmatpush1.msra.mxu0 0.0
        %4167 = vmatprep.subr.mxu0 0.0
        %4168 = vmatpush1.msra.mxu0 0.0
        %4169 = vmatprep.subr.mxu0 0.0
        %4170 = vmatpush1.msra.mxu0 0.0
        %4171 = vmatprep.subr.mxu0 0.0
        %4172 = vmatpush1.msra.mxu0 0.0
        %4173 = vmatprep.subr.mxu0 0.0
        %4174 = vmatpush1.msra.mxu0 0.0
        %4175 = vmatprep.subr.mxu0 0.0
        %4176 = vmatpush1.msra.mxu0 0.0
        %4177 = vmatprep.subr.mxu0 0.0
        %4178 = vmatpush1.msra.mxu0 0.0
        %4179 = vmatprep.subr.mxu0 0.0
        %4180 = vmatpush1.msra.mxu0 0.0
        %4181 = vmatprep.subr.mxu0 0.0
        %4182 = vmatpush1.msra.mxu0 0.0
        %4183 = vmatprep.subr.mxu0 0.0
        %4184 = vmatpush1.msra.mxu0 0.0
        %4185 = vmatprep.subr.mxu0 0.0
        %4186 = vmatpush1.msra.mxu0 0.0
        %4187 = vmatprep.subr.mxu0 0.0
        %4188 = vmatpush1.msra.mxu0 0.0
        %4189 = vmatprep.subr.mxu0 0.0
        %4190 = vmatpush1.msra.mxu0 0.0
        %4191 = vmatprep.subr.mxu0 0.0
        %4192 = vmatpush1.msra.mxu0 0.0
        %4193 = vmatprep.subr.mxu0 0.0
        %4194 = vmatpush1.msra.mxu0 0.0
        %4195 = vmatprep.subr.mxu0 0.0
        %4196 = vmatpush1.msra.mxu0 0.0
        %4197 = vmatprep.mubr.f32.mxu0 0.0
        %4198 = vmatmul.mubr.f32.gmra.mrb[0].mxu0 %v4131
        %v4199 = vpop.f32.mrb[0].mxu0
        %v4200 = vadd.f32 0.0, %v4199
        %v4201 = vpop.f32.mrb[0].mxu0
        %4202 = vdwg.mxu0
        %4207 = vrot.lane.b32.xlu0 %v4103, 112
        %v4208 = vpop.permute.xlu0 %4207
        %4209 = vrot.lane.b32.xlu0 %v4108, 112
        %v4210 = vpop.permute.xlu0 %4209
        %4211 = vrot.lane.b32.xlu0 %v4113, 112
        %v4212 = vpop.permute.xlu0 %4211
        %4213 = vrot.lane.b32.xlu0 %v4118, 112
        %v4214 = vpop.permute.xlu0 %4213
        %v4220 = vsel %vm723, %v4126, 0
        %4222 = vmatprep.subr.mxu0 0.0
        %4223 = vmatpush1.msra.mxu0 %v4208
        %4224 = vmatprep.subr.mxu0 0.0
        %4225 = vmatpush1.msra.mxu0 %v4210
        %4226 = vmatprep.subr.mxu0 0.0
        %4227 = vmatpush1.msra.mxu0 %v4212
        %4228 = vmatprep.subr.mxu0 0.0
        %4229 = vmatpush1.msra.mxu0 %v4214
        %4230 = vmatprep.subr.mxu0 0.0
        %4231 = vmatpush1.msra.mxu0 0.0
        %4232 = vmatprep.subr.mxu0 0.0
        %4233 = vmatpush1.msra.mxu0 0.0
        %4234 = vmatprep.subr.mxu0 0.0
        %4235 = vmatpush1.msra.mxu0 0.0
        %4236 = vmatprep.subr.mxu0 0.0
        %4237 = vmatpush1.msra.mxu0 0.0
        %4238 = vmatprep.subr.mxu0 0.0
        %4239 = vmatpush1.msra.mxu0 0.0
        %4240 = vmatprep.subr.mxu0 0.0
        %4241 = vmatpush1.msra.mxu0 0.0
        %4242 = vmatprep.subr.mxu0 0.0
        %4243 = vmatpush1.msra.mxu0 0.0
        %4244 = vmatprep.subr.mxu0 0.0
        %4245 = vmatpush1.msra.mxu0 0.0
        %4246 = vmatprep.subr.mxu0 0.0
        %4247 = vmatpush1.msra.mxu0 0.0
        %4248 = vmatprep.subr.mxu0 0.0
        %4249 = vmatpush1.msra.mxu0 0.0
        %4250 = vmatprep.subr.mxu0 0.0
        %4251 = vmatpush1.msra.mxu0 0.0
        %4252 = vmatprep.subr.mxu0 0.0
        %4253 = vmatpush1.msra.mxu0 0.0
        %4254 = vmatprep.subr.mxu0 0.0
        %4255 = vmatpush1.msra.mxu0 0.0
        %4256 = vmatprep.subr.mxu0 0.0
        %4257 = vmatpush1.msra.mxu0 0.0
        %4258 = vmatprep.subr.mxu0 0.0
        %4259 = vmatpush1.msra.mxu0 0.0
        %4260 = vmatprep.subr.mxu0 0.0
        %4261 = vmatpush1.msra.mxu0 0.0
        %4262 = vmatprep.subr.mxu0 0.0
        %4263 = vmatpush1.msra.mxu0 0.0
        %4264 = vmatprep.subr.mxu0 0.0
        %4265 = vmatpush1.msra.mxu0 0.0
        %4266 = vmatprep.subr.mxu0 0.0
        %4267 = vmatpush1.msra.mxu0 0.0
        %4268 = vmatprep.subr.mxu0 0.0
        %4269 = vmatpush1.msra.mxu0 0.0
        %4270 = vmatprep.subr.mxu0 0.0
        %4271 = vmatpush1.msra.mxu0 0.0
        %4272 = vmatprep.subr.mxu0 0.0
        %4273 = vmatpush1.msra.mxu0 0.0
        %4274 = vmatprep.subr.mxu0 0.0
        %4275 = vmatpush1.msra.mxu0 0.0
        %4276 = vmatprep.subr.mxu0 0.0
        %4277 = vmatpush1.msra.mxu0 0.0
        %4278 = vmatprep.subr.mxu0 0.0
        %4279 = vmatpush1.msra.mxu0 0.0
        %4280 = vmatprep.subr.mxu0 0.0
        %4281 = vmatpush1.msra.mxu0 0.0
        %4282 = vmatprep.subr.mxu0 0.0
        %4283 = vmatpush1.msra.mxu0 0.0
        %4284 = vmatprep.subr.mxu0 0.0
        %4285 = vmatpush1.msra.mxu0 0.0
        %4286 = vmatprep.mubr.f32.mxu0 0.0
        %4287 = vmatmul.mubr.f32.gmra.mrb[0].mxu0 %v4220
        %v4288 = vpop.f32.mrb[0].mxu0
        %v4289 = vadd.f32 0.0, %v4288
        %v4290 = vpop.f32.mrb[0].mxu0
        %4291 = vdwg.mxu0
        %4292 = vrot.lane.b32.xlu0 %v4103, 96
        %v4293 = vpop.permute.xlu0 %4292
        %4294 = vrot.lane.b32.xlu0 %v4108, 96
        %v4295 = vpop.permute.xlu0 %4294
        %4296 = vrot.lane.b32.xlu0 %v4113, 96
        %v4297 = vpop.permute.xlu0 %4296
        %4298 = vrot.lane.b32.xlu0 %v4118, 96
        %v4299 = vpop.permute.xlu0 %4298
        %4305 = vrot.lane.b32.xlu0 %v4129, 116
        %v4306 = vpop.permute.xlu0 %4305
        %v4309 = vsel %vm723, %v4128, 0
        %4311 = vmatprep.subr.mxu0 0.0
        %4312 = vmatpush1.msra.mxu0 %v4293
        %4313 = vmatprep.subr.mxu0 0.0
        %4314 = vmatpush1.msra.mxu0 %v4295
        %4315 = vmatprep.subr.mxu0 0.0
        %4316 = vmatpush1.msra.mxu0 %v4297
        %4317 = vmatprep.subr.mxu0 0.0
        %4318 = vmatpush1.msra.mxu0 %v4299
        %4319 = vmatprep.subr.mxu0 0.0
        %4320 = vmatpush1.msra.mxu0 0.0
        %4321 = vmatprep.subr.mxu0 0.0
        %4322 = vmatpush1.msra.mxu0 0.0
        %4323 = vmatprep.subr.mxu0 0.0
        %4324 = vmatpush1.msra.mxu0 0.0
        %4325 = vmatprep.subr.mxu0 0.0
        %4326 = vmatpush1.msra.mxu0 0.0
        %4327 = vmatprep.subr.mxu0 0.0
        %4328 = vmatpush1.msra.mxu0 0.0
        %4329 = vmatprep.subr.mxu0 0.0
        %4330 = vmatpush1.msra.mxu0 0.0
        %4331 = vmatprep.subr.mxu0 0.0
        %4332 = vmatpush1.msra.mxu0 0.0
        %4333 = vmatprep.subr.mxu0 0.0
        %4334 = vmatpush1.msra.mxu0 0.0
        %4335 = vmatprep.subr.mxu0 0.0
        %4336 = vmatpush1.msra.mxu0 0.0
        %4337 = vmatprep.subr.mxu0 0.0
        %4338 = vmatpush1.msra.mxu0 0.0
        %4339 = vmatprep.subr.mxu0 0.0
        %4340 = vmatpush1.msra.mxu0 0.0
        %4341 = vmatprep.subr.mxu0 0.0
        %4342 = vmatpush1.msra.mxu0 0.0
        %4343 = vmatprep.subr.mxu0 0.0
        %4344 = vmatpush1.msra.mxu0 0.0
        %4345 = vmatprep.subr.mxu0 0.0
        %4346 = vmatpush1.msra.mxu0 0.0
        %4347 = vmatprep.subr.mxu0 0.0
        %4348 = vmatpush1.msra.mxu0 0.0
        %4349 = vmatprep.subr.mxu0 0.0
        %4350 = vmatpush1.msra.mxu0 0.0
        %4351 = vmatprep.subr.mxu0 0.0
        %4352 = vmatpush1.msra.mxu0 0.0
        %4353 = vmatprep.subr.mxu0 0.0
        %4354 = vmatpush1.msra.mxu0 0.0
        %4355 = vmatprep.subr.mxu0 0.0
        %4356 = vmatpush1.msra.mxu0 0.0
        %4357 = vmatprep.subr.mxu0 0.0
        %4358 = vmatpush1.msra.mxu0 0.0
        %4359 = vmatprep.subr.mxu0 0.0
        %4360 = vmatpush1.msra.mxu0 0.0
        %4361 = vmatprep.subr.mxu0 0.0
        %4362 = vmatpush1.msra.mxu0 0.0
        %4363 = vmatprep.subr.mxu0 0.0
        %4364 = vmatpush1.msra.mxu0 0.0
        %4365 = vmatprep.subr.mxu0 0.0
        %4366 = vmatpush1.msra.mxu0 0.0
        %4367 = vmatprep.subr.mxu0 0.0
        %4368 = vmatpush1.msra.mxu0 0.0
        %4369 = vmatprep.subr.mxu0 0.0
        %4370 = vmatpush1.msra.mxu0 0.0
        %4371 = vmatprep.subr.mxu0 0.0
        %4372 = vmatpush1.msra.mxu0 0.0
        %4373 = vmatprep.subr.mxu0 0.0
        %4374 = vmatpush1.msra.mxu0 0.0
        %4375 = vmatprep.mubr.f32.mxu0 0.0
        %4376 = vmatmul.mubr.f32.gmra.mrb[0].mxu0 %v4309
        %v4377 = vpop.f32.mrb[0].mxu0
        %v4378 = vadd.f32 %v4306, %v4377
        %v4379 = vpop.f32.mrb[0].mxu0
        %4380 = vdwg.mxu0
        %4382 = vrot.lane.b32.xlu0 %v4289, 16
        %v4383 = vpop.permute.xlu0 %4382
        %4386 = vrot.lane.b32.xlu0 %v4378, 32
        %v4387 = vpop.permute.xlu0 %4386
        %v4389 = vsel %vm718, %v4200, %v4383
        %v4390 = vsel %vm723, %v4389, %v4387
        %v4392 = vsel %vm738, %v4390, 0
        %4394 = vmatprep.subr.mxu0 %v729
        %4395 = vmatpush1.msra.mxu0 %v728
        %4396 = vmatprep.subr.mxu0 %v731
        %4397 = vmatpush1.msra.mxu0 %v730
        %4398 = vmatprep.subr.mxu0 %v733
        %4399 = vmatpush1.msra.mxu0 %v732
        %4400 = vmatprep.subr.mxu0 %v735
        %4401 = vmatpush1.msra.mxu0 %v734
        %4402 = vmatprep.subr.mxu0 %v756
        %4403 = vmatpush1.msra.mxu0 %v753
        %4404 = vmatprep.subr.mxu0 0.0
        %4405 = vmatpush1.msra.mxu0 0.0
        %4406 = vmatprep.subr.mxu0 0.0
        %4407 = vmatpush1.msra.mxu0 0.0
        %4408 = vmatprep.subr.mxu0 0.0
        %4409 = vmatpush1.msra.mxu0 0.0
        %4410 = vmatprep.subr.mxu0 0.0
        %4411 = vmatpush1.msra.mxu0 0.0
        %4412 = vmatprep.subr.mxu0 0.0
        %4413 = vmatpush1.msra.mxu0 0.0
        %4414 = vmatprep.subr.mxu0 0.0
        %4415 = vmatpush1.msra.mxu0 0.0
        %4416 = vmatprep.subr.mxu0 0.0
        %4417 = vmatpush1.msra.mxu0 0.0
        %4418 = vmatprep.subr.mxu0 0.0
        %4419 = vmatpush1.msra.mxu0 0.0
        %4420 = vmatprep.subr.mxu0 0.0
        %4421 = vmatpush1.msra.mxu0 0.0
        %4422 = vmatprep.subr.mxu0 0.0
        %4423 = vmatpush1.msra.mxu0 0.0
        %4424 = vmatprep.subr.mxu0 0.0
        %4425 = vmatpush1.msra.mxu0 0.0
        %4426 = vmatprep.subr.mxu0 0.0
        %4427 = vmatpush1.msra.mxu0 0.0
        %4428 = vmatprep.subr.mxu0 0.0
        %4429 = vmatpush1.msra.mxu0 0.0
        %4430 = vmatprep.subr.mxu0 0.0
        %4431 = vmatpush1.msra.mxu0 0.0
        %4432 = vmatprep.subr.mxu0 0.0
        %4433 = vmatpush1.msra.mxu0 0.0
        %4434 = vmatprep.subr.mxu0 0.0
        %4435 = vmatpush1.msra.mxu0 0.0
        %4436 = vmatprep.subr.mxu0 0.0
        %4437 = vmatpush1.msra.mxu0 0.0
        %4438 = vmatprep.subr.mxu0 0.0
        %4439 = vmatpush1.msra.mxu0 0.0
        %4440 = vmatprep.subr.mxu0 0.0
        %4441 = vmatpush1.msra.mxu0 0.0
        %4442 = vmatprep.subr.mxu0 0.0
        %4443 = vmatpush1.msra.mxu0 0.0
        %4444 = vmatprep.subr.mxu0 0.0
        %4445 = vmatpush1.msra.mxu0 0.0
        %4446 = vmatprep.subr.mxu0 0.0
        %4447 = vmatpush1.msra.mxu0 0.0
        %4448 = vmatprep.subr.mxu0 0.0
        %4449 = vmatpush1.msra.mxu0 0.0
        %4450 = vmatprep.subr.mxu0 0.0
        %4451 = vmatpush1.msra.mxu0 0.0
        %4452 = vmatprep.subr.mxu0 0.0
        %4453 = vmatpush1.msra.mxu0 0.0
        %4454 = vmatprep.subr.mxu0 0.0
        %4455 = vmatpush1.msra.mxu0 0.0
        %4456 = vmatprep.subr.mxu0 0.0
        %4457 = vmatpush1.msra.mxu0 0.0
        %4458 = vmatprep.mubr.f32.mxu0 0.0
        %4459 = vmatmul.mubr.f32.gmra.mrb[0].mxu0 %v4392
        %v4460 = vpop.f32.mrb[0].mxu0
        %v4461 = vadd.f32 0.0, %v4460
        %v4462 = vpop.f32.mrb[0].mxu0
        %v4463 = vadd.f32 0.0, %v4462
        %4464 = vdwg.mxu0
        %v4466 = vsel %vm723, %v4122, 0
        %4468 = vmatprep.subr.mxu0 %v4029
        %4469 = vmatpush1.msra.mxu0 %v4028
        %4470 = vmatprep.subr.mxu0 %v4031
        %4471 = vmatpush1.msra.mxu0 %v4030
        %4472 = vmatprep.subr.mxu0 %v4033
        %4473 = vmatpush1.msra.mxu0 %v4032
        %4474 = vmatprep.subr.mxu0 %v4035
        %4475 = vmatpush1.msra.mxu0 %v4034
        %4476 = vmatprep.subr.mxu0 0.0
        %4477 = vmatpush1.msra.mxu0 0.0
        %4478 = vmatprep.subr.mxu0 0.0
        %4479 = vmatpush1.msra.mxu0 0.0
        %4480 = vmatprep.subr.mxu0 0.0
        %4481 = vmatpush1.msra.mxu0 0.0
        %4482 = vmatprep.subr.mxu0 0.0
        %4483 = vmatpush1.msra.mxu0 0.0
        %4484 = vmatprep.subr.mxu0 0.0
        %4485 = vmatpush1.msra.mxu0 0.0
        %4486 = vmatprep.subr.mxu0 0.0
        %4487 = vmatpush1.msra.mxu0 0.0
        %4488 = vmatprep.subr.mxu0 0.0
        %4489 = vmatpush1.msra.mxu0 0.0
        %4490 = vmatprep.subr.mxu0 0.0
        %4491 = vmatpush1.msra.mxu0 0.0
        %4492 = vmatprep.subr.mxu0 0.0
        %4493 = vmatpush1.msra.mxu0 0.0
        %4494 = vmatprep.subr.mxu0 0.0
        %4495 = vmatpush1.msra.mxu0 0.0
        %4496 = vmatprep.subr.mxu0 0.0
        %4497 = vmatpush1.msra.mxu0 0.0
        %4498 = vmatprep.subr.mxu0 0.0
        %4499 = vmatpush1.msra.mxu0 0.0
        %4500 = vmatprep.subr.mxu0 0.0
        %4501 = vmatpush1.msra.mxu0 0.0
        %4502 = vmatprep.subr.mxu0 0.0
        %4503 = vmatpush1.msra.mxu0 0.0
        %4504 = vmatprep.subr.mxu0 0.0
        %4505 = vmatpush1.msra.mxu0 0.0
        %4506 = vmatprep.subr.mxu0 0.0
        %4507 = vmatpush1.msra.mxu0 0.0
        %4508 = vmatprep.subr.mxu0 0.0
        %4509 = vmatpush1.msra.mxu0 0.0
        %4510 = vmatprep.subr.mxu0 0.0
        %4511 = vmatpush1.msra.mxu0 0.0
        %4512 = vmatprep.subr.mxu0 0.0
        %4513 = vmatpush1.msra.mxu0 0.0
        %4514 = vmatprep.subr.mxu0 0.0
        %4515 = vmatpush1.msra.mxu0 0.0
        %4516 = vmatprep.subr.mxu0 0.0
        %4517 = vmatpush1.msra.mxu0 0.0
        %4518 = vmatprep.subr.mxu0 0.0
        %4519 = vmatpush1.msra.mxu0 0.0
        %4520 = vmatprep.subr.mxu0 0.0
        %4521 = vmatpush1.msra.mxu0 0.0
        %4522 = vmatprep.subr.mxu0 0.0
        %4523 = vmatpush1.msra.mxu0 0.0
        %4524 = vmatprep.subr.mxu0 0.0
        %4525 = vmatpush1.msra.mxu0 0.0
        %4526 = vmatprep.subr.mxu0 0.0
        %4527 = vmatpush1.msra.mxu0 0.0
        %4528 = vmatprep.subr.mxu0 0.0
        %4529 = vmatpush1.msra.mxu0 0.0
        %4530 = vmatprep.subr.mxu0 0.0
        %4531 = vmatpush1.msra.mxu0 0.0
        %4532 = vmatprep.mubr.f32.mxu0 0.0
        %4533 = vmatmul.mubr.f32.gmra.mrb[0].mxu0 %v4466
        %v4534 = vpop.f32.mrb[0].mxu0
        %v4535 = vadd.f32 %v4461, %v4534
        %v4536 = vpop.f32.mrb[0].mxu0
        %v4537 = vadd.f32 %v4463, %v4536
        %4538 = vdwg.mxu0
        %v4541 = vcombine.low %v4535, %v4537
        %v4543 = vunpack.c.l.s4 1966171168
        %v4544 = vunpack.c.0.s8 %v4543
        %v4545 = vlaneseq
        %v4546 = vshrl.u32 %v4545, 7
        %v4547 = vsub.s32 %v4544, %v4546
        %v4548 = vrot.slane %v4541, %v4547
        %v4550 = vunpack.c.l.s4 1966171168
        %v4551 = vunpack.c.0.s8 %v4550
        %v4552 = vlaneseq
        %v4553 = vshrl.u32 %v4552, 7
        %v4554 = vsub.s32 %v4551, %v4553
        %v4555 = vrot.slane %v4548, %v4554
        %v4557 = vlaneseq
        %vm4558 = vcmp.ge.s32.totalorder %v4557, 0
        %vm4559 = vcmp.lt.s32.totalorder %v4557, 256
        %vm4560 = vmand %vm4558, %vm4559
        %4561 = vst.msk [vmem:[%s252] sm:$0x3] %vm4560, %v4555
        %p4562 = scmp.lt.s32.totalorder %s18, 1
        %s4563 = scalar_select %p4562, %s18, 1
        %s4564 = smul.addr %s4563, 2
        %s4565 = scalar_lea.vmem %s5, %s4564
        // Predicated region
        $region49: #{sparse_matrix_entity_predictor_forward.1} parent=39 // pred_check
          %p4566 = pneg %p146
        $region50: #{sparse_matrix_entity_predictor_forward.1} parent=39 // pred_check_branch
          %4568 = sbr.rel (%p4566) target = $region52
        $region51: #{sparse_matrix_entity_predictor_forward.1} parent=39 // pred_region
          _
        $region52: #{sparse_matrix_entity_predictor_forward.1} parent=39 // pred_fallthru
          _
      $region40: #{sparse_matrix_entity_predictor_forward.1} parent=5 // pred_fallthru
        _
      %p4569 = scmp.le.s32.totalorder 2, %s13
      // Predicated region
      $region53: #{sparse_matrix_entity_predictor_forward.1} parent=5 // pred_check
        %p4570 = pneg %p4569
      $region54: #{sparse_matrix_entity_predictor_forward.1} parent=5 // pred_check_branch
        %4572 = sbr.rel (%p4570) target = $region56
      $region55: #{sparse_matrix_entity_predictor_forward.1} parent=5 // pred_region
        %s4573 = ssub.s32 %s13, 2
        // Predicated region
        $region57: #{sparse_matrix_entity_predictor_forward.1} parent=55 // pred_check
          %p4574 = pneg %p152
        $region58: #{sparse_matrix_entity_predictor_forward.1} parent=55 // pred_check_branch
          %4576 = sbr.rel (%p4574) target = $region60
        $region59: #{sparse_matrix_entity_predictor_forward.1} parent=55 // pred_region
          %p4577 = scmp.lt.s32.totalorder %s19, 1
          %s4578 = scalar_select %p4577, %s19, 1
          %s4579 = smul.addr %s4578, 2
          %s4580 = scalar_lea.vmem %s5, %s4579
        $region60: #{sparse_matrix_entity_predictor_forward.1} parent=55 // pred_fallthru
          _
      $region56: #{sparse_matrix_entity_predictor_forward.1} parent=5 // pred_fallthru
        _
    $region6: #{sparse_matrix_entity_predictor_forward.1} parent=1 // loop_footer
      %s17 = sadd.s32 1, %s13
    $region7: #{sparse_matrix_entity_predictor_forward.1} parent=1 // loop_footer_branch
      %12 = sbr.rel target = $region3
    $region8: #{sparse_matrix_entity_predictor_forward.1} parent=1 // loop_exit
      _
    %4581 = vsyncpa [#allocation3], 1
    %s4582 = scalar_lea.sflag [#allocation3], 1
    %4583 = vsyncpa %s4582, 1
    %4584 = vsyncpa [#allocation5], 1

</llo_original>
